<compile_context>
chip_gen: v7x
topology: tpu7x:2x2x1
jax: 0.10.0
libtpu: 0.0.40
codegen_flags: <defaults>
</compile_context>

<pallas_src>
import functools

import jax
import jax.numpy as jnp
from jax.experimental import pallas as pl
from jax.experimental.pallas import tpu as pltpu

_NEG_SLOPE = 0.2
_BN_EPS = 1e-5


# ----------------------------------------------------------------------------
# Small helpers
# ----------------------------------------------------------------------------
def _vmem_limit_bytes(*tile_nbytes):
    """Generation-aware scoped-VMEM budget: double-buffered tile working set
    plus slack, capped at ~75% of this chip's physical VMEM."""
    need = 2 * sum(int(n) for n in tile_nbytes) + (4 << 20)
    cap = 48 << 20                              # safe default (v7x-sized)
    try:
        info = pltpu.get_tpu_info()
        vmem = getattr(info, "vmem_capacity_bytes", None)
        if vmem:
            cap = int(0.75 * int(vmem))
    except Exception:
        pass
    return int(min(max(need, 8 << 20), cap))


def _pick_tile(m, target=512, min_tiles=1):
    """Largest multiple-of-8 divisor of m that is <= target (and leaves at
    least `min_tiles` tiles when possible).  Falls back to the full extent
    only for tiny / non-multiple-of-8 m."""
    cap = min(target, m // min_tiles) if min_tiles > 1 else min(target, m)
    best = 0
    for t in range(8, m + 1, 8):
        if m % t == 0 and t <= cap:
            best = t
    return best if best > 0 else m


def im2col_nhwc(x, kh, kw, stride, pad):
    """NHWC -> (B, Ho*Wo, kh*kw*C) bf16 patches, K ordered as (kh, kw, C).

    # TODO(synk): move this patch gather into the kernels (in-kernel strided
    # window loads) to cut the ~(kh*kw/stride^2)x HBM duplication.
    """
    x = x.astype(jnp.bfloat16)
    B, H, W, C = x.shape
    Ho = (H + 2 * pad - kh) // stride + 1
    Wo = (W + 2 * pad - kw) // stride + 1
    xp = jnp.pad(x, ((0, 0), (pad, pad), (pad, pad), (0, 0)))
    cols = []
    for i in range(kh):
        for j in range(kw):
            cols.append(xp[:, i:i + stride * Ho:stride, j:j + stride * Wo:stride, :])
    col = jnp.concatenate(cols, axis=-1)            # (B, Ho, Wo, kh*kw*C)
    return col.reshape(B, Ho * Wo, kh * kw * C), Ho, Wo


# ----------------------------------------------------------------------------
# Pallas kernels
# ----------------------------------------------------------------------------
def conv1_embed_kernel(labels_ref, a_ref, w_ref, bias_ref, emb_ref, o_ref,
                       *, d, neg_slope):
    """Layer 1: (tm,K)bf16 @ (K,d)bf16 -> f32, +bias, LeakyReLU, bf16 store to
    channels [:d]; label embedding (selected via scalar-prefetch index_map)
    broadcast-stored to channels [d:] -> one lane-dense (tm, 2d) bf16 block."""
    del labels_ref  # consumed by the index_maps (scalar prefetch)
    acc = jnp.dot(a_ref[0], w_ref[...], preferred_element_type=jnp.float32)
    acc = acc + bias_ref[...]
    act = jnp.where(acc >= 0.0, acc, neg_slope * acc)
    o_ref[0, :, :d] = act.astype(o_ref.dtype)
    emb = jnp.broadcast_to(emb_ref[0], act.shape)        # (1, d) -> (tm, d)
    o_ref[0, :, d:] = emb.astype(o_ref.dtype)


def conv_stats_kernel(a_ref, w_ref, conv_ref, sum_ref, sq_ref):
    """BN layers, pass 1: tiled GEMM (no bias: it is cancelled by the batch
    mean) + per-tile channel sum / sum-of-squares for cross-tile batch stats."""
    acc = jnp.dot(a_ref[...], w_ref[...], preferred_element_type=jnp.float32)
    conv_ref[...] = acc
    sum_ref[0] = jnp.sum(acc, axis=0, keepdims=True)
    sq_ref[0] = jnp.sum(acc * acc, axis=0, keepdims=True)


def bn_act_kernel(conv_ref, sum_ref, sq_ref, gamma_ref, beta_ref, o_ref,
                  *, m_total, eps, neg_slope):
    """BN layers, pass 2: finalize batch stats from the per-tile partials,
    normalize + scale/shift + LeakyReLU, bf16 out."""
    inv_m = 1.0 / float(m_total)
    mean = jnp.sum(sum_ref[...], axis=0) * inv_m          # (1, N)
    ex2 = jnp.sum(sq_ref[...], axis=0) * inv_m            # (1, N)
    var = ex2 - mean * mean                               # biased variance
    scale = gamma_ref[...] * jax.lax.rsqrt(var + eps)
    shift = beta_ref[...] - mean * scale
    y = conv_ref[...] * scale + shift
    o_ref[...] = jnp.where(y >= 0.0, y, neg_slope * y).astype(o_ref.dtype)


def bn_act_final_kernel(conv_ref, sum_ref, sq_ref, gamma_ref, beta_ref,
                        w4_ref, b4_ref, o_ref, *, m_total, eps, neg_slope):
    """Layer 3, pass 2: BN + LeakyReLU on one batch element's (Ho*Wo, N) tile,
    with the final 4x4 valid conv (Cout=1) fused as a weighted reduction."""
    inv_m = 1.0 / float(m_total)
    mean = jnp.sum(sum_ref[...], axis=0) * inv_m
    ex2 = jnp.sum(sq_ref[...], axis=0) * inv_m
    var = ex2 - mean * mean
    scale = gamma_ref[...] * jax.lax.rsqrt(var + eps)
    shift = beta_ref[...] - mean * scale
    y = conv_ref[...] * scale + shift                      # (HoWo, N) f32
    act = jnp.where(y >= 0.0, y, neg_slope * y)
    prod = act * w4_ref[...]                               # (HoWo, N)
    tot = jnp.sum(jnp.sum(prod, axis=1, keepdims=True), axis=0, keepdims=True)
    o_ref[0] = tot + b4_ref[...]                           # (1, 1)


# ----------------------------------------------------------------------------
# Layer wrappers
# ----------------------------------------------------------------------------
def conv1_embed_layer(x_nhwc, labels, w2d, bias2d, embed_tbl,
                      *, kh, kw, stride, pad, tm_target=512):
    """Conv + bias + LeakyReLU with the embedding channel-concat fused in."""
    B = x_nhwc.shape[0]
    a, Ho, Wo = im2col_nhwc(x_nhwc, kh, kw, stride, pad)     # (B, Mb, K) bf16
    _, Mb, K = a.shape
    d = w2d.shape[1]
    tm = _pick_tile(Mb, target=tm_target, min_tiles=1 if B > 1 else 2)
    grid = (B, Mb // tm)

    kern = functools.partial(conv1_embed_kernel, d=d, neg_slope=_NEG_SLOPE)
    vmem = _vmem_limit_bytes(tm * K * 2, K * d * 2, 2 * d * 4, tm * 2 * d * 2)
    out = pl.pallas_call(
        kern,
        out_shape=jax.ShapeDtypeStruct((B, Mb, 2 * d), jnp.bfloat16),
        grid_spec=pltpu.PrefetchScalarGridSpec(
            num_scalar_prefetch=1,
            grid=grid,
            in_specs=[
                pl.BlockSpec((1, tm, K), lambda b, t, lab: (b, t, 0)),   # patches
                pl.BlockSpec((K, d), lambda b, t, lab: (0, 0)),          # weights
                pl.BlockSpec((1, d), lambda b, t, lab: (0, 0)),          # bias
                pl.BlockSpec((1, 1, d), lambda b, t, lab: (lab[b], 0, 0)),  # embed row
            ],
            out_specs=pl.BlockSpec((1, tm, 2 * d), lambda b, t, lab: (b, t, 0)),
        ),
        compiler_params=pltpu.CompilerParams(
            dimension_semantics=("parallel", "parallel"),
            vmem_limit_bytes=vmem),
    )(labels, a, w2d, bias2d, embed_tbl)
    return out.reshape(B, Ho, Wo, 2 * d)                    # NHWC bf16


def conv_stats(a2d, w2d, *, tm):
    """BN layers, pass 1: M-tiled GEMM + per-tile channel sum / sumsq."""
    M, K = a2d.shape
    N = w2d.shape[1]
    nt = M // tm
    vmem = _vmem_limit_bytes(tm * K * 2, K * N * 2, tm * N * 4, 2 * N * 4)
    conv, sums, sqs = pl.pallas_call(
        conv_stats_kernel,
        out_shape=(jax.ShapeDtypeStruct((M, N), jnp.float32),
                   jax.ShapeDtypeStruct((nt, 1, N), jnp.float32),
                   jax.ShapeDtypeStruct((nt, 1, N), jnp.float32)),
        grid=(nt,),
        in_specs=[pl.BlockSpec((tm, K), lambda i: (i, 0)),
                  pl.BlockSpec((K, N), lambda i: (0, 0))],
        out_specs=(pl.BlockSpec((tm, N), lambda i: (i, 0)),
                   pl.BlockSpec((1, 1, N), lambda i: (i, 0, 0)),
                   pl.BlockSpec((1, 1, N), lambda i: (i, 0, 0))),
        compiler_params=pltpu.CompilerParams(
            dimension_semantics=("parallel",), vmem_limit_bytes=vmem),
    )(a2d, w2d)
    return conv, sums, sqs


def bn_act(conv, sums, sqs, gamma2d, beta2d, *, tm):
    """BN layers, pass 2: normalize + LeakyReLU, bf16 out, M-tiled."""
    M, N = conv.shape
    nt = M // tm
    ntp = sums.shape[0]
    kern = functools.partial(bn_act_kernel, m_total=M, eps=_BN_EPS,
                             neg_slope=_NEG_SLOPE)
    vmem = _vmem_limit_bytes(tm * N * 4, 2 * ntp * N * 4, 2 * N * 4, tm * N * 2)
    return pl.pallas_call(
        kern,
        out_shape=jax.ShapeDtypeStruct((M, N), jnp.bfloat16),
        grid=(nt,),
        in_specs=[pl.BlockSpec((tm, N), lambda i: (i, 0)),
                  pl.BlockSpec((ntp, 1, N), lambda i: (0, 0, 0)),
                  pl.BlockSpec((ntp, 1, N), lambda i: (0, 0, 0)),
                  pl.BlockSpec((1, N), lambda i: (0, 0)),
                  pl.BlockSpec((1, N), lambda i: (0, 0))],
        out_specs=pl.BlockSpec((tm, N), lambda i: (i, 0)),
        compiler_params=pltpu.CompilerParams(
            dimension_semantics=("parallel",), vmem_limit_bytes=vmem),
    )(conv, sums, sqs, gamma2d, beta2d)


def bn_act_final(conv, sums, sqs, gamma2d, beta2d, w4pat, b4, *, batch):
    """Layer 3, pass 2: per-batch BN + LeakyReLU + fused 4x4 valid conv."""
    M, N = conv.shape
    mb = M // batch                                  # Ho*Wo rows per batch elem
    ntp = sums.shape[0]
    kern = functools.partial(bn_act_final_kernel, m_total=M, eps=_BN_EPS,
                             neg_slope=_NEG_SLOPE)
    vmem = _vmem_limit_bytes(mb * N * 4, 2 * ntp * N * 4, 2 * N * 4,
                             mb * N * 4, 16)
    out = pl.pallas_call(
        kern,
        out_shape=jax.ShapeDtypeStruct((batch, 1, 1), jnp.float32),
        grid=(batch,),
        in_specs=[pl.BlockSpec((mb, N), lambda b: (b, 0)),
                  pl.BlockSpec((ntp, 1, N), lambda b: (0, 0, 0)),
                  pl.BlockSpec((ntp, 1, N), lambda b: (0, 0, 0)),
                  pl.BlockSpec((1, N), lambda b: (0, 0)),
                  pl.BlockSpec((1, N), lambda b: (0, 0)),
                  pl.BlockSpec((mb, N), lambda b: (0, 0)),
                  pl.BlockSpec((1, 1), lambda b: (0, 0))],
        out_specs=pl.BlockSpec((1, 1, 1), lambda b: (b, 0, 0)),
        compiler_params=pltpu.CompilerParams(
            dimension_semantics=("parallel",), vmem_limit_bytes=vmem),
    )(conv, sums, sqs, gamma2d, beta2d, w4pat, b4)
    return out.reshape(batch, 1)


# ----------------------------------------------------------------------------
# Parameters (raw, PyTorch-layout) + one-time preprocessing
# ----------------------------------------------------------------------------
def make_params(key, num_classes=10, d=64, in_channels=3):
    ks = jax.random.split(key, 12)
    def nrm(k, shape, scale=0.05):
        return scale * jax.random.normal(k, shape, jnp.float32)
    return {
        "w1": nrm(ks[0], (d, in_channels, 4, 4)),
        "b1": nrm(ks[1], (d,)),
        "embed": nrm(ks[2], (num_classes, d)),
        "w2": nrm(ks[3], (d * 2, d * 2, 4, 4)),
        "b2": nrm(ks[4], (d * 2,)),
        "g2": 1.0 + nrm(ks[5], (d * 2,), 0.1),
        "be2": nrm(ks[6], (d * 2,), 0.1),
        "w3": nrm(ks[7], (d * 4, d * 2, 4, 4)),
        "b3": nrm(ks[8], (d * 4,)),
        "g3": 1.0 + nrm(ks[9], (d * 4,), 0.1),
        "be3": nrm(ks[10], (d * 4,), 0.1),
        "w4": nrm(ks[11], (1, d * 4, 4, 4)),
        "b4": jnp.zeros((1,), jnp.float32),
    }


def preprocess_params(params):
    """One-time reshape/cast of weights to their kernel layouts.  Conv biases
    of the BN layers (b2, b3) are intentionally dropped: they are cancelled
    exactly by the batch-mean subtraction."""
    def conv_w(w):    # (Cout, Cin, kh, kw) -> (kh*kw*Cin, Cout) bf16
        cout, cin, kh, kw = w.shape
        return w.transpose(2, 3, 1, 0).reshape(kh * kw * cin, cout).astype(jnp.bfloat16)
    def row(v):
        return v.reshape(1, -1).astype(jnp.float32)
    w4 = params["w4"]                                  # (1, Cin, 4, 4)
    w4pat = w4[0].transpose(1, 2, 0).reshape(
        w4.shape[2] * w4.shape[3], w4.shape[1]).astype(jnp.float32)  # (kh*kw, Cin)
    num_classes, d = params["embed"].shape
    return {
        "w1": conv_w(params["w1"]), "b1": row(params["b1"]),
        "embed": params["embed"].reshape(num_classes, 1, d).astype(jnp.float32),
        "w2": conv_w(params["w2"]),
        "g2": row(params["g2"]), "be2": row(params["be2"]),
        "w3": conv_w(params["w3"]),
        "g3": row(params["g3"]), "be3": row(params["be3"]),
        "w4pat": w4pat,
        "b4": params["b4"].reshape(1, 1).astype(jnp.float32),
    }


# ----------------------------------------------------------------------------
# Model: ConditionalDiscriminator forward (public interface: NCHW input)
# ----------------------------------------------------------------------------
def conditional_discriminator_forward(prep, x, labels):
    B = x.shape[0]
    x_nhwc = jnp.transpose(x, (0, 2, 3, 1))            # NHWC inside

    # Layer 1: conv + bias + LeakyReLU with the label-embedding channel-concat
    # fused into the epilogue -> (B, H/2, W/2, 2d) bf16, lane-dense store.
    h = conv1_embed_layer(x_nhwc, labels, prep["w1"], prep["b1"], prep["embed"],
                          kh=4, kw=4, stride=2, pad=1)

    # Layer 2: conv (pass 1: tiled GEMM + channel sum/sumsq) then
    # BN(batch stats) + LeakyReLU (pass 2), bf16 out.
    a2, Ho2, Wo2 = im2col_nhwc(h, 4, 4, 2, 1)
    a2 = a2.reshape(B * Ho2 * Wo2, -1)
    tm2 = _pick_tile(a2.shape[0], target=512, min_tiles=2)
    conv2, s2, q2 = conv_stats(a2, prep["w2"], tm=tm2)
    h2 = bn_act(conv2, s2, q2, prep["g2"], prep["be2"], tm=tm2)
    h2 = h2.reshape(B, Ho2, Wo2, -1)

    # Layer 3: conv pass 1 as above; pass 2 fuses BN + LeakyReLU + the final
    # 4x4 valid conv (per-batch weighted reduction) -> (B, 1) logits.
    a3, Ho3, Wo3 = im2col_nhwc(h2, 4, 4, 2, 1)
    a3 = a3.reshape(B * Ho3 * Wo3, -1)
    tm3 = _pick_tile(a3.shape[0], target=512, min_tiles=2)
    conv3, s3, q3 = conv_stats(a3, prep["w3"], tm=tm3)
    out = bn_act_final(conv3, s3, q3, prep["g3"], prep["be3"],
                       prep["w4pat"], prep["b4"], batch=B)
    return out                                          # (B, 1)


# ----------------------------------------------------------------------------
# Reference (mirrors the kernel's sanctioned bf16-operand / f32-accumulate and
# bf16 inter-layer activation rounding so the comparison isolates kernel logic)
# ----------------------------------------------------------------------------
def _ref_conv(x, w, b, stride, pad, cast_bf16=True):
    if cast_bf16:
        x = x.astype(jnp.bfloat16)
        w = w.astype(jnp.bfloat16)
    out = jax.lax.conv_general_dilated(
        x, w, (stride, stride), [(pad, pad), (pad, pad)],
        dimension_numbers=("NCHW", "OIHW", "NCHW"),
        preferred_element_type=jnp.float32)
    return out + b[None, :, None, None]


def _ref_bn(x, gamma, beta, eps=_BN_EPS):
    mean = jnp.mean(x, axis=(0, 2, 3), keepdims=True)
    var = jnp.mean((x - mean) ** 2, axis=(0, 2, 3), keepdims=True)  # biased
    xn = (x - mean) * jax.lax.rsqrt(var + eps)
    return xn * gamma[None, :, None, None] + beta[None, :, None, None]


def _leaky(x):
    return jnp.where(x >= 0, x, _NEG_SLOPE * x)


def reference_forward(params, x, labels):
    B = x.shape[0]
    d = params["w1"].shape[0]
    h1 = _leaky(_ref_conv(x, params["w1"], params["b1"], 2, 1))
    h1 = h1.astype(jnp.bfloat16).astype(jnp.float32)           # bf16 activation
    emb = params["embed"][labels].astype(jnp.bfloat16).astype(jnp.float32)
    emb_map = jnp.broadcast_to(emb[:, :, None, None],
                               (B, d, h1.shape[2], h1.shape[3]))
    h = jnp.concatenate([h1, emb_map], axis=1)
    h = _leaky(_ref_bn(_ref_conv(h, params["w2"], params["b2"], 2, 1),
                       params["g2"], params["be2"]))
    h = h.astype(jnp.bfloat16).astype(jnp.float32)              # bf16 activation
    h = _leaky(_ref_bn(_ref_conv(h, params["w3"], params["b3"], 2, 1),
                       params["g3"], params["be3"]))
    h = _ref_conv(h, params["w4"], params["b4"], 1, 0, cast_bf16=False)
    return h.reshape(B, 1)


if __name__ == "__main__":
    key = jax.random.PRNGKey(0)
    k_par, k_x, k_lab = jax.random.split(key, 3)

    B, C, H, W = 2, 3, 32, 32          # 32x32 input -> (B, 1) output
    num_classes, d = 10, 64            # d=64: module default; >=128-lane outputs

    params = make_params(k_par, num_classes=num_classes, d=d, in_channels=C)
    prep = preprocess_params(params)   # one-time weight layout/cast
    x = jax.random.normal(k_x, (B, C, H, W), jnp.float32)
    labels = jax.random.randint(k_lab, (B,), 0, num_classes, dtype=jnp.int32)

    forward = jax.jit(conditional_discriminator_forward)
    out = jax.block_until_ready(forward(prep, x, labels))
    assert out.shape == (B, 1), out.shape

    ref = jax.block_until_ready(reference_forward(params, x, labels))
    assert jnp.allclose(out, ref, atol=2e-2, rtol=2e-2), (out, ref)

    print("KERNEL_OK")
</pallas_src>

<mosaic_0001>
module attributes {stable_mosaic.version = 11 : i64} {
  func.func @conv1_embed_kernel(%arg0: i32, %arg1: i32, %arg2: memref<2xi32, #tpu.memory_space<smem>>, %arg3: memref<1x256x48xbf16, #tpu.memory_space<vmem>>, %arg4: memref<48x64xbf16, #tpu.memory_space<vmem>>, %arg5: memref<1x64xf32, #tpu.memory_space<vmem>>, %arg6: memref<1x1x64xf32, #tpu.memory_space<vmem>>, %arg7: memref<1x256x128xbf16, #tpu.memory_space<vmem>>) attributes {dimension_semantics = [#tpu.dimension_semantics<parallel>, #tpu.dimension_semantics<parallel>], iteration_bounds = array<i64: 2, 1>, scalar_prefetch = 1 : i64, scratch_operands = 0 : i64, tpu.core_type = #tpu.core_type<tc>, window_params = [{transform_indices = @transform_0, window_bounds = array<i64: 1, 256, 48>}, {pipeline_mode = #tpu.pipeline_mode<synchronous>, transform_indices = @transform_1, window_bounds = array<i64: 48, 64>}, {pipeline_mode = #tpu.pipeline_mode<synchronous>, transform_indices = @transform_2, window_bounds = array<i64: 1, 64>}, {transform_indices = @transform_3, window_bounds = array<i64: 1, 1, 64>}, {transform_indices = @transform_4, window_bounds = array<i64: 1, 256, 128>}]} {
    %c0 = arith.constant 0 : index
    %c0_0 = arith.constant 0 : index
    %c0_1 = arith.constant 0 : index
    %0 = vector.load %arg3[%c0, %c0_0, %c0_1] : memref<1x256x48xbf16, #tpu.memory_space<vmem>>, vector<1x256x48xbf16>
    %1 = vector.shape_cast %0 : vector<1x256x48xbf16> to vector<256x48xbf16>
    %c0_2 = arith.constant 0 : index
    %c0_3 = arith.constant 0 : index
    %2 = vector.load %arg4[%c0_2, %c0_3] : memref<48x64xbf16, #tpu.memory_space<vmem>>, vector<48x64xbf16>
    %cst = arith.constant dense<0.000000e+00> : vector<256x64xf32>
    %3 = tpu.matmul %1, %2, %cst {dimension_numbers = #tpu.dot_dimension_numbers<[1], [0], [0], [1], [0, 0, 1, 1], [], []>} : vector<256x48xbf16>, vector<48x64xbf16>, vector<256x64xf32> -> vector<256x64xf32>
    %c0_4 = arith.constant 0 : index
    %c0_5 = arith.constant 0 : index
    %4 = vector.load %arg5[%c0_4, %c0_5] : memref<1x64xf32, #tpu.memory_space<vmem>>, vector<1x64xf32>
    %5 = vector.broadcast %4 : vector<1x64xf32> to vector<256x64xf32>
    %6 = arith.addf %3, %5 : vector<256x64xf32>
    %cst_6 = arith.constant 0.000000e+00 : f32
    %7 = vector.broadcast %cst_6 : f32 to vector<256x64xf32>
    %8 = arith.cmpf oge, %6, %7 : vector<256x64xf32>
    %cst_7 = arith.constant 2.000000e-01 : f32
    %9 = vector.broadcast %cst_7 : f32 to vector<256x64xf32>
    %10 = arith.mulf %9, %6 : vector<256x64xf32>
    %11 = arith.select %8, %6, %10 : vector<256x64xi1>, vector<256x64xf32>
    %12 = arith.truncf %11 : vector<256x64xf32> to vector<256x64xbf16>
    %c0_8 = arith.constant 0 : index
    %c0_9 = arith.constant 0 : index
    %c0_10 = arith.constant 0 : index
    %13 = vector.load %arg7[%c0_8, %c0_9, %c0_10] : memref<1x256x128xbf16, #tpu.memory_space<vmem>>, vector<1x256x64xbf16>
    %14 = vector.shape_cast %13 : vector<1x256x64xbf16> to vector<256x64xbf16>
    %15 = vector.shape_cast %12 : vector<256x64xbf16> to vector<1x256x64xbf16>
    tpu.vector_store %arg7[%c0_8, %c0_9, %c0_10], %15 {strides = array<i32>} : memref<1x256x128xbf16, #tpu.memory_space<vmem>>, vector<1x256x64xbf16>,
    %c0_11 = arith.constant 0 : index
    %c0_12 = arith.constant 0 : index
    %c0_13 = arith.constant 0 : index
    %16 = vector.load %arg6[%c0_11, %c0_12, %c0_13] : memref<1x1x64xf32, #tpu.memory_space<vmem>>, vector<1x1x64xf32>
    %17 = vector.shape_cast %16 : vector<1x1x64xf32> to vector<1x64xf32>
    %18 = vector.shape_cast %17 : vector<1x64xf32> to vector<1x64xf32>
    %19 = vector.broadcast %18 : vector<1x64xf32> to vector<256x64xf32>
    %20 = arith.truncf %19 : vector<256x64xf32> to vector<256x64xbf16>
    %c0_14 = arith.constant 0 : index
    %c0_15 = arith.constant 0 : index
    %c64 = arith.constant 64 : index
    %21 = vector.load %arg7[%c0_14, %c0_15, %c64] : memref<1x256x128xbf16, #tpu.memory_space<vmem>>, vector<1x256x64xbf16>
    %22 = vector.shape_cast %21 : vector<1x256x64xbf16> to vector<256x64xbf16>
    %23 = vector.shape_cast %20 : vector<256x64xbf16> to vector<1x256x64xbf16>
    tpu.vector_store %arg7[%c0_14, %c0_15, %c64], %23 {strides = array<i32>} : memref<1x256x128xbf16, #tpu.memory_space<vmem>>, vector<1x256x64xbf16>,
    return
  }
  func.func @transform_0(%arg0: i32, %arg1: i32, %arg2: memref<2xi32, #tpu.memory_space<smem>>) -> (i32, i32, i32) {
    %c0_i32 = arith.constant 0 : i32
    %c0_i32_0 = arith.constant 0 : i32
    return %arg0, %arg1, %c0_i32 : i32, i32, i32
  }
  func.func @transform_1(%arg0: i32, %arg1: i32, %arg2: memref<2xi32, #tpu.memory_space<smem>>) -> (i32, i32) {
    %c0_i32 = arith.constant 0 : i32
    %c0_i32_0 = arith.constant 0 : i32
    %c0_i32_1 = arith.constant 0 : i32
    return %c0_i32, %c0_i32_0 : i32, i32
  }
  func.func @transform_2(%arg0: i32, %arg1: i32, %arg2: memref<2xi32, #tpu.memory_space<smem>>) -> (i32, i32) {
    %c0_i32 = arith.constant 0 : i32
    %c0_i32_0 = arith.constant 0 : i32
    %c0_i32_1 = arith.constant 0 : i32
    return %c0_i32, %c0_i32_0 : i32, i32
  }
  func.func @transform_3(%arg0: i32, %arg1: i32, %arg2: memref<2xi32, #tpu.memory_space<smem>>) -> (i32, i32, i32) {
    %0 = arith.index_cast %arg0 : i32 to index
    %1 = memref.load %arg2[%0] : memref<2xi32, #tpu.memory_space<smem>>
    %c0_i32 = arith.constant 0 : i32
    %c0_i32_0 = arith.constant 0 : i32
    %c0_i32_1 = arith.constant 0 : i32
    return %1, %c0_i32, %c0_i32_0 : i32, i32, i32
  }
  func.func @transform_4(%arg0: i32, %arg1: i32, %arg2: memref<2xi32, #tpu.memory_space<smem>>) -> (i32, i32, i32) {
    %c0_i32 = arith.constant 0 : i32
    %c0_i32_0 = arith.constant 0 : i32
    return %arg0, %arg1, %c0_i32 : i32, i32, i32
  }
}

module attributes {stable_mosaic.version = 11 : i64} {
  func.func @conv_stats_kernel(%arg0: i32, %arg1: memref<64x2048xbf16, #tpu.memory_space<vmem>>, %arg2: memref<2048x128xbf16, #tpu.memory_space<vmem>>, %arg3: memref<64x128xf32, #tpu.memory_space<vmem>>, %arg4: memref<1x1x128xf32, #tpu.memory_space<vmem>>, %arg5: memref<1x1x128xf32, #tpu.memory_space<vmem>>) attributes {dimension_semantics = [#tpu.dimension_semantics<parallel>], iteration_bounds = array<i64: 2>, scalar_prefetch = 0 : i64, scratch_operands = 0 : i64, tpu.core_type = #tpu.core_type<tc>, window_params = [{transform_indices = @transform_0, window_bounds = array<i64: 64, 2048>}, {pipeline_mode = #tpu.pipeline_mode<synchronous>, transform_indices = @transform_1, window_bounds = array<i64: 2048, 128>}, {transform_indices = @transform_2, window_bounds = array<i64: 64, 128>}, {transform_indices = @transform_3, window_bounds = array<i64: 1, 1, 128>}, {transform_indices = @transform_4, window_bounds = array<i64: 1, 1, 128>}]} {
    %c0 = arith.constant 0 : index
    %c0_0 = arith.constant 0 : index
    %0 = vector.load %arg1[%c0, %c0_0] : memref<64x2048xbf16, #tpu.memory_space<vmem>>, vector<64x2048xbf16>
    %c0_1 = arith.constant 0 : index
    %c0_2 = arith.constant 0 : index
    %1 = vector.load %arg2[%c0_1, %c0_2] : memref<2048x128xbf16, #tpu.memory_space<vmem>>, vector<2048x128xbf16>
    %cst = arith.constant dense<0.000000e+00> : vector<64x128xf32>
    %2 = tpu.matmul %0, %1, %cst {dimension_numbers = #tpu.dot_dimension_numbers<[1], [0], [0], [1], [0, 0, 1, 1], [], []>} : vector<64x2048xbf16>, vector<2048x128xbf16>, vector<64x128xf32> -> vector<64x128xf32>
    %c0_3 = arith.constant 0 : index
    %c0_4 = arith.constant 0 : index
    %3 = vector.load %arg3[%c0_3, %c0_4] : memref<64x128xf32, #tpu.memory_space<vmem>>, vector<64x128xf32>
    tpu.vector_store %arg3[%c0_3, %c0_4], %2 {strides = array<i32>} : memref<64x128xf32, #tpu.memory_space<vmem>>, vector<64x128xf32>,
    %cst_5 = arith.constant dense<0.000000e+00> : vector<128xf32>
    %4 = vector.multi_reduction <add>, %2, %cst_5 [0] : vector<64x128xf32> to vector<128xf32>
    %5 = vector.shape_cast %4 : vector<128xf32> to vector<1x128xf32>
    %c0_6 = arith.constant 0 : index
    %c0_7 = arith.constant 0 : index
    %c0_8 = arith.constant 0 : index
    %6 = vector.load %arg4[%c0_6, %c0_7, %c0_8] : memref<1x1x128xf32, #tpu.memory_space<vmem>>, vector<1x1x128xf32>
    %7 = vector.shape_cast %6 : vector<1x1x128xf32> to vector<1x128xf32>
    %8 = vector.shape_cast %5 : vector<1x128xf32> to vector<1x1x128xf32>
    tpu.vector_store %arg4[%c0_6, %c0_7, %c0_8], %8 {strides = array<i32>} : memref<1x1x128xf32, #tpu.memory_space<vmem>>, vector<1x1x128xf32>,
    %9 = arith.mulf %2, %2 : vector<64x128xf32>
    %cst_9 = arith.constant dense<0.000000e+00> : vector<128xf32>
    %10 = vector.multi_reduction <add>, %9, %cst_9 [0] : vector<64x128xf32> to vector<128xf32>
    %11 = vector.shape_cast %10 : vector<128xf32> to vector<1x128xf32>
    %c0_10 = arith.constant 0 : index
    %c0_11 = arith.constant 0 : index
    %c0_12 = arith.constant 0 : index
    %12 = vector.load %arg5[%c0_10, %c0_11, %c0_12] : memref<1x1x128xf32, #tpu.memory_space<vmem>>, vector<1x1x128xf32>
    %13 = vector.shape_cast %12 : vector<1x1x128xf32> to vector<1x128xf32>
    %14 = vector.shape_cast %11 : vector<1x128xf32> to vector<1x1x128xf32>
    tpu.vector_store %arg5[%c0_10, %c0_11, %c0_12], %14 {strides = array<i32>} : memref<1x1x128xf32, #tpu.memory_space<vmem>>, vector<1x1x128xf32>,
    return
  }
  func.func @transform_0(%arg0: i32) -> (i32, i32) {
    %c0_i32 = arith.constant 0 : i32
    %c0_i32_0 = arith.constant 0 : i32
    return %arg0, %c0_i32 : i32, i32
  }
  func.func @transform_1(%arg0: i32) -> (i32, i32) {
    %c0_i32 = arith.constant 0 : i32
    %c0_i32_0 = arith.constant 0 : i32
    %c0_i32_1 = arith.constant 0 : i32
    return %c0_i32, %c0_i32_0 : i32, i32
  }
  func.func @transform_2(%arg0: i32) -> (i32, i32) {
    %c0_i32 = arith.constant 0 : i32
    %c0_i32_0 = arith.constant 0 : i32
    return %arg0, %c0_i32 : i32, i32
  }
  func.func @transform_3(%arg0: i32) -> (i32, i32, i32) {
    %c0_i32 = arith.constant 0 : i32
    %c0_i32_0 = arith.constant 0 : i32
    %c0_i32_1 = arith.constant 0 : i32
    return %arg0, %c0_i32, %c0_i32_0 : i32, i32, i32
  }
  func.func @transform_4(%arg0: i32) -> (i32, i32, i32) {
    %c0_i32 = arith.constant 0 : i32
    %c0_i32_0 = arith.constant 0 : i32
    %c0_i32_1 = arith.constant 0 : i32
    return %arg0, %c0_i32, %c0_i32_0 : i32, i32, i32
  }
}

module attributes {stable_mosaic.version = 11 : i64} {
  func.func @bn_act_kernel(%arg0: i32, %arg1: memref<64x128xf32, #tpu.memory_space<vmem>>, %arg2: memref<2x1x128xf32, #tpu.memory_space<vmem>>, %arg3: memref<2x1x128xf32, #tpu.memory_space<vmem>>, %arg4: memref<1x128xf32, #tpu.memory_space<vmem>>, %arg5: memref<1x128xf32, #tpu.memory_space<vmem>>, %arg6: memref<64x128xbf16, #tpu.memory_space<vmem>>) attributes {dimension_semantics = [#tpu.dimension_semantics<parallel>], iteration_bounds = array<i64: 2>, scalar_prefetch = 0 : i64, scratch_operands = 0 : i64, tpu.core_type = #tpu.core_type<tc>, window_params = [{transform_indices = @transform_0, window_bounds = array<i64: 64, 128>}, {pipeline_mode = #tpu.pipeline_mode<synchronous>, transform_indices = @transform_1, window_bounds = array<i64: 2, 1, 128>}, {pipeline_mode = #tpu.pipeline_mode<synchronous>, transform_indices = @transform_2, window_bounds = array<i64: 2, 1, 128>}, {pipeline_mode = #tpu.pipeline_mode<synchronous>, transform_indices = @transform_3, window_bounds = array<i64: 1, 128>}, {pipeline_mode = #tpu.pipeline_mode<synchronous>, transform_indices = @transform_4, window_bounds = array<i64: 1, 128>}, {transform_indices = @transform_5, window_bounds = array<i64: 64, 128>}]} {
    %c0 = arith.constant 0 : index
    %c0_0 = arith.constant 0 : index
    %c0_1 = arith.constant 0 : index
    %0 = vector.load %arg2[%c0, %c0_0, %c0_1] : memref<2x1x128xf32, #tpu.memory_space<vmem>>, vector<2x1x128xf32>
    %cst = arith.constant dense<0.000000e+00> : vector<1x128xf32>
    %1 = vector.multi_reduction <add>, %0, %cst [0] : vector<2x1x128xf32> to vector<1x128xf32>
    %cst_2 = arith.constant 7.812500e-03 : f32
    %2 = vector.broadcast %cst_2 : f32 to vector<1x128xf32>
    %3 = arith.mulf %1, %2 : vector<1x128xf32>
    %c0_3 = arith.constant 0 : index
    %c0_4 = arith.constant 0 : index
    %c0_5 = arith.constant 0 : index
    %4 = vector.load %arg3[%c0_3, %c0_4, %c0_5] : memref<2x1x128xf32, #tpu.memory_space<vmem>>, vector<2x1x128xf32>
    %cst_6 = arith.constant dense<0.000000e+00> : vector<1x128xf32>
    %5 = vector.multi_reduction <add>, %4, %cst_6 [0] : vector<2x1x128xf32> to vector<1x128xf32>
    %cst_7 = arith.constant 7.812500e-03 : f32
    %6 = vector.broadcast %cst_7 : f32 to vector<1x128xf32>
    %7 = arith.mulf %5, %6 : vector<1x128xf32>
    %8 = arith.mulf %3, %3 : vector<1x128xf32>
    %9 = arith.subf %7, %8 : vector<1x128xf32>
    %c0_8 = arith.constant 0 : index
    %c0_9 = arith.constant 0 : index
    %10 = vector.load %arg4[%c0_8, %c0_9] : memref<1x128xf32, #tpu.memory_space<vmem>>, vector<1x128xf32>
    %cst_10 = arith.constant 9.99999974E-6 : f32
    %11 = vector.broadcast %cst_10 : f32 to vector<1x128xf32>
    %12 = arith.addf %9, %11 : vector<1x128xf32>
    %13 = math.rsqrt %12 : vector<1x128xf32>
    %14 = arith.mulf %10, %13 : vector<1x128xf32>
    %c0_11 = arith.constant 0 : index
    %c0_12 = arith.constant 0 : index
    %15 = vector.load %arg5[%c0_11, %c0_12] : memref<1x128xf32, #tpu.memory_space<vmem>>, vector<1x128xf32>
    %16 = arith.mulf %3, %14 : vector<1x128xf32>
    %17 = arith.subf %15, %16 : vector<1x128xf32>
    %c0_13 = arith.constant 0 : index
    %c0_14 = arith.constant 0 : index
    %18 = vector.load %arg1[%c0_13, %c0_14] : memref<64x128xf32, #tpu.memory_space<vmem>>, vector<64x128xf32>
    %19 = vector.broadcast %14 : vector<1x128xf32> to vector<64x128xf32>
    %20 = arith.mulf %18, %19 : vector<64x128xf32>
    %21 = vector.broadcast %17 : vector<1x128xf32> to vector<64x128xf32>
    %22 = arith.addf %20, %21 : vector<64x128xf32>
    %cst_15 = arith.constant 0.000000e+00 : f32
    %23 = vector.broadcast %cst_15 : f32 to vector<64x128xf32>
    %24 = arith.cmpf oge, %22, %23 : vector<64x128xf32>
    %cst_16 = arith.constant 2.000000e-01 : f32
    %25 = vector.broadcast %cst_16 : f32 to vector<64x128xf32>
    %26 = arith.mulf %25, %22 : vector<64x128xf32>
    %27 = arith.select %24, %22, %26 : vector<64x128xi1>, vector<64x128xf32>
    %28 = arith.truncf %27 : vector<64x128xf32> to vector<64x128xbf16>
    %c0_17 = arith.constant 0 : index
    %c0_18 = arith.constant 0 : index
    %29 = vector.load %arg6[%c0_17, %c0_18] : memref<64x128xbf16, #tpu.memory_space<vmem>>, vector<64x128xbf16>
    tpu.vector_store %arg6[%c0_17, %c0_18], %28 {strides = array<i32>} : memref<64x128xbf16, #tpu.memory_space<vmem>>, vector<64x128xbf16>,
    return
  }
  func.func @transform_0(%arg0: i32) -> (i32, i32) {
    %c0_i32 = arith.constant 0 : i32
    %c0_i32_0 = arith.constant 0 : i32
    return %arg0, %c0_i32 : i32, i32
  }
  func.func @transform_1(%arg0: i32) -> (i32, i32, i32) {
    %c0_i32 = arith.constant 0 : i32
    %c0_i32_0 = arith.constant 0 : i32
    %c0_i32_1 = arith.constant 0 : i32
    %c0_i32_2 = arith.constant 0 : i32
    return %c0_i32, %c0_i32_0, %c0_i32_1 : i32, i32, i32
  }
  func.func @transform_2(%arg0: i32) -> (i32, i32, i32) {
    %c0_i32 = arith.constant 0 : i32
    %c0_i32_0 = arith.constant 0 : i32
    %c0_i32_1 = arith.constant 0 : i32
    %c0_i32_2 = arith.constant 0 : i32
    return %c0_i32, %c0_i32_0, %c0_i32_1 : i32, i32, i32
  }
  func.func @transform_3(%arg0: i32) -> (i32, i32) {
    %c0_i32 = arith.constant 0 : i32
    %c0_i32_0 = arith.constant 0 : i32
    %c0_i32_1 = arith.constant 0 : i32
    return %c0_i32, %c0_i32_0 : i32, i32
  }
  func.func @transform_4(%arg0: i32) -> (i32, i32) {
    %c0_i32 = arith.constant 0 : i32
    %c0_i32_0 = arith.constant 0 : i32
    %c0_i32_1 = arith.constant 0 : i32
    return %c0_i32, %c0_i32_0 : i32, i32
  }
  func.func @transform_5(%arg0: i32) -> (i32, i32) {
    %c0_i32 = arith.constant 0 : i32
    %c0_i32_0 = arith.constant 0 : i32
    return %arg0, %c0_i32 : i32, i32
  }
}

module attributes {stable_mosaic.version = 11 : i64} {
  func.func @conv_stats_kernel(%arg0: i32, %arg1: memref<16x2048xbf16, #tpu.memory_space<vmem>>, %arg2: memref<2048x256xbf16, #tpu.memory_space<vmem>>, %arg3: memref<16x256xf32, #tpu.memory_space<vmem>>, %arg4: memref<1x1x256xf32, #tpu.memory_space<vmem>>, %arg5: memref<1x1x256xf32, #tpu.memory_space<vmem>>) attributes {dimension_semantics = [#tpu.dimension_semantics<parallel>], iteration_bounds = array<i64: 2>, scalar_prefetch = 0 : i64, scratch_operands = 0 : i64, tpu.core_type = #tpu.core_type<tc>, window_params = [{transform_indices = @transform_0, window_bounds = array<i64: 16, 2048>}, {pipeline_mode = #tpu.pipeline_mode<synchronous>, transform_indices = @transform_1, window_bounds = array<i64: 2048, 256>}, {transform_indices = @transform_2, window_bounds = array<i64: 16, 256>}, {transform_indices = @transform_3, window_bounds = array<i64: 1, 1, 256>}, {transform_indices = @transform_4, window_bounds = array<i64: 1, 1, 256>}]} {
    %c0 = arith.constant 0 : index
    %c0_0 = arith.constant 0 : index
    %0 = vector.load %arg1[%c0, %c0_0] : memref<16x2048xbf16, #tpu.memory_space<vmem>>, vector<16x2048xbf16>
    %c0_1 = arith.constant 0 : index
    %c0_2 = arith.constant 0 : index
    %1 = vector.load %arg2[%c0_1, %c0_2] : memref<2048x256xbf16, #tpu.memory_space<vmem>>, vector<2048x256xbf16>
    %cst = arith.constant dense<0.000000e+00> : vector<16x256xf32>
    %2 = tpu.matmul %0, %1, %cst {dimension_numbers = #tpu.dot_dimension_numbers<[1], [0], [0], [1], [0, 0, 1, 1], [], []>} : vector<16x2048xbf16>, vector<2048x256xbf16>, vector<16x256xf32> -> vector<16x256xf32>
    %c0_3 = arith.constant 0 : index
    %c0_4 = arith.constant 0 : index
    %3 = vector.load %arg3[%c0_3, %c0_4] : memref<16x256xf32, #tpu.memory_space<vmem>>, vector<16x256xf32>
    tpu.vector_store %arg3[%c0_3, %c0_4], %2 {strides = array<i32>} : memref<16x256xf32, #tpu.memory_space<vmem>>, vector<16x256xf32>,
    %cst_5 = arith.constant dense<0.000000e+00> : vector<256xf32>
    %4 = vector.multi_reduction <add>, %2, %cst_5 [0] : vector<16x256xf32> to vector<256xf32>
    %5 = vector.shape_cast %4 : vector<256xf32> to vector<1x256xf32>
    %c0_6 = arith.constant 0 : index
    %c0_7 = arith.constant 0 : index
    %c0_8 = arith.constant 0 : index
    %6 = vector.load %arg4[%c0_6, %c0_7, %c0_8] : memref<1x1x256xf32, #tpu.memory_space<vmem>>, vector<1x1x256xf32>
    %7 = vector.shape_cast %6 : vector<1x1x256xf32> to vector<1x256xf32>
    %8 = vector.shape_cast %5 : vector<1x256xf32> to vector<1x1x256xf32>
    tpu.vector_store %arg4[%c0_6, %c0_7, %c0_8], %8 {strides = array<i32>} : memref<1x1x256xf32, #tpu.memory_space<vmem>>, vector<1x1x256xf32>,
    %9 = arith.mulf %2, %2 : vector<16x256xf32>
    %cst_9 = arith.constant dense<0.000000e+00> : vector<256xf32>
    %10 = vector.multi_reduction <add>, %9, %cst_9 [0] : vector<16x256xf32> to vector<256xf32>
    %11 = vector.shape_cast %10 : vector<256xf32> to vector<1x256xf32>
    %c0_10 = arith.constant 0 : index
    %c0_11 = arith.constant 0 : index
    %c0_12 = arith.constant 0 : index
    %12 = vector.load %arg5[%c0_10, %c0_11, %c0_12] : memref<1x1x256xf32, #tpu.memory_space<vmem>>, vector<1x1x256xf32>
    %13 = vector.shape_cast %12 : vector<1x1x256xf32> to vector<1x256xf32>
    %14 = vector.shape_cast %11 : vector<1x256xf32> to vector<1x1x256xf32>
    tpu.vector_store %arg5[%c0_10, %c0_11, %c0_12], %14 {strides = array<i32>} : memref<1x1x256xf32, #tpu.memory_space<vmem>>, vector<1x1x256xf32>,
    return
  }
  func.func @transform_0(%arg0: i32) -> (i32, i32) {
    %c0_i32 = arith.constant 0 : i32
    %c0_i32_0 = arith.constant 0 : i32
    return %arg0, %c0_i32 : i32, i32
  }
  func.func @transform_1(%arg0: i32) -> (i32, i32) {
    %c0_i32 = arith.constant 0 : i32
    %c0_i32_0 = arith.constant 0 : i32
    %c0_i32_1 = arith.constant 0 : i32
    return %c0_i32, %c0_i32_0 : i32, i32
  }
  func.func @transform_2(%arg0: i32) -> (i32, i32) {
    %c0_i32 = arith.constant 0 : i32
    %c0_i32_0 = arith.constant 0 : i32
    return %arg0, %c0_i32 : i32, i32
  }
  func.func @transform_3(%arg0: i32) -> (i32, i32, i32) {
    %c0_i32 = arith.constant 0 : i32
    %c0_i32_0 = arith.constant 0 : i32
    %c0_i32_1 = arith.constant 0 : i32
    return %arg0, %c0_i32, %c0_i32_0 : i32, i32, i32
  }
  func.func @transform_4(%arg0: i32) -> (i32, i32, i32) {
    %c0_i32 = arith.constant 0 : i32
    %c0_i32_0 = arith.constant 0 : i32
    %c0_i32_1 = arith.constant 0 : i32
    return %arg0, %c0_i32, %c0_i32_0 : i32, i32, i32
  }
}

module attributes {stable_mosaic.version = 11 : i64} {
  func.func @bn_act_final_kernel(%arg0: i32, %arg1: memref<16x256xf32, #tpu.memory_space<vmem>>, %arg2: memref<2x1x256xf32, #tpu.memory_space<vmem>>, %arg3: memref<2x1x256xf32, #tpu.memory_space<vmem>>, %arg4: memref<1x256xf32, #tpu.memory_space<vmem>>, %arg5: memref<1x256xf32, #tpu.memory_space<vmem>>, %arg6: memref<16x256xf32, #tpu.memory_space<vmem>>, %arg7: memref<1x1xf32, #tpu.memory_space<vmem>>, %arg8: memref<1x1x1xf32, #tpu.memory_space<vmem>>) attributes {dimension_semantics = [#tpu.dimension_semantics<parallel>], iteration_bounds = array<i64: 2>, scalar_prefetch = 0 : i64, scratch_operands = 0 : i64, tpu.core_type = #tpu.core_type<tc>, window_params = [{transform_indices = @transform_0, window_bounds = array<i64: 16, 256>}, {pipeline_mode = #tpu.pipeline_mode<synchronous>, transform_indices = @transform_1, window_bounds = array<i64: 2, 1, 256>}, {pipeline_mode = #tpu.pipeline_mode<synchronous>, transform_indices = @transform_2, window_bounds = array<i64: 2, 1, 256>}, {pipeline_mode = #tpu.pipeline_mode<synchronous>, transform_indices = @transform_3, window_bounds = array<i64: 1, 256>}, {pipeline_mode = #tpu.pipeline_mode<synchronous>, transform_indices = @transform_4, window_bounds = array<i64: 1, 256>}, {pipeline_mode = #tpu.pipeline_mode<synchronous>, transform_indices = @transform_5, window_bounds = array<i64: 16, 256>}, {pipeline_mode = #tpu.pipeline_mode<synchronous>, transform_indices = @transform_6, window_bounds = array<i64: 1, 1>}, {transform_indices = @transform_7, window_bounds = array<i64: 1, 1, 1>}]} {
    %c0 = arith.constant 0 : index
    %c0_0 = arith.constant 0 : index
    %c0_1 = arith.constant 0 : index
    %0 = vector.load %arg2[%c0, %c0_0, %c0_1] : memref<2x1x256xf32, #tpu.memory_space<vmem>>, vector<2x1x256xf32>
    %cst = arith.constant dense<0.000000e+00> : vector<1x256xf32>
    %1 = vector.multi_reduction <add>, %0, %cst [0] : vector<2x1x256xf32> to vector<1x256xf32>
    %cst_2 = arith.constant 3.125000e-02 : f32
    %2 = vector.broadcast %cst_2 : f32 to vector<1x256xf32>
    %3 = arith.mulf %1, %2 : vector<1x256xf32>
    %c0_3 = arith.constant 0 : index
    %c0_4 = arith.constant 0 : index
    %c0_5 = arith.constant 0 : index
    %4 = vector.load %arg3[%c0_3, %c0_4, %c0_5] : memref<2x1x256xf32, #tpu.memory_space<vmem>>, vector<2x1x256xf32>
    %cst_6 = arith.constant dense<0.000000e+00> : vector<1x256xf32>
    %5 = vector.multi_reduction <add>, %4, %cst_6 [0] : vector<2x1x256xf32> to vector<1x256xf32>
    %cst_7 = arith.constant 3.125000e-02 : f32
    %6 = vector.broadcast %cst_7 : f32 to vector<1x256xf32>
    %7 = arith.mulf %5, %6 : vector<1x256xf32>
    %8 = arith.mulf %3, %3 : vector<1x256xf32>
    %9 = arith.subf %7, %8 : vector<1x256xf32>
    %c0_8 = arith.constant 0 : index
    %c0_9 = arith.constant 0 : index
    %10 = vector.load %arg4[%c0_8, %c0_9] : memref<1x256xf32, #tpu.memory_space<vmem>>, vector<1x256xf32>
    %cst_10 = arith.constant 9.99999974E-6 : f32
    %11 = vector.broadcast %cst_10 : f32 to vector<1x256xf32>
    %12 = arith.addf %9, %11 : vector<1x256xf32>
    %13 = math.rsqrt %12 : vector<1x256xf32>
    %14 = arith.mulf %10, %13 : vector<1x256xf32>
    %c0_11 = arith.constant 0 : index
    %c0_12 = arith.constant 0 : index
    %15 = vector.load %arg5[%c0_11, %c0_12] : memref<1x256xf32, #tpu.memory_space<vmem>>, vector<1x256xf32>
    %16 = arith.mulf %3, %14 : vector<1x256xf32>
    %17 = arith.subf %15, %16 : vector<1x256xf32>
    %c0_13 = arith.constant 0 : index
    %c0_14 = arith.constant 0 : index
    %18 = vector.load %arg1[%c0_13, %c0_14] : memref<16x256xf32, #tpu.memory_space<vmem>>, vector<16x256xf32>
    %19 = vector.broadcast %14 : vector<1x256xf32> to vector<16x256xf32>
    %20 = arith.mulf %18, %19 : vector<16x256xf32>
    %21 = vector.broadcast %17 : vector<1x256xf32> to vector<16x256xf32>
    %22 = arith.addf %20, %21 : vector<16x256xf32>
    %cst_15 = arith.constant 0.000000e+00 : f32
    %23 = vector.broadcast %cst_15 : f32 to vector<16x256xf32>
    %24 = arith.cmpf oge, %22, %23 : vector<16x256xf32>
    %cst_16 = arith.constant 2.000000e-01 : f32
    %25 = vector.broadcast %cst_16 : f32 to vector<16x256xf32>
    %26 = arith.mulf %25, %22 : vector<16x256xf32>
    %27 = arith.select %24, %22, %26 : vector<16x256xi1>, vector<16x256xf32>
    %c0_17 = arith.constant 0 : index
    %c0_18 = arith.constant 0 : index
    %28 = vector.load %arg6[%c0_17, %c0_18] : memref<16x256xf32, #tpu.memory_space<vmem>>, vector<16x256xf32>
    %29 = arith.mulf %27, %28 : vector<16x256xf32>
    %cst_19 = arith.constant dense<0.000000e+00> : vector<16xf32>
    %30 = vector.multi_reduction <add>, %29, %cst_19 [1] : vector<16x256xf32> to vector<16xf32>
    %31 = vector.shape_cast %30 : vector<16xf32> to vector<16x1xf32>
    %cst_20 = arith.constant dense<0.000000e+00> : vector<1xf32>
    %32 = vector.multi_reduction <add>, %31, %cst_20 [0] : vector<16x1xf32> to vector<1xf32>
    %33 = vector.shape_cast %32 : vector<1xf32> to vector<1x1xf32>
    %c0_21 = arith.constant 0 : index
    %c0_22 = arith.constant 0 : index
    %34 = vector.load %arg7[%c0_21, %c0_22] : memref<1x1xf32, #tpu.memory_space<vmem>>, vector<1x1xf32>
    %35 = arith.addf %33, %34 : vector<1x1xf32>
    %c0_23 = arith.constant 0 : index
    %c0_24 = arith.constant 0 : index
    %c0_25 = arith.constant 0 : index
    %36 = vector.load %arg8[%c0_23, %c0_24, %c0_25] : memref<1x1x1xf32, #tpu.memory_space<vmem>>, vector<1x1x1xf32>
    %37 = vector.shape_cast %36 : vector<1x1x1xf32> to vector<1x1xf32>
    %38 = vector.shape_cast %35 : vector<1x1xf32> to vector<1x1x1xf32>
    tpu.vector_store %arg8[%c0_23, %c0_24, %c0_25], %38 {strides = array<i32>} : memref<1x1x1xf32, #tpu.memory_space<vmem>>, vector<1x1x1xf32>,
    return
  }
  func.func @transform_0(%arg0: i32) -> (i32, i32) {
    %c0_i32 = arith.constant 0 : i32
    %c0_i32_0 = arith.constant 0 : i32
    return %arg0, %c0_i32 : i32, i32
  }
  func.func @transform_1(%arg0: i32) -> (i32, i32, i32) {
    %c0_i32 = arith.constant 0 : i32
    %c0_i32_0 = arith.constant 0 : i32
    %c0_i32_1 = arith.constant 0 : i32
    %c0_i32_2 = arith.constant 0 : i32
    return %c0_i32, %c0_i32_0, %c0_i32_1 : i32, i32, i32
  }
  func.func @transform_2(%arg0: i32) -> (i32, i32, i32) {
    %c0_i32 = arith.constant 0 : i32
    %c0_i32_0 = arith.constant 0 : i32
    %c0_i32_1 = arith.constant 0 : i32
    %c0_i32_2 = arith.constant 0 : i32
    return %c0_i32, %c0_i32_0, %c0_i32_1 : i32, i32, i32
  }
  func.func @transform_3(%arg0: i32) -> (i32, i32) {
    %c0_i32 = arith.constant 0 : i32
    %c0_i32_0 = arith.constant 0 : i32
    %c0_i32_1 = arith.constant 0 : i32
    return %c0_i32, %c0_i32_0 : i32, i32
  }
  func.func @transform_4(%arg0: i32) -> (i32, i32) {
    %c0_i32 = arith.constant 0 : i32
    %c0_i32_0 = arith.constant 0 : i32
    %c0_i32_1 = arith.constant 0 : i32
    return %c0_i32, %c0_i32_0 : i32, i32
  }
  func.func @transform_5(%arg0: i32) -> (i32, i32) {
    %c0_i32 = arith.constant 0 : i32
    %c0_i32_0 = arith.constant 0 : i32
    %c0_i32_1 = arith.constant 0 : i32
    return %c0_i32, %c0_i32_0 : i32, i32
  }
  func.func @transform_6(%arg0: i32) -> (i32, i32) {
    %c0_i32 = arith.constant 0 : i32
    %c0_i32_0 = arith.constant 0 : i32
    %c0_i32_1 = arith.constant 0 : i32
    return %c0_i32, %c0_i32_0 : i32, i32
  }
  func.func @transform_7(%arg0: i32) -> (i32, i32, i32) {
    %c0_i32 = arith.constant 0 : i32
    %c0_i32_0 = arith.constant 0 : i32
    %c0_i32_1 = arith.constant 0 : i32
    return %arg0, %c0_i32, %c0_i32_0 : i32, i32, i32
  }
}

</mosaic_0001>

<llo_original>
// kernel: conditional_discriminator_forward.5
$region0: #{conditional_discriminator_forward.5}
  #allocation0 [shape = 'u32[]', space=smem, size = 0x4, offset = 0x4, fixed_abs, tag = 'smem constant byte address 0x4 - core index']
  #allocation1 [shape = 'u32[144,128]{1,0:T(1,128)}', space=vmem, size = 0x12000, scoped, tag = 'internal scratch']
  #allocation2 [shape = 's32[1]{0}', space=sflag, size = 0x4, scoped, tag = 'scoped memory for conditional_discriminator_forward.5']
  #allocation3 [shape = 'u8[512]{0}', space=smem, size = 0x200, scoped, tag = 'prefetched SMEM operand 0']
  %s0 = inlined_call_operand.vmem [shape: s32[2], index: 0, kind: input, shape index: {}]
  %s1 = inlined_call_operand.vmem [shape: bf16[2,256,48], index: 1, kind: input, shape index: {}]
  %s2 = inlined_call_operand.vmem [shape: bf16[48,64], index: 2, kind: input, shape index: {}]
  %s3 = inlined_call_operand.vmem [shape: f32[1,64], index: 3, kind: input, shape index: {}]
  %s4 = inlined_call_operand.vmem [shape: f32[10,1,64], index: 4, kind: input, shape index: {}]
  %s5 = inlined_call_operand.vmem [shape: bf16[2,256,128], index: 5, kind: output, shape index: {}]
  %s6 = sld [smem:[#allocation0]]
  $region49: #{conditional_discriminator_forward.5} parent=0
    _
  %s8 = ssub.s32 1, %s6
  %s9 = scalar_select 0, %s8, %s6
  %s10 = sshll.u32 %s0, 4
  %s11 = int_to_ptr.vmem [resolvable:$true] %s10
  %13 = dma.vmem_to_smem %s11, 16, [#allocation3], [#allocation2]
  %14 = dma.done [#allocation2], 16
  %15 = sfence
  loop: start=0, step=1, limit=4
  $region2: #{conditional_discriminator_forward.5} parent=0 // loop_pre_header
    _
  $region3: #{conditional_discriminator_forward.5} parent=0 // loop_header
    %s17 = sphi 0, %s21
    %p18 = scmp.ge.s32.totalorder %s17, 4
    %s24 = sphi 0, %s36
    %s25 = sphi 0, %s32
    %s26 = sphi 0, %s24
    %s27 = sphi 0, %s25
    %s28 = sphi 0, %s26
    %s29 = sphi 0, %s27
    %s41 = sphi 0, %s43
    %s44 = sphi 0, %s41
    %s45 = sphi 0, %s44
    %s61 = sphi 0, %s45
    %s65 = sphi 0, %s65
    %s67 = sphi 0, %s65
    %s68 = sphi 0, %s67
    %s82 = sphi 0, %s68
    %s86 = sphi 0, %s86
    %s88 = sphi 0, %s86
    %s89 = sphi 0, %s88
    %s103 = sphi 0, %s89
    %s111 = sphi 0, %s113
    %s114 = sphi 0, %s111
    %s115 = sphi 0, %s114
    %s131 = sphi 0, %s115
    %s139 = sphi 0, %s141
    %s142 = sphi 0, %s139
    %s143 = sphi 0, %s142
    %s159 = sphi 0, %s143
  $region4: #{conditional_discriminator_forward.5} parent=0 // loop_header_branch
    %20 = sbr.rel (%p18) target = $region8
  $region5: #{conditional_discriminator_forward.5} parent=0 // loop_body
    %s22 = ssub.s32 %s17, 1
    %s23 = ssub.s32 %s17, 2
    %s30 = sadd.s32 1, %s25
    %p31 = scmp.ge.s32.totalorder %s30, 1
    %s32 = scalar_select %p31, 0, %s30
    %s33 = sadd.s32 1, %s24
    %s34 = scalar_select %p31, %s33, %s24
    %p35 = scmp.ge.s32.totalorder %s34, 2
    %s36 = scalar_select %p35, 0, %s34
    %s37 = ssub.s32 %s24, %s36
    %s38 = ssub.s32 %s25, %s32
    %s39 = sor.u32 %s37, %s38
    %p40 = scmp.eq.s32.totalorder %s39, 0
    %s42 = sadd.s32 %s41, 1
    %s43 = scalar_select %p40, %s41, %s42
    %p46 = pneg %p40
    %p47 = scmp.eq.s32.totalorder %s17, 1
    %p48 = por %p46, %p47
    %p49 = scmp.ne.s32.totalorder %s41, %s44
    %p50 = scmp.eq.s32.totalorder %s17, 0
    %p51 = por %p49, %p50
    %p52 = scmp.ne.s32.totalorder %s41, %s44
    %p53 = scmp.eq.s32.totalorder %s22, 1
    %p54 = por %p52, %p53
    %p55 = scmp.ne.s32.totalorder %s44, %s45
    %p56 = scmp.eq.s32.totalorder %s22, 0
    %p57 = por %p55, %p56
    %p58 = scmp.ne.s32.totalorder %s44, %s45
    %p59 = scmp.eq.s32.totalorder %s23, 1
    %p60 = por %p58, %p59
    %p62 = scmp.ne.s32.totalorder %s45, %s61
    %p63 = scmp.eq.s32.totalorder %s23, 0
    %p64 = por %p62, %p63
    %s66 = sadd.s32 %s65, 1
    %p69 = scmp.eq.s32.totalorder %s17, 1
    %p70 = scmp.ne.s32.totalorder %s65, %s67
    %p71 = scmp.eq.s32.totalorder %s17, 0
    %p72 = por %p70, %p71
    %p73 = scmp.ne.s32.totalorder %s65, %s67
    %p74 = scmp.eq.s32.totalorder %s22, 1
    %p75 = por %p73, %p74
    %p76 = scmp.ne.s32.totalorder %s67, %s68
    %p77 = scmp.eq.s32.totalorder %s22, 0
    %p78 = por %p76, %p77
    %p79 = scmp.ne.s32.totalorder %s67, %s68
    %p80 = scmp.eq.s32.totalorder %s23, 1
    %p81 = por %p79, %p80
    %p83 = scmp.ne.s32.totalorder %s68, %s82
    %p84 = scmp.eq.s32.totalorder %s23, 0
    %p85 = por %p83, %p84
    %s87 = sadd.s32 %s86, 1
    %p90 = scmp.eq.s32.totalorder %s17, 1
    %p91 = scmp.ne.s32.totalorder %s86, %s88
    %p92 = scmp.eq.s32.totalorder %s17, 0
    %p93 = por %p91, %p92
    %p94 = scmp.ne.s32.totalorder %s86, %s88
    %p95 = scmp.eq.s32.totalorder %s22, 1
    %p96 = por %p94, %p95
    %p97 = scmp.ne.s32.totalorder %s88, %s89
    %p98 = scmp.eq.s32.totalorder %s22, 0
    %p99 = por %p97, %p98
    %p100 = scmp.ne.s32.totalorder %s88, %s89
    %p101 = scmp.eq.s32.totalorder %s23, 1
    %p102 = por %p100, %p101
    %p104 = scmp.ne.s32.totalorder %s89, %s103
    %p105 = scmp.eq.s32.totalorder %s23, 0
    %p106 = por %p104, %p105
    %s107 = sld [smem:[#allocation3 + %s24]]
    %s108 = sld [smem:[#allocation3 + %s36]]
    %s109 = ssub.s32 %s107, %s108
    %p110 = scmp.eq.s32.totalorder %s109, 0
    %s112 = sadd.s32 %s111, 1
    %s113 = scalar_select %p110, %s111, %s112
    %p116 = pneg %p110
    %p117 = scmp.eq.s32.totalorder %s17, 1
    %p118 = por %p116, %p117
    %p119 = scmp.ne.s32.totalorder %s111, %s114
    %p120 = scmp.eq.s32.totalorder %s17, 0
    %p121 = por %p119, %p120
    %p122 = scmp.ne.s32.totalorder %s111, %s114
    %p123 = scmp.eq.s32.totalorder %s22, 1
    %p124 = por %p122, %p123
    %p125 = scmp.ne.s32.totalorder %s114, %s115
    %p126 = scmp.eq.s32.totalorder %s22, 0
    %p127 = por %p125, %p126
    %p128 = scmp.ne.s32.totalorder %s114, %s115
    %p129 = scmp.eq.s32.totalorder %s23, 1
    %p130 = por %p128, %p129
    %p132 = scmp.ne.s32.totalorder %s115, %s131
    %p133 = scmp.eq.s32.totalorder %s23, 0
    %p134 = por %p132, %p133
    %s135 = ssub.s32 %s24, %s36
    %s136 = ssub.s32 %s25, %s32
    %s137 = sor.u32 %s135, %s136
    %p138 = scmp.eq.s32.totalorder %s137, 0
    %s140 = sadd.s32 %s139, 1
    %s141 = scalar_select %p138, %s139, %s140
    %p144 = pneg %p138
    %p145 = scmp.eq.s32.totalorder %s17, 1
    %p146 = por %p144, %p145
    %p147 = scmp.ne.s32.totalorder %s139, %s142
    %p148 = scmp.eq.s32.totalorder %s17, 0
    %p149 = por %p147, %p148
    %p150 = scmp.ne.s32.totalorder %s139, %s142
    %p151 = scmp.eq.s32.totalorder %s22, 1
    %p152 = por %p150, %p151
    %p153 = scmp.ne.s32.totalorder %s142, %s143
    %p154 = scmp.eq.s32.totalorder %s22, 0
    %p155 = por %p153, %p154
    %p156 = scmp.ne.s32.totalorder %s142, %s143
    %p157 = scmp.eq.s32.totalorder %s23, 1
    %p158 = por %p156, %p157
    %p160 = scmp.ne.s32.totalorder %s143, %s159
    %p161 = scmp.eq.s32.totalorder %s23, 0
    %p162 = por %p160, %p161
    %p163 = scmp.le.s32.totalorder 1, %s17
    %p164 = scmp.lt.s32.totalorder %s17, 3
    %p165 = pnand %p163, %p164
    %p166 = pneg %p165
    // Predicated region
    $region9: #{conditional_discriminator_forward.5} parent=5 // pred_check
      _
    $region10: #{conditional_discriminator_forward.5} parent=5 // pred_check_branch
      %168 = sbr.rel (%p165) target = $region12
    $region11: #{conditional_discriminator_forward.5} parent=5 // pred_region
      %s169 = ssub.s32 %s17, 1
      // Predicated region
      $region13: #{conditional_discriminator_forward.5} parent=11 // pred_check
        %p170 = pneg %p78
      $region14: #{conditional_discriminator_forward.5} parent=11 // pred_check_branch
        %172 = sbr.rel (%p170) target = $region16
      $region15: #{conditional_discriminator_forward.5} parent=11 // pred_region
        _
      $region16: #{conditional_discriminator_forward.5} parent=11 // pred_fallthru
        _
      // Predicated region
      $region17: #{conditional_discriminator_forward.5} parent=11 // pred_check
        %p173 = pneg %p99
      $region18: #{conditional_discriminator_forward.5} parent=11 // pred_check_branch
        %175 = sbr.rel (%p173) target = $region20
      $region19: #{conditional_discriminator_forward.5} parent=11 // pred_region
        _
      $region20: #{conditional_discriminator_forward.5} parent=11 // pred_fallthru
        _
    $region12: #{conditional_discriminator_forward.5} parent=5 // pred_fallthru
      _
    %p176 = scmp.lt.s32.totalorder %s17, 2
    // Predicated region
    $region21: #{conditional_discriminator_forward.5} parent=5 // pred_check
      %p177 = pneg %p176
    $region22: #{conditional_discriminator_forward.5} parent=5 // pred_check_branch
      %179 = sbr.rel (%p177) target = $region24
    $region23: #{conditional_discriminator_forward.5} parent=5 // pred_region
      // Predicated region
      $region25: #{conditional_discriminator_forward.5} parent=23 // pred_check
        %p180 = pneg %p51
      $region26: #{conditional_discriminator_forward.5} parent=23 // pred_check_branch
        %182 = sbr.rel (%p180) target = $region28
      $region27: #{conditional_discriminator_forward.5} parent=23 // pred_region
        %s183 = smul.u32 32, %s25
        %p184 = scmp.lt.s32.totalorder %s24, 1
        %s185 = scalar_select %p184, %s24, 1
        %p186 = scmp.lt.s32.totalorder %s183, 31
        %s187 = scalar_select %p186, %s183, 31
        %s188 = smul.addr %s185, 32
        %s189 = sadd.s32 %s187, %s188
        %s190 = smul.addr %s189, 4
        %s191 = scalar_lea.vmem %s1, %s190
        %s192 = smul.u32 32, %s25
      $region28: #{conditional_discriminator_forward.5} parent=23 // pred_fallthru
        _
      // Predicated region
      $region29: #{conditional_discriminator_forward.5} parent=23 // pred_check
        %p193 = pneg %p121
      $region30: #{conditional_discriminator_forward.5} parent=23 // pred_check_branch
        %195 = sbr.rel (%p193) target = $region32
      $region31: #{conditional_discriminator_forward.5} parent=23 // pred_region
        %s196 = sld [smem:[#allocation3 + %s24]]
        %p197 = scmp.lt.s32.totalorder %s196, 9
        %s198 = scalar_select %p197, %s196, 9
        %s199 = scalar_lea.vmem %s4, %s198
        %s200 = sld [smem:[#allocation3 + %s24]]
      $region32: #{conditional_discriminator_forward.5} parent=23 // pred_fallthru
        _
    $region24: #{conditional_discriminator_forward.5} parent=5 // pred_fallthru
      _
    %p201 = scmp.le.s32.totalorder 1, %s17
    %p202 = scmp.lt.s32.totalorder %s17, 3
    %p203 = pnand %p201, %p202
    %p204 = pneg %p203
    // Predicated region
    $region33: #{conditional_discriminator_forward.5} parent=5 // pred_check
      _
    $region34: #{conditional_discriminator_forward.5} parent=5 // pred_check_branch
      %206 = sbr.rel (%p203) target = $region36
    $region35: #{conditional_discriminator_forward.5} parent=5 // pred_region
      %s207 = ssub.s32 %s17, 1
      %s208 = smul.u32 32, %s27
      %p209 = scmp.lt.s32.totalorder %s26, 1
      %s210 = scalar_select %p209, %s26, 1
      %p211 = scmp.lt.s32.totalorder %s208, 31
      %s212 = scalar_select %p211, %s208, 31
      %s213 = smul.addr %s210, 32
      %s214 = sadd.s32 %s212, %s213
      %s215 = smul.addr %s214, 4
      %s216 = scalar_lea.vmem %s1, %s215
      %p217 = pneg %p57
      %p218 = pneg %p54
      %p219 = pneg %p78
      %p220 = pneg %p75
      %p221 = pneg %p99
      %p222 = pneg %p96
      %s223 = sld [smem:[#allocation3 + %s26]]
      %p224 = scmp.lt.s32.totalorder %s223, 9
      %s225 = scalar_select %p224, %s223, 9
      %s226 = scalar_lea.vmem %s4, %s225
      %p227 = pneg %p127
      %p228 = pneg %p124
      %p229 = pneg %p155
      %p230 = pneg %p152
      %s231 = smul.u32 32, %s27
      %p232 = scmp.lt.s32.totalorder %s26, 1
      %s233 = scalar_select %p232, %s26, 1
      %p234 = scmp.lt.s32.totalorder %s231, 31
      %s235 = scalar_select %p234, %s231, 31
      %s236 = smul.addr %s233, 32
      %s237 = sadd.s32 %s235, %s236
      %s238 = smul.addr %s237, 4
      %s239 = scalar_lea.vmem %s5, %s238
      %s240 = smul.u32 32, %s27
      %p241 = scmp.lt.s32.totalorder %s26, 1
      %s242 = scalar_select %p241, %s26, 1
      %p243 = scmp.lt.s32.totalorder %s240, 31
      %s244 = scalar_select %p243, %s240, 31
      %s245 = smul.addr %s242, 32
      %s246 = sadd.s32 %s244, %s245
      %s247 = smul.addr %s246, 4
      %s248 = scalar_lea.vmem %s1, %s247
      %s249 = smul.u32 32, %s27
      %s250 = sld [smem:[#allocation3 + %s26]]
      %p251 = scmp.lt.s32.totalorder %s250, 9
      %s252 = scalar_select %p251, %s250, 9
      %s253 = scalar_lea.vmem %s4, %s252
      %s254 = sld [smem:[#allocation3 + %s26]]
      %s255 = smul.u32 32, %s27
      %p256 = scmp.lt.s32.totalorder %s26, 1
      %s257 = scalar_select %p256, %s26, 1
      %p258 = scmp.lt.s32.totalorder %s255, 31
      %s259 = scalar_select %p258, %s255, 31
      %s260 = smul.addr %s257, 32
      %s261 = sadd.s32 %s259, %s260
      %s262 = smul.addr %s261, 4
      %s263 = scalar_lea.vmem %s5, %s262
      %s264 = smul.u32 32, %s27
      %v266 = vld [vmem:[%s248] sm:$0xf]
      %v267 = vld [vmem:[%s248 + $0x4] sm:$0xf]
      %v268 = vld [vmem:[%s248 + $0x8] sm:$0xf]
      %v269 = vld [vmem:[%s248 + $0xc] sm:$0xf]
      %v270 = vld [vmem:[%s248 + $0x10] sm:$0xf]
      %v271 = vld [vmem:[%s248 + $0x14] sm:$0xf]
      %v272 = vld [vmem:[%s248 + $0x18] sm:$0xf]
      %v273 = vld [vmem:[%s248 + $0x1c] sm:$0xf]
      %v274 = vld [vmem:[%s248 + $0x20] sm:$0xf]
      %v275 = vld [vmem:[%s248 + $0x24] sm:$0xf]
      %v276 = vld [vmem:[%s248 + $0x28] sm:$0xf]
      %v277 = vld [vmem:[%s248 + $0x2c] sm:$0xf]
      %v278 = vld [vmem:[%s248 + $0x30] sm:$0xf]
      %v279 = vld [vmem:[%s248 + $0x34] sm:$0xf]
      %v280 = vld [vmem:[%s248 + $0x38] sm:$0xf]
      %v281 = vld [vmem:[%s248 + $0x3c] sm:$0xf]
      %v282 = vld [vmem:[%s248 + $0x40] sm:$0xf]
      %v283 = vld [vmem:[%s248 + $0x44] sm:$0xf]
      %v284 = vld [vmem:[%s248 + $0x48] sm:$0xf]
      %v285 = vld [vmem:[%s248 + $0x4c] sm:$0xf]
      %v286 = vld [vmem:[%s248 + $0x50] sm:$0xf]
      %v287 = vld [vmem:[%s248 + $0x54] sm:$0xf]
      %v288 = vld [vmem:[%s248 + $0x58] sm:$0xf]
      %v289 = vld [vmem:[%s248 + $0x5c] sm:$0xf]
      %v290 = vld [vmem:[%s248 + $0x60] sm:$0xf]
      %v291 = vld [vmem:[%s248 + $0x64] sm:$0xf]
      %v292 = vld [vmem:[%s248 + $0x68] sm:$0xf]
      %v293 = vld [vmem:[%s248 + $0x6c] sm:$0xf]
      %v294 = vld [vmem:[%s248 + $0x70] sm:$0xf]
      %v295 = vld [vmem:[%s248 + $0x74] sm:$0xf]
      %v296 = vld [vmem:[%s248 + $0x78] sm:$0xf]
      %v297 = vld [vmem:[%s248 + $0x7c] sm:$0xf]
      %v298 = vld [vmem:[%s2] sm:$0xf]
      %v299 = vld [vmem:[%s2 + $0x4] sm:$0xf]
      %v300 = vld [vmem:[%s2 + $0x8] sm:$0xf]
      %v301 = vld [vmem:[%s2 + $0xc] sm:$0xf]
      %v302 = vld [vmem:[%s2 + $0x10] sm:$0xf]
      %v303 = vld [vmem:[%s2 + $0x14] sm:$0xf]
      %v304 = vld [vmem:[%s3] sm:$0x1]
      %v306 = vlaneseq
      %v307 = vshrl.u32 %v306, 7
      %v308 = vsub.s32 0, %v307
      %v309 = vrot.slane %v304, %v308
      %v343 = vunpack.c.l.b16 %v266
      %v344 = vunpack.c.l.b16 %v267
      %v345 = vunpack.c.l.b16 %v268
      %v346 = vunpack.c.l.b16 %v269
      %v347 = vunpack.c.l.b16 %v270
      %v348 = vunpack.c.l.b16 %v271
      %v349 = vunpack.c.l.b16 %v272
      %v350 = vunpack.c.l.b16 %v273
      %v351 = vunpack.c.l.b16 %v274
      %v352 = vunpack.c.l.b16 %v275
      %v353 = vunpack.c.l.b16 %v276
      %v354 = vunpack.c.l.b16 %v277
      %v355 = vunpack.c.l.b16 %v278
      %v356 = vunpack.c.l.b16 %v279
      %v357 = vunpack.c.l.b16 %v280
      %v358 = vunpack.c.l.b16 %v281
      %v359 = vunpack.c.l.b16 %v282
      %v360 = vunpack.c.l.b16 %v283
      %v361 = vunpack.c.l.b16 %v284
      %v362 = vunpack.c.l.b16 %v285
      %v363 = vunpack.c.l.b16 %v286
      %v364 = vunpack.c.l.b16 %v287
      %v365 = vunpack.c.l.b16 %v288
      %v366 = vunpack.c.l.b16 %v289
      %v367 = vunpack.c.l.b16 %v290
      %v368 = vunpack.c.l.b16 %v291
      %v369 = vunpack.c.l.b16 %v292
      %v370 = vunpack.c.l.b16 %v293
      %v371 = vunpack.c.l.b16 %v294
      %v372 = vunpack.c.l.b16 %v295
      %v373 = vunpack.c.l.b16 %v296
      %v374 = vunpack.c.l.b16 %v297
      %v375 = vpack.c.b16 %v344, %v343
      %v376 = vpack.c.b16 %v346, %v345
      %v377 = vpack.c.b16 %v348, %v347
      %v378 = vpack.c.b16 %v350, %v349
      %v379 = vpack.c.b16 %v352, %v351
      %v380 = vpack.c.b16 %v354, %v353
      %v381 = vpack.c.b16 %v356, %v355
      %v382 = vpack.c.b16 %v358, %v357
      %v383 = vpack.c.b16 %v360, %v359
      %v384 = vpack.c.b16 %v362, %v361
      %v385 = vpack.c.b16 %v364, %v363
      %v386 = vpack.c.b16 %v366, %v365
      %v387 = vpack.c.b16 %v368, %v367
      %v388 = vpack.c.b16 %v370, %v369
      %v389 = vpack.c.b16 %v372, %v371
      %v390 = vpack.c.b16 %v374, %v373
      %v397 = vunpack.c.l.b16 %v298
      %v398 = vunpack.c.l.b16 %v299
      %v399 = vunpack.c.l.b16 %v300
      %v400 = vunpack.c.l.b16 %v301
      %v401 = vunpack.c.l.b16 %v302
      %v402 = vunpack.c.l.b16 %v303
      %v403 = vpack.c.b16 %v398, %v397
      %v404 = vpack.c.b16 %v400, %v399
      %v405 = vpack.c.b16 %v402, %v401
      %vm409 = vcmask 392192
      %v411 = vsel %vm409, %v375, 0
      %v414 = vsel %vm409, %v376, 0
      %v417 = vsel %vm409, %v377, 0
      %v420 = vsel %vm409, %v378, 0
      %v423 = vsel %vm409, %v379, 0
      %v426 = vsel %vm409, %v380, 0
      %v429 = vsel %vm409, %v381, 0
      %v432 = vsel %vm409, %v382, 0
      %v435 = vsel %vm409, %v383, 0
      %v438 = vsel %vm409, %v384, 0
      %v441 = vsel %vm409, %v385, 0
      %v444 = vsel %vm409, %v386, 0
      %v447 = vsel %vm409, %v387, 0
      %v450 = vsel %vm409, %v388, 0
      %v453 = vsel %vm409, %v389, 0
      %v456 = vsel %vm409, %v390, 0
      %458 = vmatprep.subr.bf16.mxu0 0
      %459 = vmatpush1.bf16.msra.mxu0 %v403
      %460 = vmatprep.subr.bf16.mxu0 0
      %461 = vmatpush1.bf16.msra.mxu0 %v404
      %462 = vmatprep.subr.bf16.mxu0 0
      %463 = vmatpush1.bf16.msra.mxu0 %v405
      %464 = vmatprep.subr.bf16.mxu0 0
      %465 = vmatpush1.bf16.msra.mxu0 0
      %466 = vmatprep.subr.bf16.mxu0 0
      %467 = vmatpush1.bf16.msra.mxu0 0
      %468 = vmatprep.subr.bf16.mxu0 0
      %469 = vmatpush1.bf16.msra.mxu0 0
      %470 = vmatprep.subr.bf16.mxu0 0
      %471 = vmatpush1.bf16.msra.mxu0 0
      %472 = vmatprep.subr.bf16.mxu0 0
      %473 = vmatpush1.bf16.msra.mxu0 0
      %474 = vmatprep.subr.bf16.mxu0 0
      %475 = vmatpush1.bf16.msra.mxu0 0
      %476 = vmatprep.subr.bf16.mxu0 0
      %477 = vmatpush1.bf16.msra.mxu0 0
      %478 = vmatprep.subr.bf16.mxu0 0
      %479 = vmatpush1.bf16.msra.mxu0 0
      %480 = vmatprep.subr.bf16.mxu0 0
      %481 = vmatpush1.bf16.msra.mxu0 0
      %482 = vmatprep.subr.bf16.mxu0 0
      %483 = vmatpush1.bf16.msra.mxu0 0
      %484 = vmatprep.subr.bf16.mxu0 0
      %485 = vmatpush1.bf16.msra.mxu0 0
      %486 = vmatprep.subr.bf16.mxu0 0
      %487 = vmatpush1.bf16.msra.mxu0 0
      %488 = vmatprep.subr.bf16.mxu0 0
      %489 = vmatpush1.bf16.msra.mxu0 0
      %490 = vmatprep.mubr.bf16.mxu0 0
      %491 = vmatmul.mubr.bf16.gmra.mrb[0].mxu0 %v411
      %v492 = vpop.f32.mrb[0].mxu0
      %v493 = vadd.f32 %v309, %v492
      %v494 = vpop.f32.mrb[0].mxu0
      %v495 = vpop.f32.mrb[0].mxu0
      %v496 = vadd.f32 %v309, %v495
      %v497 = vpop.f32.mrb[0].mxu0
      %498 = vmatprep.mubr.bf16.mxu0 0
      %499 = vmatmul.mubr.bf16.gmra.mrb[0].mxu0 %v414
      %v500 = vpop.f32.mrb[0].mxu0
      %v501 = vadd.f32 %v309, %v500
      %v502 = vpop.f32.mrb[0].mxu0
      %v503 = vpop.f32.mrb[0].mxu0
      %v504 = vadd.f32 %v309, %v503
      %v505 = vpop.f32.mrb[0].mxu0
      %506 = vmatprep.mubr.bf16.mxu0 0
      %507 = vmatmul.mubr.bf16.gmra.mrb[0].mxu0 %v417
      %v508 = vpop.f32.mrb[0].mxu0
      %v509 = vadd.f32 %v309, %v508
      %v510 = vpop.f32.mrb[0].mxu0
      %v511 = vpop.f32.mrb[0].mxu0
      %v512 = vadd.f32 %v309, %v511
      %v513 = vpop.f32.mrb[0].mxu0
      %514 = vmatprep.mubr.bf16.mxu0 0
      %515 = vmatmul.mubr.bf16.gmra.mrb[0].mxu0 %v420
      %v516 = vpop.f32.mrb[0].mxu0
      %v517 = vadd.f32 %v309, %v516
      %v518 = vpop.f32.mrb[0].mxu0
      %v519 = vpop.f32.mrb[0].mxu0
      %v520 = vadd.f32 %v309, %v519
      %v521 = vpop.f32.mrb[0].mxu0
      %522 = vmatprep.mubr.bf16.mxu0 0
      %523 = vmatmul.mubr.bf16.gmra.mrb[0].mxu0 %v423
      %v524 = vpop.f32.mrb[0].mxu0
      %v525 = vadd.f32 %v309, %v524
      %v526 = vpop.f32.mrb[0].mxu0
      %v527 = vpop.f32.mrb[0].mxu0
      %v528 = vadd.f32 %v309, %v527
      %v529 = vpop.f32.mrb[0].mxu0
      %530 = vmatprep.mubr.bf16.mxu0 0
      %531 = vmatmul.mubr.bf16.gmra.mrb[0].mxu0 %v426
      %v532 = vpop.f32.mrb[0].mxu0
      %v533 = vadd.f32 %v309, %v532
      %v534 = vpop.f32.mrb[0].mxu0
      %v535 = vpop.f32.mrb[0].mxu0
      %v536 = vadd.f32 %v309, %v535
      %v537 = vpop.f32.mrb[0].mxu0
      %538 = vmatprep.mubr.bf16.mxu0 0
      %539 = vmatmul.mubr.bf16.gmra.mrb[0].mxu0 %v429
      %v540 = vpop.f32.mrb[0].mxu0
      %v541 = vadd.f32 %v309, %v540
      %v542 = vpop.f32.mrb[0].mxu0
      %v543 = vpop.f32.mrb[0].mxu0
      %v544 = vadd.f32 %v309, %v543
      %v545 = vpop.f32.mrb[0].mxu0
      %546 = vmatprep.mubr.bf16.mxu0 0
      %547 = vmatmul.mubr.bf16.gmra.mrb[0].mxu0 %v432
      %v548 = vpop.f32.mrb[0].mxu0
      %v549 = vadd.f32 %v309, %v548
      %v550 = vpop.f32.mrb[0].mxu0
      %v551 = vpop.f32.mrb[0].mxu0
      %v552 = vadd.f32 %v309, %v551
      %v553 = vpop.f32.mrb[0].mxu0
      %554 = vmatprep.mubr.bf16.mxu0 0
      %555 = vmatmul.mubr.bf16.gmra.mrb[0].mxu0 %v435
      %v556 = vpop.f32.mrb[0].mxu0
      %v557 = vadd.f32 %v309, %v556
      %v558 = vpop.f32.mrb[0].mxu0
      %v559 = vpop.f32.mrb[0].mxu0
      %v560 = vadd.f32 %v309, %v559
      %v561 = vpop.f32.mrb[0].mxu0
      %562 = vmatprep.mubr.bf16.mxu0 0
      %563 = vmatmul.mubr.bf16.gmra.mrb[0].mxu0 %v438
      %v564 = vpop.f32.mrb[0].mxu0
      %v565 = vadd.f32 %v309, %v564
      %v566 = vpop.f32.mrb[0].mxu0
      %v567 = vpop.f32.mrb[0].mxu0
      %v568 = vadd.f32 %v309, %v567
      %v569 = vpop.f32.mrb[0].mxu0
      %570 = vmatprep.mubr.bf16.mxu0 0
      %571 = vmatmul.mubr.bf16.gmra.mrb[0].mxu0 %v441
      %v572 = vpop.f32.mrb[0].mxu0
      %v573 = vadd.f32 %v309, %v572
      %v574 = vpop.f32.mrb[0].mxu0
      %v575 = vpop.f32.mrb[0].mxu0
      %v576 = vadd.f32 %v309, %v575
      %v577 = vpop.f32.mrb[0].mxu0
      %578 = vmatprep.mubr.bf16.mxu0 0
      %579 = vmatmul.mubr.bf16.gmra.mrb[0].mxu0 %v444
      %v580 = vpop.f32.mrb[0].mxu0
      %v581 = vadd.f32 %v309, %v580
      %v582 = vpop.f32.mrb[0].mxu0
      %v583 = vpop.f32.mrb[0].mxu0
      %v584 = vadd.f32 %v309, %v583
      %v585 = vpop.f32.mrb[0].mxu0
      %586 = vmatprep.mubr.bf16.mxu0 0
      %587 = vmatmul.mubr.bf16.gmra.mrb[0].mxu0 %v447
      %v588 = vpop.f32.mrb[0].mxu0
      %v589 = vadd.f32 %v309, %v588
      %v590 = vpop.f32.mrb[0].mxu0
      %v591 = vpop.f32.mrb[0].mxu0
      %v592 = vadd.f32 %v309, %v591
      %v593 = vpop.f32.mrb[0].mxu0
      %594 = vmatprep.mubr.bf16.mxu0 0
      %595 = vmatmul.mubr.bf16.gmra.mrb[0].mxu0 %v450
      %v596 = vpop.f32.mrb[0].mxu0
      %v597 = vadd.f32 %v309, %v596
      %v598 = vpop.f32.mrb[0].mxu0
      %v599 = vpop.f32.mrb[0].mxu0
      %v600 = vadd.f32 %v309, %v599
      %v601 = vpop.f32.mrb[0].mxu0
      %602 = vmatprep.mubr.bf16.mxu0 0
      %603 = vmatmul.mubr.bf16.gmra.mrb[0].mxu0 %v453
      %v604 = vpop.f32.mrb[0].mxu0
      %v605 = vadd.f32 %v309, %v604
      %v606 = vpop.f32.mrb[0].mxu0
      %v607 = vpop.f32.mrb[0].mxu0
      %v608 = vadd.f32 %v309, %v607
      %v609 = vpop.f32.mrb[0].mxu0
      %610 = vmatprep.mubr.bf16.mxu0 0
      %611 = vmatmul.mubr.bf16.gmra.mrb[0].mxu0 %v456
      %v612 = vpop.f32.mrb[0].mxu0
      %v613 = vadd.f32 %v309, %v612
      %v614 = vpop.f32.mrb[0].mxu0
      %v615 = vpop.f32.mrb[0].mxu0
      %v616 = vadd.f32 %v309, %v615
      %v617 = vpop.f32.mrb[0].mxu0
      %618 = vdwg.mxu0
      %vm619 = vcmp.ge.f32.partialorder %v493, 0.0
      %vm620 = vcmp.ge.f32.partialorder %v496, 0.0
      %vm621 = vcmp.ge.f32.partialorder %v501, 0.0
      %vm622 = vcmp.ge.f32.partialorder %v504, 0.0
      %vm623 = vcmp.ge.f32.partialorder %v509, 0.0
      %vm624 = vcmp.ge.f32.partialorder %v512, 0.0
      %vm625 = vcmp.ge.f32.partialorder %v517, 0.0
      %vm626 = vcmp.ge.f32.partialorder %v520, 0.0
      %vm627 = vcmp.ge.f32.partialorder %v525, 0.0
      %vm628 = vcmp.ge.f32.partialorder %v528, 0.0
      %vm629 = vcmp.ge.f32.partialorder %v533, 0.0
      %vm630 = vcmp.ge.f32.partialorder %v536, 0.0
      %vm631 = vcmp.ge.f32.partialorder %v541, 0.0
      %vm632 = vcmp.ge.f32.partialorder %v544, 0.0
      %vm633 = vcmp.ge.f32.partialorder %v549, 0.0
      %vm634 = vcmp.ge.f32.partialorder %v552, 0.0
      %vm635 = vcmp.ge.f32.partialorder %v557, 0.0
      %vm636 = vcmp.ge.f32.partialorder %v560, 0.0
      %vm637 = vcmp.ge.f32.partialorder %v565, 0.0
      %vm638 = vcmp.ge.f32.partialorder %v568, 0.0
      %vm639 = vcmp.ge.f32.partialorder %v573, 0.0
      %vm640 = vcmp.ge.f32.partialorder %v576, 0.0
      %vm641 = vcmp.ge.f32.partialorder %v581, 0.0
      %vm642 = vcmp.ge.f32.partialorder %v584, 0.0
      %vm643 = vcmp.ge.f32.partialorder %v589, 0.0
      %vm644 = vcmp.ge.f32.partialorder %v592, 0.0
      %vm645 = vcmp.ge.f32.partialorder %v597, 0.0
      %vm646 = vcmp.ge.f32.partialorder %v600, 0.0
      %vm647 = vcmp.ge.f32.partialorder %v605, 0.0
      %vm648 = vcmp.ge.f32.partialorder %v608, 0.0
      %vm649 = vcmp.ge.f32.partialorder %v613, 0.0
      %vm650 = vcmp.ge.f32.partialorder %v616, 0.0
      %v651 = vmul.f32 %v493, 0.2
      %v652 = vmul.f32 %v496, 0.2
      %v653 = vmul.f32 %v501, 0.2
      %v654 = vmul.f32 %v504, 0.2
      %v655 = vmul.f32 %v509, 0.2
      %v656 = vmul.f32 %v512, 0.2
      %v657 = vmul.f32 %v517, 0.2
      %v658 = vmul.f32 %v520, 0.2
      %v659 = vmul.f32 %v525, 0.2
      %v660 = vmul.f32 %v528, 0.2
      %v661 = vmul.f32 %v533, 0.2
      %v662 = vmul.f32 %v536, 0.2
      %v663 = vmul.f32 %v541, 0.2
      %v664 = vmul.f32 %v544, 0.2
      %v665 = vmul.f32 %v549, 0.2
      %v666 = vmul.f32 %v552, 0.2
      %v667 = vmul.f32 %v557, 0.2
      %v668 = vmul.f32 %v560, 0.2
      %v669 = vmul.f32 %v565, 0.2
      %v670 = vmul.f32 %v568, 0.2
      %v671 = vmul.f32 %v573, 0.2
      %v672 = vmul.f32 %v576, 0.2
      %v673 = vmul.f32 %v581, 0.2
      %v674 = vmul.f32 %v584, 0.2
      %v675 = vmul.f32 %v589, 0.2
      %v676 = vmul.f32 %v592, 0.2
      %v677 = vmul.f32 %v597, 0.2
      %v678 = vmul.f32 %v600, 0.2
      %v679 = vmul.f32 %v605, 0.2
      %v680 = vmul.f32 %v608, 0.2
      %v681 = vmul.f32 %v613, 0.2
      %v682 = vmul.f32 %v616, 0.2
      %v683 = vsel %vm619, %v493, %v651
      %v684 = vsel %vm620, %v496, %v652
      %v685 = vsel %vm621, %v501, %v653
      %v686 = vsel %vm622, %v504, %v654
      %v687 = vsel %vm623, %v509, %v655
      %v688 = vsel %vm624, %v512, %v656
      %v689 = vsel %vm625, %v517, %v657
      %v690 = vsel %vm626, %v520, %v658
      %v691 = vsel %vm627, %v525, %v659
      %v692 = vsel %vm628, %v528, %v660
      %v693 = vsel %vm629, %v533, %v661
      %v694 = vsel %vm630, %v536, %v662
      %v695 = vsel %vm631, %v541, %v663
      %v696 = vsel %vm632, %v544, %v664
      %v697 = vsel %vm633, %v549, %v665
      %v698 = vsel %vm634, %v552, %v666
      %v699 = vsel %vm635, %v557, %v667
      %v700 = vsel %vm636, %v560, %v668
      %v701 = vsel %vm637, %v565, %v669
      %v702 = vsel %vm638, %v568, %v670
      %v703 = vsel %vm639, %v573, %v671
      %v704 = vsel %vm640, %v576, %v672
      %v705 = vsel %vm641, %v581, %v673
      %v706 = vsel %vm642, %v584, %v674
      %v707 = vsel %vm643, %v589, %v675
      %v708 = vsel %vm644, %v592, %v676
      %v709 = vsel %vm645, %v597, %v677
      %v710 = vsel %vm646, %v600, %v678
      %v711 = vsel %vm647, %v605, %v679
      %v712 = vsel %vm648, %v608, %v680
      %v713 = vsel %vm649, %v613, %v681
      %v714 = vsel %vm650, %v616, %v682
      %v715 = vpack.c.bf16 %v684, %v683
      %v716 = vpack.c.bf16 %v686, %v685
      %v717 = vpack.c.bf16 %v688, %v687
      %v718 = vpack.c.bf16 %v690, %v689
      %v719 = vpack.c.bf16 %v692, %v691
      %v720 = vpack.c.bf16 %v694, %v693
      %v721 = vpack.c.bf16 %v696, %v695
      %v722 = vpack.c.bf16 %v698, %v697
      %v723 = vpack.c.bf16 %v700, %v699
      %v724 = vpack.c.bf16 %v702, %v701
      %v725 = vpack.c.bf16 %v704, %v703
      %v726 = vpack.c.bf16 %v706, %v705
      %v727 = vpack.c.bf16 %v708, %v707
      %v728 = vpack.c.bf16 %v710, %v709
      %v729 = vpack.c.bf16 %v712, %v711
      %v730 = vpack.c.bf16 %v714, %v713
      %v747 = vunpack.c.l.b16 %v715
      %v748 = vunpack.c.h.b16 %v715
      %v749 = vunpack.c.l.b16 %v716
      %v750 = vunpack.c.h.b16 %v716
      %v751 = vunpack.c.l.b16 %v717
      %v752 = vunpack.c.h.b16 %v717
      %v753 = vunpack.c.l.b16 %v718
      %v754 = vunpack.c.h.b16 %v718
      %v755 = vunpack.c.l.b16 %v719
      %v756 = vunpack.c.h.b16 %v719
      %v757 = vunpack.c.l.b16 %v720
      %v758 = vunpack.c.h.b16 %v720
      %v759 = vunpack.c.l.b16 %v721
      %v760 = vunpack.c.h.b16 %v721
      %v761 = vunpack.c.l.b16 %v722
      %v762 = vunpack.c.h.b16 %v722
      %v763 = vunpack.c.l.b16 %v723
      %v764 = vunpack.c.h.b16 %v723
      %v765 = vunpack.c.l.b16 %v724
      %v766 = vunpack.c.h.b16 %v724
      %v767 = vunpack.c.l.b16 %v725
      %v768 = vunpack.c.h.b16 %v725
      %v769 = vunpack.c.l.b16 %v726
      %v770 = vunpack.c.h.b16 %v726
      %v771 = vunpack.c.l.b16 %v727
      %v772 = vunpack.c.h.b16 %v727
      %v773 = vunpack.c.l.b16 %v728
      %v774 = vunpack.c.h.b16 %v728
      %v775 = vunpack.c.l.b16 %v729
      %v776 = vunpack.c.h.b16 %v729
      %v777 = vunpack.c.l.b16 %v730
      %v778 = vunpack.c.h.b16 %v730
      %v779 = vpack.c.b16 %v747, %v747
      %v780 = vpack.c.b16 %v748, %v748
      %v781 = vpack.c.b16 %v749, %v749
      %v782 = vpack.c.b16 %v750, %v750
      %v783 = vpack.c.b16 %v751, %v751
      %v784 = vpack.c.b16 %v752, %v752
      %v785 = vpack.c.b16 %v753, %v753
      %v786 = vpack.c.b16 %v754, %v754
      %v787 = vpack.c.b16 %v755, %v755
      %v788 = vpack.c.b16 %v756, %v756
      %v789 = vpack.c.b16 %v757, %v757
      %v790 = vpack.c.b16 %v758, %v758
      %v791 = vpack.c.b16 %v759, %v759
      %v792 = vpack.c.b16 %v760, %v760
      %v793 = vpack.c.b16 %v761, %v761
      %v794 = vpack.c.b16 %v762, %v762
      %v795 = vpack.c.b16 %v763, %v763
      %v796 = vpack.c.b16 %v764, %v764
      %v797 = vpack.c.b16 %v765, %v765
      %v798 = vpack.c.b16 %v766, %v766
      %v799 = vpack.c.b16 %v767, %v767
      %v800 = vpack.c.b16 %v768, %v768
      %v801 = vpack.c.b16 %v769, %v769
      %v802 = vpack.c.b16 %v770, %v770
      %v803 = vpack.c.b16 %v771, %v771
      %v804 = vpack.c.b16 %v772, %v772
      %v805 = vpack.c.b16 %v773, %v773
      %v806 = vpack.c.b16 %v774, %v774
      %v807 = vpack.c.b16 %v775, %v775
      %v808 = vpack.c.b16 %v776, %v776
      %v809 = vpack.c.b16 %v777, %v777
      %v810 = vpack.c.b16 %v778, %v778
      %vm843 = vcmask 519168
      %844 = vst.msk [vmem:[%s263] sm:$0xf] %vm843, %v779
      %845 = vst.msk [vmem:[%s263 + $0x4] sm:$0xf] %vm843, %v780
      %846 = vst.msk [vmem:[%s263 + $0x8] sm:$0xf] %vm843, %v781
      %847 = vst.msk [vmem:[%s263 + $0xc] sm:$0xf] %vm843, %v782
      %848 = vst.msk [vmem:[%s263 + $0x10] sm:$0xf] %vm843, %v783
      %849 = vst.msk [vmem:[%s263 + $0x14] sm:$0xf] %vm843, %v784
      %850 = vst.msk [vmem:[%s263 + $0x18] sm:$0xf] %vm843, %v785
      %851 = vst.msk [vmem:[%s263 + $0x1c] sm:$0xf] %vm843, %v786
      %852 = vst.msk [vmem:[%s263 + $0x20] sm:$0xf] %vm843, %v787
      %853 = vst.msk [vmem:[%s263 + $0x24] sm:$0xf] %vm843, %v788
      %854 = vst.msk [vmem:[%s263 + $0x28] sm:$0xf] %vm843, %v789
      %855 = vst.msk [vmem:[%s263 + $0x2c] sm:$0xf] %vm843, %v790
      %856 = vst.msk [vmem:[%s263 + $0x30] sm:$0xf] %vm843, %v791
      %857 = vst.msk [vmem:[%s263 + $0x34] sm:$0xf] %vm843, %v792
      %858 = vst.msk [vmem:[%s263 + $0x38] sm:$0xf] %vm843, %v793
      %859 = vst.msk [vmem:[%s263 + $0x3c] sm:$0xf] %vm843, %v794
      %860 = vst.msk [vmem:[%s263 + $0x40] sm:$0xf] %vm843, %v795
      %861 = vst.msk [vmem:[%s263 + $0x44] sm:$0xf] %vm843, %v796
      %862 = vst.msk [vmem:[%s263 + $0x48] sm:$0xf] %vm843, %v797
      %863 = vst.msk [vmem:[%s263 + $0x4c] sm:$0xf] %vm843, %v798
      %864 = vst.msk [vmem:[%s263 + $0x50] sm:$0xf] %vm843, %v799
      %865 = vst.msk [vmem:[%s263 + $0x54] sm:$0xf] %vm843, %v800
      %866 = vst.msk [vmem:[%s263 + $0x58] sm:$0xf] %vm843, %v801
      %867 = vst.msk [vmem:[%s263 + $0x5c] sm:$0xf] %vm843, %v802
      %868 = vst.msk [vmem:[%s263 + $0x60] sm:$0xf] %vm843, %v803
      %869 = vst.msk [vmem:[%s263 + $0x64] sm:$0xf] %vm843, %v804
      %870 = vst.msk [vmem:[%s263 + $0x68] sm:$0xf] %vm843, %v805
      %871 = vst.msk [vmem:[%s263 + $0x6c] sm:$0xf] %vm843, %v806
      %872 = vst.msk [vmem:[%s263 + $0x70] sm:$0xf] %vm843, %v807
      %873 = vst.msk [vmem:[%s263 + $0x74] sm:$0xf] %vm843, %v808
      %874 = vst.msk [vmem:[%s263 + $0x78] sm:$0xf] %vm843, %v809
      %875 = vst.msk [vmem:[%s263 + $0x7c] sm:$0xf] %vm843, %v810
      %v876 = vld [vmem:[%s253] sm:$0x1]
      %v878 = vlaneseq
      %v879 = vshrl.u32 %v878, 7
      %v880 = vsub.s32 0, %v879
      %v881 = vrot.slane %v876, %v880
      %v883 = vpack.c.bf16 %v881, %v881
      %v885 = vunpack.c.l.b16 %v883
      %v886 = vpack.c.b16 %v885, %v885
      %887 = vrot.lane.b32.xlu0 %v886, 64
      %v888 = vpop.permute.xlu0 %887
      %vm890 = vcmask 1043968
      %891 = vst.msk [vmem:[%s263] sm:$0xf] %vm890, %v888
      %892 = vst.msk [vmem:[%s263 + $0x4] sm:$0xf] %vm890, %v888
      %893 = vst.msk [vmem:[%s263 + $0x8] sm:$0xf] %vm890, %v888
      %894 = vst.msk [vmem:[%s263 + $0xc] sm:$0xf] %vm890, %v888
      %895 = vst.msk [vmem:[%s263 + $0x10] sm:$0xf] %vm890, %v888
      %896 = vst.msk [vmem:[%s263 + $0x14] sm:$0xf] %vm890, %v888
      %897 = vst.msk [vmem:[%s263 + $0x18] sm:$0xf] %vm890, %v888
      %898 = vst.msk [vmem:[%s263 + $0x1c] sm:$0xf] %vm890, %v888
      %899 = vst.msk [vmem:[%s263 + $0x20] sm:$0xf] %vm890, %v888
      %900 = vst.msk [vmem:[%s263 + $0x24] sm:$0xf] %vm890, %v888
      %901 = vst.msk [vmem:[%s263 + $0x28] sm:$0xf] %vm890, %v888
      %902 = vst.msk [vmem:[%s263 + $0x2c] sm:$0xf] %vm890, %v888
      %903 = vst.msk [vmem:[%s263 + $0x30] sm:$0xf] %vm890, %v888
      %904 = vst.msk [vmem:[%s263 + $0x34] sm:$0xf] %vm890, %v888
      %905 = vst.msk [vmem:[%s263 + $0x38] sm:$0xf] %vm890, %v888
      %906 = vst.msk [vmem:[%s263 + $0x3c] sm:$0xf] %vm890, %v888
      %907 = vst.msk [vmem:[%s263 + $0x40] sm:$0xf] %vm890, %v888
      %908 = vst.msk [vmem:[%s263 + $0x44] sm:$0xf] %vm890, %v888
      %909 = vst.msk [vmem:[%s263 + $0x48] sm:$0xf] %vm890, %v888
      %910 = vst.msk [vmem:[%s263 + $0x4c] sm:$0xf] %vm890, %v888
      %911 = vst.msk [vmem:[%s263 + $0x50] sm:$0xf] %vm890, %v888
      %912 = vst.msk [vmem:[%s263 + $0x54] sm:$0xf] %vm890, %v888
      %913 = vst.msk [vmem:[%s263 + $0x58] sm:$0xf] %vm890, %v888
      %914 = vst.msk [vmem:[%s263 + $0x5c] sm:$0xf] %vm890, %v888
      %915 = vst.msk [vmem:[%s263 + $0x60] sm:$0xf] %vm890, %v888
      %916 = vst.msk [vmem:[%s263 + $0x64] sm:$0xf] %vm890, %v888
      %917 = vst.msk [vmem:[%s263 + $0x68] sm:$0xf] %vm890, %v888
      %918 = vst.msk [vmem:[%s263 + $0x6c] sm:$0xf] %vm890, %v888
      %919 = vst.msk [vmem:[%s263 + $0x70] sm:$0xf] %vm890, %v888
      %920 = vst.msk [vmem:[%s263 + $0x74] sm:$0xf] %vm890, %v888
      %921 = vst.msk [vmem:[%s263 + $0x78] sm:$0xf] %vm890, %v888
      %922 = vst.msk [vmem:[%s263 + $0x7c] sm:$0xf] %vm890, %v888
      %s923 = smul.u32 32, %s27
      %p924 = scmp.lt.s32.totalorder %s26, 1
      %s925 = scalar_select %p924, %s26, 1
      %p926 = scmp.lt.s32.totalorder %s923, 31
      %s927 = scalar_select %p926, %s923, 31
      %s928 = smul.addr %s925, 32
      %s929 = sadd.s32 %s927, %s928
      %s930 = smul.addr %s929, 4
      %s931 = scalar_lea.vmem %s5, %s930
      // Predicated region
      $region37: #{conditional_discriminator_forward.5} parent=35 // pred_check
        %p932 = pneg %p152
      $region38: #{conditional_discriminator_forward.5} parent=35 // pred_check_branch
        %934 = sbr.rel (%p932) target = $region40
      $region39: #{conditional_discriminator_forward.5} parent=35 // pred_region
        %s935 = smul.u32 32, %s27
      $region40: #{conditional_discriminator_forward.5} parent=35 // pred_fallthru
        _
    $region36: #{conditional_discriminator_forward.5} parent=5 // pred_fallthru
      _
    %p936 = scmp.le.s32.totalorder 2, %s17
    // Predicated region
    $region41: #{conditional_discriminator_forward.5} parent=5 // pred_check
      %p937 = pneg %p936
    $region42: #{conditional_discriminator_forward.5} parent=5 // pred_check_branch
      %939 = sbr.rel (%p937) target = $region44
    $region43: #{conditional_discriminator_forward.5} parent=5 // pred_region
      %s940 = ssub.s32 %s17, 2
      // Predicated region
      $region45: #{conditional_discriminator_forward.5} parent=43 // pred_check
        %p941 = pneg %p158
      $region46: #{conditional_discriminator_forward.5} parent=43 // pred_check_branch
        %943 = sbr.rel (%p941) target = $region48
      $region47: #{conditional_discriminator_forward.5} parent=43 // pred_region
        %s944 = smul.u32 32, %s29
        %p945 = scmp.lt.s32.totalorder %s28, 1
        %s946 = scalar_select %p945, %s28, 1
        %p947 = scmp.lt.s32.totalorder %s944, 31
        %s948 = scalar_select %p947, %s944, 31
        %s949 = smul.addr %s946, 32
        %s950 = sadd.s32 %s948, %s949
        %s951 = smul.addr %s950, 4
        %s952 = scalar_lea.vmem %s5, %s951
      $region48: #{conditional_discriminator_forward.5} parent=43 // pred_fallthru
        _
    $region44: #{conditional_discriminator_forward.5} parent=5 // pred_fallthru
      _
  $region6: #{conditional_discriminator_forward.5} parent=0 // loop_footer
    %s21 = sadd.s32 1, %s17
  $region7: #{conditional_discriminator_forward.5} parent=0 // loop_footer_branch
    %16 = sbr.rel target = $region3
  $region8: #{conditional_discriminator_forward.5} parent=0 // loop_exit
    _

// kernel: conditional_discriminator_forward.7
$region0: #{conditional_discriminator_forward.7}
  #allocation0 [shape = 'u32[]', space=smem, size = 0x4, offset = 0x4, fixed_abs, tag = 'smem constant byte address 0x4 - core index']
  #allocation1 [shape = 'u32[144,128]{1,0:T(1,128)}', space=vmem, size = 0x12000, scoped, tag = 'internal scratch']
  %s0 = inlined_call_operand.vmem [shape: f32[128,128], index: 0, kind: input, shape index: {}]
  %s1 = inlined_call_operand.vmem [shape: f32[2,1,128], index: 1, kind: input, shape index: {}]
  %s2 = inlined_call_operand.vmem [shape: f32[2,1,128], index: 2, kind: input, shape index: {}]
  %s3 = inlined_call_operand.vmem [shape: f32[1,128], index: 3, kind: input, shape index: {}]
  %s4 = inlined_call_operand.vmem [shape: f32[1,128], index: 4, kind: input, shape index: {}]
  %s5 = inlined_call_operand.vmem [shape: bf16[128,128], index: 5, kind: output, shape index: {}]
  %s6 = sld [smem:[#allocation0]]
  $region53: #{conditional_discriminator_forward.7} parent=0
    _
  %s8 = ssub.s32 1, %s6
  %s9 = scalar_select 0, %s8, %s6
  loop: start=0, step=1, limit=4
  $region2: #{conditional_discriminator_forward.7} parent=0 // loop_pre_header
    _
  $region3: #{conditional_discriminator_forward.7} parent=0 // loop_header
    %s11 = sphi 0, %s15
    %p12 = scmp.ge.s32.totalorder %s11, 4
    %s21 = sphi 0, %s23
    %s24 = sphi 0, %s21
    %s25 = sphi 0, %s24
    %s41 = sphi 0, %s25
    %s45 = sphi 0, %s45
    %s47 = sphi 0, %s45
    %s48 = sphi 0, %s47
    %s62 = sphi 0, %s48
    %s66 = sphi 0, %s66
    %s68 = sphi 0, %s66
    %s69 = sphi 0, %s68
    %s83 = sphi 0, %s69
    %s87 = sphi 0, %s87
    %s89 = sphi 0, %s87
    %s90 = sphi 0, %s89
    %s104 = sphi 0, %s90
    %s108 = sphi 0, %s108
    %s110 = sphi 0, %s108
    %s111 = sphi 0, %s110
    %s125 = sphi 0, %s111
    %s131 = sphi 0, %s133
    %s134 = sphi 0, %s131
    %s135 = sphi 0, %s134
    %s151 = sphi 0, %s135
  $region4: #{conditional_discriminator_forward.7} parent=0 // loop_header_branch
    %14 = sbr.rel (%p12) target = $region8
  $region5: #{conditional_discriminator_forward.7} parent=0 // loop_body
    %s16 = ssub.s32 %s11, 1
    %s17 = ssub.s32 %s11, 2
    %s18 = sadd.s32 %s11, 1
    %s19 = ssub.s32 %s11, %s18
    %p20 = scmp.eq.s32.totalorder %s19, 0
    %s22 = sadd.s32 %s21, 1
    %s23 = scalar_select %p20, %s21, %s22
    %p26 = pneg %p20
    %p27 = scmp.eq.s32.totalorder %s11, 1
    %p28 = por %p26, %p27
    %p29 = scmp.ne.s32.totalorder %s21, %s24
    %p30 = scmp.eq.s32.totalorder %s11, 0
    %p31 = por %p29, %p30
    %p32 = scmp.ne.s32.totalorder %s21, %s24
    %p33 = scmp.eq.s32.totalorder %s16, 1
    %p34 = por %p32, %p33
    %p35 = scmp.ne.s32.totalorder %s24, %s25
    %p36 = scmp.eq.s32.totalorder %s16, 0
    %p37 = por %p35, %p36
    %p38 = scmp.ne.s32.totalorder %s24, %s25
    %p39 = scmp.eq.s32.totalorder %s17, 1
    %p40 = por %p38, %p39
    %p42 = scmp.ne.s32.totalorder %s25, %s41
    %p43 = scmp.eq.s32.totalorder %s17, 0
    %p44 = por %p42, %p43
    %s46 = sadd.s32 %s45, 1
    %p49 = scmp.eq.s32.totalorder %s11, 1
    %p50 = scmp.ne.s32.totalorder %s45, %s47
    %p51 = scmp.eq.s32.totalorder %s11, 0
    %p52 = por %p50, %p51
    %p53 = scmp.ne.s32.totalorder %s45, %s47
    %p54 = scmp.eq.s32.totalorder %s16, 1
    %p55 = por %p53, %p54
    %p56 = scmp.ne.s32.totalorder %s47, %s48
    %p57 = scmp.eq.s32.totalorder %s16, 0
    %p58 = por %p56, %p57
    %p59 = scmp.ne.s32.totalorder %s47, %s48
    %p60 = scmp.eq.s32.totalorder %s17, 1
    %p61 = por %p59, %p60
    %p63 = scmp.ne.s32.totalorder %s48, %s62
    %p64 = scmp.eq.s32.totalorder %s17, 0
    %p65 = por %p63, %p64
    %s67 = sadd.s32 %s66, 1
    %p70 = scmp.eq.s32.totalorder %s11, 1
    %p71 = scmp.ne.s32.totalorder %s66, %s68
    %p72 = scmp.eq.s32.totalorder %s11, 0
    %p73 = por %p71, %p72
    %p74 = scmp.ne.s32.totalorder %s66, %s68
    %p75 = scmp.eq.s32.totalorder %s16, 1
    %p76 = por %p74, %p75
    %p77 = scmp.ne.s32.totalorder %s68, %s69
    %p78 = scmp.eq.s32.totalorder %s16, 0
    %p79 = por %p77, %p78
    %p80 = scmp.ne.s32.totalorder %s68, %s69
    %p81 = scmp.eq.s32.totalorder %s17, 1
    %p82 = por %p80, %p81
    %p84 = scmp.ne.s32.totalorder %s69, %s83
    %p85 = scmp.eq.s32.totalorder %s17, 0
    %p86 = por %p84, %p85
    %s88 = sadd.s32 %s87, 1
    %p91 = scmp.eq.s32.totalorder %s11, 1
    %p92 = scmp.ne.s32.totalorder %s87, %s89
    %p93 = scmp.eq.s32.totalorder %s11, 0
    %p94 = por %p92, %p93
    %p95 = scmp.ne.s32.totalorder %s87, %s89
    %p96 = scmp.eq.s32.totalorder %s16, 1
    %p97 = por %p95, %p96
    %p98 = scmp.ne.s32.totalorder %s89, %s90
    %p99 = scmp.eq.s32.totalorder %s16, 0
    %p100 = por %p98, %p99
    %p101 = scmp.ne.s32.totalorder %s89, %s90
    %p102 = scmp.eq.s32.totalorder %s17, 1
    %p103 = por %p101, %p102
    %p105 = scmp.ne.s32.totalorder %s90, %s104
    %p106 = scmp.eq.s32.totalorder %s17, 0
    %p107 = por %p105, %p106
    %s109 = sadd.s32 %s108, 1
    %p112 = scmp.eq.s32.totalorder %s11, 1
    %p113 = scmp.ne.s32.totalorder %s108, %s110
    %p114 = scmp.eq.s32.totalorder %s11, 0
    %p115 = por %p113, %p114
    %p116 = scmp.ne.s32.totalorder %s108, %s110
    %p117 = scmp.eq.s32.totalorder %s16, 1
    %p118 = por %p116, %p117
    %p119 = scmp.ne.s32.totalorder %s110, %s111
    %p120 = scmp.eq.s32.totalorder %s16, 0
    %p121 = por %p119, %p120
    %p122 = scmp.ne.s32.totalorder %s110, %s111
    %p123 = scmp.eq.s32.totalorder %s17, 1
    %p124 = por %p122, %p123
    %p126 = scmp.ne.s32.totalorder %s111, %s125
    %p127 = scmp.eq.s32.totalorder %s17, 0
    %p128 = por %p126, %p127
    %s129 = ssub.s32 %s11, %s18
    %p130 = scmp.eq.s32.totalorder %s129, 0
    %s132 = sadd.s32 %s131, 1
    %s133 = scalar_select %p130, %s131, %s132
    %p136 = pneg %p130
    %p137 = scmp.eq.s32.totalorder %s11, 1
    %p138 = por %p136, %p137
    %p139 = scmp.ne.s32.totalorder %s131, %s134
    %p140 = scmp.eq.s32.totalorder %s11, 0
    %p141 = por %p139, %p140
    %p142 = scmp.ne.s32.totalorder %s131, %s134
    %p143 = scmp.eq.s32.totalorder %s16, 1
    %p144 = por %p142, %p143
    %p145 = scmp.ne.s32.totalorder %s134, %s135
    %p146 = scmp.eq.s32.totalorder %s16, 0
    %p147 = por %p145, %p146
    %p148 = scmp.ne.s32.totalorder %s134, %s135
    %p149 = scmp.eq.s32.totalorder %s17, 1
    %p150 = por %p148, %p149
    %p152 = scmp.ne.s32.totalorder %s135, %s151
    %p153 = scmp.eq.s32.totalorder %s17, 0
    %p154 = por %p152, %p153
    %p155 = scmp.le.s32.totalorder 1, %s11
    %p156 = scmp.lt.s32.totalorder %s11, 3
    %p157 = pnand %p155, %p156
    %p158 = pneg %p157
    // Predicated region
    $region9: #{conditional_discriminator_forward.7} parent=5 // pred_check
      _
    $region10: #{conditional_discriminator_forward.7} parent=5 // pred_check_branch
      %160 = sbr.rel (%p157) target = $region12
    $region11: #{conditional_discriminator_forward.7} parent=5 // pred_region
      %s161 = ssub.s32 %s11, 1
      // Predicated region
      $region13: #{conditional_discriminator_forward.7} parent=11 // pred_check
        %p162 = pneg %p58
      $region14: #{conditional_discriminator_forward.7} parent=11 // pred_check_branch
        %164 = sbr.rel (%p162) target = $region16
      $region15: #{conditional_discriminator_forward.7} parent=11 // pred_region
        _
      $region16: #{conditional_discriminator_forward.7} parent=11 // pred_fallthru
        _
      // Predicated region
      $region17: #{conditional_discriminator_forward.7} parent=11 // pred_check
        %p165 = pneg %p79
      $region18: #{conditional_discriminator_forward.7} parent=11 // pred_check_branch
        %167 = sbr.rel (%p165) target = $region20
      $region19: #{conditional_discriminator_forward.7} parent=11 // pred_region
        _
      $region20: #{conditional_discriminator_forward.7} parent=11 // pred_fallthru
        _
      // Predicated region
      $region21: #{conditional_discriminator_forward.7} parent=11 // pred_check
        %p168 = pneg %p100
      $region22: #{conditional_discriminator_forward.7} parent=11 // pred_check_branch
        %170 = sbr.rel (%p168) target = $region24
      $region23: #{conditional_discriminator_forward.7} parent=11 // pred_region
        _
      $region24: #{conditional_discriminator_forward.7} parent=11 // pred_fallthru
        _
      // Predicated region
      $region25: #{conditional_discriminator_forward.7} parent=11 // pred_check
        %p171 = pneg %p121
      $region26: #{conditional_discriminator_forward.7} parent=11 // pred_check_branch
        %173 = sbr.rel (%p171) target = $region28
      $region27: #{conditional_discriminator_forward.7} parent=11 // pred_region
        _
      $region28: #{conditional_discriminator_forward.7} parent=11 // pred_fallthru
        _
    $region12: #{conditional_discriminator_forward.7} parent=5 // pred_fallthru
      _
    %p174 = scmp.lt.s32.totalorder %s11, 2
    // Predicated region
    $region29: #{conditional_discriminator_forward.7} parent=5 // pred_check
      %p175 = pneg %p174
    $region30: #{conditional_discriminator_forward.7} parent=5 // pred_check_branch
      %177 = sbr.rel (%p175) target = $region32
    $region31: #{conditional_discriminator_forward.7} parent=5 // pred_region
      // Predicated region
      $region33: #{conditional_discriminator_forward.7} parent=31 // pred_check
        %p178 = pneg %p31
      $region34: #{conditional_discriminator_forward.7} parent=31 // pred_check_branch
        %180 = sbr.rel (%p178) target = $region36
      $region35: #{conditional_discriminator_forward.7} parent=31 // pred_region
        %s181 = smul.u32 8, %s11
        %p182 = scmp.lt.s32.totalorder %s181, 15
        %s183 = scalar_select %p182, %s181, 15
        %s184 = smul.addr %s183, 8
        %s185 = scalar_lea.vmem %s0, %s184
        %s186 = smul.u32 8, %s11
      $region36: #{conditional_discriminator_forward.7} parent=31 // pred_fallthru
        _
    $region32: #{conditional_discriminator_forward.7} parent=5 // pred_fallthru
      _
    %p187 = scmp.le.s32.totalorder 1, %s11
    %p188 = scmp.lt.s32.totalorder %s11, 3
    %p189 = pnand %p187, %p188
    %p190 = pneg %p189
    // Predicated region
    $region37: #{conditional_discriminator_forward.7} parent=5 // pred_check
      _
    $region38: #{conditional_discriminator_forward.7} parent=5 // pred_check_branch
      %192 = sbr.rel (%p189) target = $region40
    $region39: #{conditional_discriminator_forward.7} parent=5 // pred_region
      %s193 = ssub.s32 %s11, 1
      %s194 = smul.u32 8, %s16
      %p195 = scmp.lt.s32.totalorder %s194, 15
      %s196 = scalar_select %p195, %s194, 15
      %s197 = smul.addr %s196, 8
      %s198 = scalar_lea.vmem %s0, %s197
      %p199 = pneg %p37
      %p200 = pneg %p34
      %p201 = pneg %p58
      %p202 = pneg %p55
      %p203 = pneg %p79
      %p204 = pneg %p76
      %p205 = pneg %p100
      %p206 = pneg %p97
      %p207 = pneg %p121
      %p208 = pneg %p118
      %p209 = pneg %p147
      %p210 = pneg %p144
      %s211 = smul.u32 8, %s16
      %p212 = scmp.lt.s32.totalorder %s211, 15
      %s213 = scalar_select %p212, %s211, 15
      %s214 = smul.addr %s213, 4
      %s215 = scalar_lea.vmem %s5, %s214
      %s216 = smul.u32 8, %s16
      %p217 = scmp.lt.s32.totalorder %s216, 15
      %s218 = scalar_select %p217, %s216, 15
      %s219 = smul.addr %s218, 8
      %s220 = scalar_lea.vmem %s0, %s219
      %s221 = smul.u32 8, %s16
      %s222 = smul.u32 8, %s16
      %p223 = scmp.lt.s32.totalorder %s222, 15
      %s224 = scalar_select %p223, %s222, 15
      %s225 = smul.addr %s224, 4
      %s226 = scalar_lea.vmem %s5, %s225
      %s227 = smul.u32 8, %s16
      %v228 = vld [vmem:[%s1] sm:$0x1]
      %v229 = vld [vmem:[%s1 + $0x1] sm:$0x1]
      %vm230 = vcmask 1040384
      %v231 = vsel %vm230, %v228, 0.0
      %v232 = vsel %vm230, %v229, 0.0
      %v233 = vadd.f32 %v231, %v232
      %v234 = vmul.f32 %v233, 0.0078125
      %v235 = vld [vmem:[%s2] sm:$0x1]
      %v236 = vld [vmem:[%s2 + $0x1] sm:$0x1]
      %v237 = vsel %vm230, %v235, 0.0
      %v238 = vsel %vm230, %v236, 0.0
      %v239 = vadd.f32 %v237, %v238
      %v240 = vmul.f32 %v239, 0.0078125
      %v241 = vmul.f32 %v234, %v234
      %v242 = vsub.f32 %v240, %v241
      %v243 = vld [vmem:[%s3] sm:$0x1]
      %v244 = vadd.f32 %v242, 1e-05
      %v245 = vrsqrt.pop %v244
      %v246 = vmul.f32 %v243, %v245
      %v247 = vld [vmem:[%s4] sm:$0x1]
      %v248 = vmul.f32 %v234, %v246
      %v249 = vsub.f32 %v247, %v248
      %v250 = vld [vmem:[%s220] sm:$0xff]
      %v251 = vld [vmem:[%s220 + $0x8] sm:$0xff]
      %v252 = vld [vmem:[%s220 + $0x10] sm:$0xff]
      %v253 = vld [vmem:[%s220 + $0x18] sm:$0xff]
      %v254 = vld [vmem:[%s220 + $0x20] sm:$0xff]
      %v255 = vld [vmem:[%s220 + $0x28] sm:$0xff]
      %v256 = vld [vmem:[%s220 + $0x30] sm:$0xff]
      %v257 = vld [vmem:[%s220 + $0x38] sm:$0xff]
      %v259 = vlaneseq
      %v260 = vshrl.u32 %v259, 7
      %v261 = vsub.s32 0, %v260
      %v262 = vrot.slane %v246, %v261
      %v264 = vmul.f32 %v250, %v262
      %v265 = vmul.f32 %v251, %v262
      %v266 = vmul.f32 %v252, %v262
      %v267 = vmul.f32 %v253, %v262
      %v268 = vmul.f32 %v254, %v262
      %v269 = vmul.f32 %v255, %v262
      %v270 = vmul.f32 %v256, %v262
      %v271 = vmul.f32 %v257, %v262
      %v273 = vlaneseq
      %v274 = vshrl.u32 %v273, 7
      %v275 = vsub.s32 0, %v274
      %v276 = vrot.slane %v249, %v275
      %v278 = vadd.f32 %v264, %v276
      %v279 = vadd.f32 %v265, %v276
      %v280 = vadd.f32 %v266, %v276
      %v281 = vadd.f32 %v267, %v276
      %v282 = vadd.f32 %v268, %v276
      %v283 = vadd.f32 %v269, %v276
      %v284 = vadd.f32 %v270, %v276
      %v285 = vadd.f32 %v271, %v276
      %vm286 = vcmp.ge.f32.partialorder %v278, 0.0
      %vm287 = vcmp.ge.f32.partialorder %v279, 0.0
      %vm288 = vcmp.ge.f32.partialorder %v280, 0.0
      %vm289 = vcmp.ge.f32.partialorder %v281, 0.0
      %vm290 = vcmp.ge.f32.partialorder %v282, 0.0
      %vm291 = vcmp.ge.f32.partialorder %v283, 0.0
      %vm292 = vcmp.ge.f32.partialorder %v284, 0.0
      %vm293 = vcmp.ge.f32.partialorder %v285, 0.0
      %v294 = vmul.f32 %v278, 0.2
      %v295 = vmul.f32 %v279, 0.2
      %v296 = vmul.f32 %v280, 0.2
      %v297 = vmul.f32 %v281, 0.2
      %v298 = vmul.f32 %v282, 0.2
      %v299 = vmul.f32 %v283, 0.2
      %v300 = vmul.f32 %v284, 0.2
      %v301 = vmul.f32 %v285, 0.2
      %v302 = vsel %vm286, %v278, %v294
      %v303 = vsel %vm287, %v279, %v295
      %v304 = vsel %vm288, %v280, %v296
      %v305 = vsel %vm289, %v281, %v297
      %v306 = vsel %vm290, %v282, %v298
      %v307 = vsel %vm291, %v283, %v299
      %v308 = vsel %vm292, %v284, %v300
      %v309 = vsel %vm293, %v285, %v301
      %v310 = vpack.c.bf16 %v303, %v302
      %v311 = vpack.c.bf16 %v305, %v304
      %v312 = vpack.c.bf16 %v307, %v306
      %v313 = vpack.c.bf16 %v309, %v308
      %v318 = vunpack.c.l.b16 %v310
      %v319 = vunpack.c.h.b16 %v310
      %v320 = vunpack.c.l.b16 %v311
      %v321 = vunpack.c.h.b16 %v311
      %v322 = vunpack.c.l.b16 %v312
      %v323 = vunpack.c.h.b16 %v312
      %v324 = vunpack.c.l.b16 %v313
      %v325 = vunpack.c.h.b16 %v313
      %v326 = vpack.c.b16 %v318, %v318
      %v327 = vpack.c.b16 %v319, %v319
      %v328 = vpack.c.b16 %v320, %v320
      %v329 = vpack.c.b16 %v321, %v321
      %v330 = vpack.c.b16 %v322, %v322
      %v331 = vpack.c.b16 %v323, %v323
      %v332 = vpack.c.b16 %v324, %v324
      %v333 = vpack.c.b16 %v325, %v325
      %342 = vst [vmem:[%s226] sm:$0xf] %v326
      %343 = vst [vmem:[%s226 + $0x4] sm:$0xf] %v327
      %344 = vst [vmem:[%s226 + $0x8] sm:$0xf] %v328
      %345 = vst [vmem:[%s226 + $0xc] sm:$0xf] %v329
      %346 = vst [vmem:[%s226 + $0x10] sm:$0xf] %v330
      %347 = vst [vmem:[%s226 + $0x14] sm:$0xf] %v331
      %348 = vst [vmem:[%s226 + $0x18] sm:$0xf] %v332
      %349 = vst [vmem:[%s226 + $0x1c] sm:$0xf] %v333
      %s350 = smul.u32 8, %s16
      %p351 = scmp.lt.s32.totalorder %s350, 15
      %s352 = scalar_select %p351, %s350, 15
      %s353 = smul.addr %s352, 4
      %s354 = scalar_lea.vmem %s5, %s353
      // Predicated region
      $region41: #{conditional_discriminator_forward.7} parent=39 // pred_check
        %p355 = pneg %p144
      $region42: #{conditional_discriminator_forward.7} parent=39 // pred_check_branch
        %357 = sbr.rel (%p355) target = $region44
      $region43: #{conditional_discriminator_forward.7} parent=39 // pred_region
        %s358 = smul.u32 8, %s16
      $region44: #{conditional_discriminator_forward.7} parent=39 // pred_fallthru
        _
    $region40: #{conditional_discriminator_forward.7} parent=5 // pred_fallthru
      _
    %p359 = scmp.le.s32.totalorder 2, %s11
    // Predicated region
    $region45: #{conditional_discriminator_forward.7} parent=5 // pred_check
      %p360 = pneg %p359
    $region46: #{conditional_discriminator_forward.7} parent=5 // pred_check_branch
      %362 = sbr.rel (%p360) target = $region48
    $region47: #{conditional_discriminator_forward.7} parent=5 // pred_region
      %s363 = ssub.s32 %s11, 2
      // Predicated region
      $region49: #{conditional_discriminator_forward.7} parent=47 // pred_check
        %p364 = pneg %p150
      $region50: #{conditional_discriminator_forward.7} parent=47 // pred_check_branch
        %366 = sbr.rel (%p364) target = $region52
      $region51: #{conditional_discriminator_forward.7} parent=47 // pred_region
        %s367 = smul.u32 8, %s17
        %p368 = scmp.lt.s32.totalorder %s367, 15
        %s369 = scalar_select %p368, %s367, 15
        %s370 = smul.addr %s369, 4
        %s371 = scalar_lea.vmem %s5, %s370
      $region52: #{conditional_discriminator_forward.7} parent=47 // pred_fallthru
        _
    $region48: #{conditional_discriminator_forward.7} parent=5 // pred_fallthru
      _
  $region6: #{conditional_discriminator_forward.7} parent=0 // loop_footer
    %s15 = sadd.s32 1, %s11
  $region7: #{conditional_discriminator_forward.7} parent=0 // loop_footer_branch
    %10 = sbr.rel target = $region3
  $region8: #{conditional_discriminator_forward.7} parent=0 // loop_exit
    _

// kernel: conditional_discriminator_forward.6
$region0: #{conditional_discriminator_forward.6}
  #allocation0 [shape = 'u32[]', space=smem, size = 0x4, offset = 0x4, fixed_abs, tag = 'smem constant byte address 0x4 - core index']
  #allocation1 [shape = 'u32[144,128]{1,0:T(1,128)}', space=vmem, size = 0x12000, scoped, tag = 'internal scratch']
  %s0 = inlined_call_operand.vmem [shape: bf16[128,2048], index: 0, kind: input, shape index: {}]
  %s1 = inlined_call_operand.vmem [shape: bf16[2048,128], index: 1, kind: input, shape index: {}]
  %s2 = inlined_call_operand.vmem [shape: f32[128,128], index: 2, kind: output, shape index: {0}]
  %s3 = inlined_call_operand.vmem [shape: f32[2,1,128], index: 3, kind: output, shape index: {1}]
  %s4 = inlined_call_operand.vmem [shape: f32[2,1,128], index: 4, kind: output, shape index: {2}]
  %5 = xla_tuple %s2, %s3, %s4
  %s6 = sld [smem:[#allocation0]]
  $region57: #{conditional_discriminator_forward.6} parent=0
    _
  %s8 = ssub.s32 1, %s6
  %s9 = scalar_select 0, %s8, %s6
  loop: start=0, step=1, limit=4
  $region2: #{conditional_discriminator_forward.6} parent=0 // loop_pre_header
    _
  $region3: #{conditional_discriminator_forward.6} parent=0 // loop_header
    %s11 = sphi 0, %s15
    %p12 = scmp.ge.s32.totalorder %s11, 4
    %s21 = sphi 0, %s23
    %s24 = sphi 0, %s21
    %s25 = sphi 0, %s24
    %s41 = sphi 0, %s25
    %s45 = sphi 0, %s45
    %s47 = sphi 0, %s45
    %s48 = sphi 0, %s47
    %s62 = sphi 0, %s48
    %s68 = sphi 0, %s70
    %s71 = sphi 0, %s68
    %s72 = sphi 0, %s71
    %s88 = sphi 0, %s72
    %s94 = sphi 0, %s96
    %s97 = sphi 0, %s94
    %s98 = sphi 0, %s97
    %s114 = sphi 0, %s98
    %s120 = sphi 0, %s122
    %s123 = sphi 0, %s120
    %s124 = sphi 0, %s123
    %s140 = sphi 0, %s124
  $region4: #{conditional_discriminator_forward.6} parent=0 // loop_header_branch
    %14 = sbr.rel (%p12) target = $region8
  $region5: #{conditional_discriminator_forward.6} parent=0 // loop_body
    %s16 = ssub.s32 %s11, 1
    %s17 = ssub.s32 %s11, 2
    %s18 = sadd.s32 %s11, 1
    %s19 = ssub.s32 %s11, %s18
    %p20 = scmp.eq.s32.totalorder %s19, 0
    %s22 = sadd.s32 %s21, 1
    %s23 = scalar_select %p20, %s21, %s22
    %p26 = pneg %p20
    %p27 = scmp.eq.s32.totalorder %s11, 1
    %p28 = por %p26, %p27
    %p29 = scmp.ne.s32.totalorder %s21, %s24
    %p30 = scmp.eq.s32.totalorder %s11, 0
    %p31 = por %p29, %p30
    %p32 = scmp.ne.s32.totalorder %s21, %s24
    %p33 = scmp.eq.s32.totalorder %s16, 1
    %p34 = por %p32, %p33
    %p35 = scmp.ne.s32.totalorder %s24, %s25
    %p36 = scmp.eq.s32.totalorder %s16, 0
    %p37 = por %p35, %p36
    %p38 = scmp.ne.s32.totalorder %s24, %s25
    %p39 = scmp.eq.s32.totalorder %s17, 1
    %p40 = por %p38, %p39
    %p42 = scmp.ne.s32.totalorder %s25, %s41
    %p43 = scmp.eq.s32.totalorder %s17, 0
    %p44 = por %p42, %p43
    %s46 = sadd.s32 %s45, 1
    %p49 = scmp.eq.s32.totalorder %s11, 1
    %p50 = scmp.ne.s32.totalorder %s45, %s47
    %p51 = scmp.eq.s32.totalorder %s11, 0
    %p52 = por %p50, %p51
    %p53 = scmp.ne.s32.totalorder %s45, %s47
    %p54 = scmp.eq.s32.totalorder %s16, 1
    %p55 = por %p53, %p54
    %p56 = scmp.ne.s32.totalorder %s47, %s48
    %p57 = scmp.eq.s32.totalorder %s16, 0
    %p58 = por %p56, %p57
    %p59 = scmp.ne.s32.totalorder %s47, %s48
    %p60 = scmp.eq.s32.totalorder %s17, 1
    %p61 = por %p59, %p60
    %p63 = scmp.ne.s32.totalorder %s48, %s62
    %p64 = scmp.eq.s32.totalorder %s17, 0
    %p65 = por %p63, %p64
    %s66 = ssub.s32 %s11, %s18
    %p67 = scmp.eq.s32.totalorder %s66, 0
    %s69 = sadd.s32 %s68, 1
    %s70 = scalar_select %p67, %s68, %s69
    %p73 = pneg %p67
    %p74 = scmp.eq.s32.totalorder %s11, 1
    %p75 = por %p73, %p74
    %p76 = scmp.ne.s32.totalorder %s68, %s71
    %p77 = scmp.eq.s32.totalorder %s11, 0
    %p78 = por %p76, %p77
    %p79 = scmp.ne.s32.totalorder %s68, %s71
    %p80 = scmp.eq.s32.totalorder %s16, 1
    %p81 = por %p79, %p80
    %p82 = scmp.ne.s32.totalorder %s71, %s72
    %p83 = scmp.eq.s32.totalorder %s16, 0
    %p84 = por %p82, %p83
    %p85 = scmp.ne.s32.totalorder %s71, %s72
    %p86 = scmp.eq.s32.totalorder %s17, 1
    %p87 = por %p85, %p86
    %p89 = scmp.ne.s32.totalorder %s72, %s88
    %p90 = scmp.eq.s32.totalorder %s17, 0
    %p91 = por %p89, %p90
    %s92 = ssub.s32 %s11, %s18
    %p93 = scmp.eq.s32.totalorder %s92, 0
    %s95 = sadd.s32 %s94, 1
    %s96 = scalar_select %p93, %s94, %s95
    %p99 = pneg %p93
    %p100 = scmp.eq.s32.totalorder %s11, 1
    %p101 = por %p99, %p100
    %p102 = scmp.ne.s32.totalorder %s94, %s97
    %p103 = scmp.eq.s32.totalorder %s11, 0
    %p104 = por %p102, %p103
    %p105 = scmp.ne.s32.totalorder %s94, %s97
    %p106 = scmp.eq.s32.totalorder %s16, 1
    %p107 = por %p105, %p106
    %p108 = scmp.ne.s32.totalorder %s97, %s98
    %p109 = scmp.eq.s32.totalorder %s16, 0
    %p110 = por %p108, %p109
    %p111 = scmp.ne.s32.totalorder %s97, %s98
    %p112 = scmp.eq.s32.totalorder %s17, 1
    %p113 = por %p111, %p112
    %p115 = scmp.ne.s32.totalorder %s98, %s114
    %p116 = scmp.eq.s32.totalorder %s17, 0
    %p117 = por %p115, %p116
    %s118 = ssub.s32 %s11, %s18
    %p119 = scmp.eq.s32.totalorder %s118, 0
    %s121 = sadd.s32 %s120, 1
    %s122 = scalar_select %p119, %s120, %s121
    %p125 = pneg %p119
    %p126 = scmp.eq.s32.totalorder %s11, 1
    %p127 = por %p125, %p126
    %p128 = scmp.ne.s32.totalorder %s120, %s123
    %p129 = scmp.eq.s32.totalorder %s11, 0
    %p130 = por %p128, %p129
    %p131 = scmp.ne.s32.totalorder %s120, %s123
    %p132 = scmp.eq.s32.totalorder %s16, 1
    %p133 = por %p131, %p132
    %p134 = scmp.ne.s32.totalorder %s123, %s124
    %p135 = scmp.eq.s32.totalorder %s16, 0
    %p136 = por %p134, %p135
    %p137 = scmp.ne.s32.totalorder %s123, %s124
    %p138 = scmp.eq.s32.totalorder %s17, 1
    %p139 = por %p137, %p138
    %p141 = scmp.ne.s32.totalorder %s124, %s140
    %p142 = scmp.eq.s32.totalorder %s17, 0
    %p143 = por %p141, %p142
    %p144 = scmp.le.s32.totalorder 1, %s11
    %p145 = scmp.lt.s32.totalorder %s11, 3
    %p146 = pnand %p144, %p145
    %p147 = pneg %p146
    // Predicated region
    $region9: #{conditional_discriminator_forward.6} parent=5 // pred_check
      _
    $region10: #{conditional_discriminator_forward.6} parent=5 // pred_check_branch
      %149 = sbr.rel (%p146) target = $region12
    $region11: #{conditional_discriminator_forward.6} parent=5 // pred_region
      %s150 = ssub.s32 %s11, 1
      // Predicated region
      $region13: #{conditional_discriminator_forward.6} parent=11 // pred_check
        %p151 = pneg %p58
      $region14: #{conditional_discriminator_forward.6} parent=11 // pred_check_branch
        %153 = sbr.rel (%p151) target = $region16
      $region15: #{conditional_discriminator_forward.6} parent=11 // pred_region
        _
      $region16: #{conditional_discriminator_forward.6} parent=11 // pred_fallthru
        _
    $region12: #{conditional_discriminator_forward.6} parent=5 // pred_fallthru
      _
    %p154 = scmp.lt.s32.totalorder %s11, 2
    // Predicated region
    $region17: #{conditional_discriminator_forward.6} parent=5 // pred_check
      %p155 = pneg %p154
    $region18: #{conditional_discriminator_forward.6} parent=5 // pred_check_branch
      %157 = sbr.rel (%p155) target = $region20
    $region19: #{conditional_discriminator_forward.6} parent=5 // pred_region
      // Predicated region
      $region21: #{conditional_discriminator_forward.6} parent=19 // pred_check
        %p158 = pneg %p31
      $region22: #{conditional_discriminator_forward.6} parent=19 // pred_check_branch
        %160 = sbr.rel (%p158) target = $region24
      $region23: #{conditional_discriminator_forward.6} parent=19 // pred_region
        %s161 = smul.u32 8, %s11
        %p162 = scmp.lt.s32.totalorder %s161, 15
        %s163 = scalar_select %p162, %s161, 15
        %s164 = smul.addr %s163, 16
        %s165 = smul.addr %s164, 4
        %s166 = scalar_lea.vmem %s0, %s165
        %s167 = smul.u32 8, %s11
      $region24: #{conditional_discriminator_forward.6} parent=19 // pred_fallthru
        _
    $region20: #{conditional_discriminator_forward.6} parent=5 // pred_fallthru
      _
    %p168 = scmp.le.s32.totalorder 1, %s11
    %p169 = scmp.lt.s32.totalorder %s11, 3
    %p170 = pnand %p168, %p169
    %p171 = pneg %p170
    // Predicated region
    $region25: #{conditional_discriminator_forward.6} parent=5 // pred_check
      _
    $region26: #{conditional_discriminator_forward.6} parent=5 // pred_check_branch
      %173 = sbr.rel (%p170) target = $region28
    $region27: #{conditional_discriminator_forward.6} parent=5 // pred_region
      %s174 = ssub.s32 %s11, 1
      %s175 = smul.u32 8, %s16
      %p176 = scmp.lt.s32.totalorder %s175, 15
      %s177 = scalar_select %p176, %s175, 15
      %s178 = smul.addr %s177, 16
      %s179 = smul.addr %s178, 4
      %s180 = scalar_lea.vmem %s0, %s179
      %p181 = pneg %p37
      %p182 = pneg %p34
      %p183 = pneg %p58
      %p184 = pneg %p55
      %p185 = pneg %p84
      %p186 = pneg %p81
      %s187 = smul.u32 8, %s16
      %p188 = scmp.lt.s32.totalorder %s187, 15
      %s189 = scalar_select %p188, %s187, 15
      %s190 = smul.addr %s189, 8
      %s191 = scalar_lea.vmem %s2, %s190
      %p192 = pneg %p110
      %p193 = pneg %p107
      %p194 = scmp.lt.s32.totalorder %s16, 1
      %s195 = scalar_select %p194, %s16, 1
      %s196 = scalar_lea.vmem %s3, %s195
      %p197 = pneg %p136
      %p198 = pneg %p133
      %p199 = scmp.lt.s32.totalorder %s16, 1
      %s200 = scalar_select %p199, %s16, 1
      %s201 = scalar_lea.vmem %s4, %s200
      %s202 = smul.u32 8, %s16
      %p203 = scmp.lt.s32.totalorder %s202, 15
      %s204 = scalar_select %p203, %s202, 15
      %s205 = smul.addr %s204, 16
      %s206 = smul.addr %s205, 4
      %s207 = scalar_lea.vmem %s0, %s206
      %s208 = smul.u32 8, %s16
      %s209 = smul.u32 8, %s16
      %p210 = scmp.lt.s32.totalorder %s209, 15
      %s211 = scalar_select %p210, %s209, 15
      %s212 = smul.addr %s211, 8
      %s213 = scalar_lea.vmem %s2, %s212
      %s214 = smul.u32 8, %s16
      %p215 = scmp.lt.s32.totalorder %s16, 1
      %s216 = scalar_select %p215, %s16, 1
      %s217 = scalar_lea.vmem %s3, %s216
      %p218 = scmp.lt.s32.totalorder %s16, 1
      %s219 = scalar_select %p218, %s16, 1
      %s220 = scalar_lea.vmem %s4, %s219
      %v222 = vld [vmem:[%s207] sm:$0xff]
      %v223 = vld [vmem:[%s207 + $0x8] sm:$0xff]
      %v224 = vld [vmem:[%s207 + $0x10] sm:$0xff]
      %v225 = vld [vmem:[%s207 + $0x18] sm:$0xff]
      %v226 = vld [vmem:[%s207 + $0x20] sm:$0xff]
      %v227 = vld [vmem:[%s207 + $0x28] sm:$0xff]
      %v228 = vld [vmem:[%s207 + $0x30] sm:$0xff]
      %v229 = vld [vmem:[%s207 + $0x38] sm:$0xff]
      %v230 = vld [vmem:[%s207 + $0x40] sm:$0xff]
      %v231 = vld [vmem:[%s207 + $0x48] sm:$0xff]
      %v232 = vld [vmem:[%s207 + $0x50] sm:$0xff]
      %v233 = vld [vmem:[%s207 + $0x58] sm:$0xff]
      %v234 = vld [vmem:[%s207 + $0x60] sm:$0xff]
      %v235 = vld [vmem:[%s207 + $0x68] sm:$0xff]
      %v236 = vld [vmem:[%s207 + $0x70] sm:$0xff]
      %v237 = vld [vmem:[%s207 + $0x78] sm:$0xff]
      %v238 = vld [vmem:[%s207 + $0x80] sm:$0xff]
      %v239 = vld [vmem:[%s207 + $0x88] sm:$0xff]
      %v240 = vld [vmem:[%s207 + $0x90] sm:$0xff]
      %v241 = vld [vmem:[%s207 + $0x98] sm:$0xff]
      %v242 = vld [vmem:[%s207 + $0xa0] sm:$0xff]
      %v243 = vld [vmem:[%s207 + $0xa8] sm:$0xff]
      %v244 = vld [vmem:[%s207 + $0xb0] sm:$0xff]
      %v245 = vld [vmem:[%s207 + $0xb8] sm:$0xff]
      %v246 = vld [vmem:[%s207 + $0xc0] sm:$0xff]
      %v247 = vld [vmem:[%s207 + $0xc8] sm:$0xff]
      %v248 = vld [vmem:[%s207 + $0xd0] sm:$0xff]
      %v249 = vld [vmem:[%s207 + $0xd8] sm:$0xff]
      %v250 = vld [vmem:[%s207 + $0xe0] sm:$0xff]
      %v251 = vld [vmem:[%s207 + $0xe8] sm:$0xff]
      %v252 = vld [vmem:[%s207 + $0xf0] sm:$0xff]
      %v253 = vld [vmem:[%s207 + $0xf8] sm:$0xff]
      %v254 = vld [vmem:[%s207 + $0x100] sm:$0xff]
      %v255 = vld [vmem:[%s207 + $0x108] sm:$0xff]
      %v256 = vld [vmem:[%s207 + $0x110] sm:$0xff]
      %v257 = vld [vmem:[%s207 + $0x118] sm:$0xff]
      %v258 = vld [vmem:[%s207 + $0x120] sm:$0xff]
      %v259 = vld [vmem:[%s207 + $0x128] sm:$0xff]
      %v260 = vld [vmem:[%s207 + $0x130] sm:$0xff]
      %v261 = vld [vmem:[%s207 + $0x138] sm:$0xff]
      %v262 = vld [vmem:[%s207 + $0x140] sm:$0xff]
      %v263 = vld [vmem:[%s207 + $0x148] sm:$0xff]
      %v264 = vld [vmem:[%s207 + $0x150] sm:$0xff]
      %v265 = vld [vmem:[%s207 + $0x158] sm:$0xff]
      %v266 = vld [vmem:[%s207 + $0x160] sm:$0xff]
      %v267 = vld [vmem:[%s207 + $0x168] sm:$0xff]
      %v268 = vld [vmem:[%s207 + $0x170] sm:$0xff]
      %v269 = vld [vmem:[%s207 + $0x178] sm:$0xff]
      %v270 = vld [vmem:[%s207 + $0x180] sm:$0xff]
      %v271 = vld [vmem:[%s207 + $0x188] sm:$0xff]
      %v272 = vld [vmem:[%s207 + $0x190] sm:$0xff]
      %v273 = vld [vmem:[%s207 + $0x198] sm:$0xff]
      %v274 = vld [vmem:[%s207 + $0x1a0] sm:$0xff]
      %v275 = vld [vmem:[%s207 + $0x1a8] sm:$0xff]
      %v276 = vld [vmem:[%s207 + $0x1b0] sm:$0xff]
      %v277 = vld [vmem:[%s207 + $0x1b8] sm:$0xff]
      %v278 = vld [vmem:[%s207 + $0x1c0] sm:$0xff]
      %v279 = vld [vmem:[%s207 + $0x1c8] sm:$0xff]
      %v280 = vld [vmem:[%s207 + $0x1d0] sm:$0xff]
      %v281 = vld [vmem:[%s207 + $0x1d8] sm:$0xff]
      %v282 = vld [vmem:[%s207 + $0x1e0] sm:$0xff]
      %v283 = vld [vmem:[%s207 + $0x1e8] sm:$0xff]
      %v284 = vld [vmem:[%s207 + $0x1f0] sm:$0xff]
      %v285 = vld [vmem:[%s207 + $0x1f8] sm:$0xff]
      %v286 = vld [vmem:[%s1] sm:$0xf]
      %v287 = vld [vmem:[%s1 + $0x4] sm:$0xf]
      %v288 = vld [vmem:[%s1 + $0x8] sm:$0xf]
      %v289 = vld [vmem:[%s1 + $0xc] sm:$0xf]
      %v290 = vld [vmem:[%s1 + $0x10] sm:$0xf]
      %v291 = vld [vmem:[%s1 + $0x14] sm:$0xf]
      %v292 = vld [vmem:[%s1 + $0x18] sm:$0xf]
      %v293 = vld [vmem:[%s1 + $0x1c] sm:$0xf]
      %v294 = vld [vmem:[%s1 + $0x20] sm:$0xf]
      %v295 = vld [vmem:[%s1 + $0x24] sm:$0xf]
      %v296 = vld [vmem:[%s1 + $0x28] sm:$0xf]
      %v297 = vld [vmem:[%s1 + $0x2c] sm:$0xf]
      %v298 = vld [vmem:[%s1 + $0x30] sm:$0xf]
      %v299 = vld [vmem:[%s1 + $0x34] sm:$0xf]
      %v300 = vld [vmem:[%s1 + $0x38] sm:$0xf]
      %v301 = vld [vmem:[%s1 + $0x3c] sm:$0xf]
      %v302 = vld [vmem:[%s1 + $0x40] sm:$0xf]
      %v303 = vld [vmem:[%s1 + $0x44] sm:$0xf]
      %v304 = vld [vmem:[%s1 + $0x48] sm:$0xf]
      %v305 = vld [vmem:[%s1 + $0x4c] sm:$0xf]
      %v306 = vld [vmem:[%s1 + $0x50] sm:$0xf]
      %v307 = vld [vmem:[%s1 + $0x54] sm:$0xf]
      %v308 = vld [vmem:[%s1 + $0x58] sm:$0xf]
      %v309 = vld [vmem:[%s1 + $0x5c] sm:$0xf]
      %v310 = vld [vmem:[%s1 + $0x60] sm:$0xf]
      %v311 = vld [vmem:[%s1 + $0x64] sm:$0xf]
      %v312 = vld [vmem:[%s1 + $0x68] sm:$0xf]
      %v313 = vld [vmem:[%s1 + $0x6c] sm:$0xf]
      %v314 = vld [vmem:[%s1 + $0x70] sm:$0xf]
      %v315 = vld [vmem:[%s1 + $0x74] sm:$0xf]
      %v316 = vld [vmem:[%s1 + $0x78] sm:$0xf]
      %v317 = vld [vmem:[%s1 + $0x7c] sm:$0xf]
      %v318 = vld [vmem:[%s1 + $0x80] sm:$0xf]
      %v319 = vld [vmem:[%s1 + $0x84] sm:$0xf]
      %v320 = vld [vmem:[%s1 + $0x88] sm:$0xf]
      %v321 = vld [vmem:[%s1 + $0x8c] sm:$0xf]
      %v322 = vld [vmem:[%s1 + $0x90] sm:$0xf]
      %v323 = vld [vmem:[%s1 + $0x94] sm:$0xf]
      %v324 = vld [vmem:[%s1 + $0x98] sm:$0xf]
      %v325 = vld [vmem:[%s1 + $0x9c] sm:$0xf]
      %v326 = vld [vmem:[%s1 + $0xa0] sm:$0xf]
      %v327 = vld [vmem:[%s1 + $0xa4] sm:$0xf]
      %v328 = vld [vmem:[%s1 + $0xa8] sm:$0xf]
      %v329 = vld [vmem:[%s1 + $0xac] sm:$0xf]
      %v330 = vld [vmem:[%s1 + $0xb0] sm:$0xf]
      %v331 = vld [vmem:[%s1 + $0xb4] sm:$0xf]
      %v332 = vld [vmem:[%s1 + $0xb8] sm:$0xf]
      %v333 = vld [vmem:[%s1 + $0xbc] sm:$0xf]
      %v334 = vld [vmem:[%s1 + $0xc0] sm:$0xf]
      %v335 = vld [vmem:[%s1 + $0xc4] sm:$0xf]
      %v336 = vld [vmem:[%s1 + $0xc8] sm:$0xf]
      %v337 = vld [vmem:[%s1 + $0xcc] sm:$0xf]
      %v338 = vld [vmem:[%s1 + $0xd0] sm:$0xf]
      %v339 = vld [vmem:[%s1 + $0xd4] sm:$0xf]
      %v340 = vld [vmem:[%s1 + $0xd8] sm:$0xf]
      %v341 = vld [vmem:[%s1 + $0xdc] sm:$0xf]
      %v342 = vld [vmem:[%s1 + $0xe0] sm:$0xf]
      %v343 = vld [vmem:[%s1 + $0xe4] sm:$0xf]
      %v344 = vld [vmem:[%s1 + $0xe8] sm:$0xf]
      %v345 = vld [vmem:[%s1 + $0xec] sm:$0xf]
      %v346 = vld [vmem:[%s1 + $0xf0] sm:$0xf]
      %v347 = vld [vmem:[%s1 + $0xf4] sm:$0xf]
      %v348 = vld [vmem:[%s1 + $0xf8] sm:$0xf]
      %v349 = vld [vmem:[%s1 + $0xfc] sm:$0xf]
      %v350 = vld [vmem:[%s1 + $0x100] sm:$0xf]
      %v351 = vld [vmem:[%s1 + $0x104] sm:$0xf]
      %v352 = vld [vmem:[%s1 + $0x108] sm:$0xf]
      %v353 = vld [vmem:[%s1 + $0x10c] sm:$0xf]
      %v354 = vld [vmem:[%s1 + $0x110] sm:$0xf]
      %v355 = vld [vmem:[%s1 + $0x114] sm:$0xf]
      %v356 = vld [vmem:[%s1 + $0x118] sm:$0xf]
      %v357 = vld [vmem:[%s1 + $0x11c] sm:$0xf]
      %v358 = vld [vmem:[%s1 + $0x120] sm:$0xf]
      %v359 = vld [vmem:[%s1 + $0x124] sm:$0xf]
      %v360 = vld [vmem:[%s1 + $0x128] sm:$0xf]
      %v361 = vld [vmem:[%s1 + $0x12c] sm:$0xf]
      %v362 = vld [vmem:[%s1 + $0x130] sm:$0xf]
      %v363 = vld [vmem:[%s1 + $0x134] sm:$0xf]
      %v364 = vld [vmem:[%s1 + $0x138] sm:$0xf]
      %v365 = vld [vmem:[%s1 + $0x13c] sm:$0xf]
      %v366 = vld [vmem:[%s1 + $0x140] sm:$0xf]
      %v367 = vld [vmem:[%s1 + $0x144] sm:$0xf]
      %v368 = vld [vmem:[%s1 + $0x148] sm:$0xf]
      %v369 = vld [vmem:[%s1 + $0x14c] sm:$0xf]
      %v370 = vld [vmem:[%s1 + $0x150] sm:$0xf]
      %v371 = vld [vmem:[%s1 + $0x154] sm:$0xf]
      %v372 = vld [vmem:[%s1 + $0x158] sm:$0xf]
      %v373 = vld [vmem:[%s1 + $0x15c] sm:$0xf]
      %v374 = vld [vmem:[%s1 + $0x160] sm:$0xf]
      %v375 = vld [vmem:[%s1 + $0x164] sm:$0xf]
      %v376 = vld [vmem:[%s1 + $0x168] sm:$0xf]
      %v377 = vld [vmem:[%s1 + $0x16c] sm:$0xf]
      %v378 = vld [vmem:[%s1 + $0x170] sm:$0xf]
      %v379 = vld [vmem:[%s1 + $0x174] sm:$0xf]
      %v380 = vld [vmem:[%s1 + $0x178] sm:$0xf]
      %v381 = vld [vmem:[%s1 + $0x17c] sm:$0xf]
      %v382 = vld [vmem:[%s1 + $0x180] sm:$0xf]
      %v383 = vld [vmem:[%s1 + $0x184] sm:$0xf]
      %v384 = vld [vmem:[%s1 + $0x188] sm:$0xf]
      %v385 = vld [vmem:[%s1 + $0x18c] sm:$0xf]
      %v386 = vld [vmem:[%s1 + $0x190] sm:$0xf]
      %v387 = vld [vmem:[%s1 + $0x194] sm:$0xf]
      %v388 = vld [vmem:[%s1 + $0x198] sm:$0xf]
      %v389 = vld [vmem:[%s1 + $0x19c] sm:$0xf]
      %v390 = vld [vmem:[%s1 + $0x1a0] sm:$0xf]
      %v391 = vld [vmem:[%s1 + $0x1a4] sm:$0xf]
      %v392 = vld [vmem:[%s1 + $0x1a8] sm:$0xf]
      %v393 = vld [vmem:[%s1 + $0x1ac] sm:$0xf]
      %v394 = vld [vmem:[%s1 + $0x1b0] sm:$0xf]
      %v395 = vld [vmem:[%s1 + $0x1b4] sm:$0xf]
      %v396 = vld [vmem:[%s1 + $0x1b8] sm:$0xf]
      %v397 = vld [vmem:[%s1 + $0x1bc] sm:$0xf]
      %v398 = vld [vmem:[%s1 + $0x1c0] sm:$0xf]
      %v399 = vld [vmem:[%s1 + $0x1c4] sm:$0xf]
      %v400 = vld [vmem:[%s1 + $0x1c8] sm:$0xf]
      %v401 = vld [vmem:[%s1 + $0x1cc] sm:$0xf]
      %v402 = vld [vmem:[%s1 + $0x1d0] sm:$0xf]
      %v403 = vld [vmem:[%s1 + $0x1d4] sm:$0xf]
      %v404 = vld [vmem:[%s1 + $0x1d8] sm:$0xf]
      %v405 = vld [vmem:[%s1 + $0x1dc] sm:$0xf]
      %v406 = vld [vmem:[%s1 + $0x1e0] sm:$0xf]
      %v407 = vld [vmem:[%s1 + $0x1e4] sm:$0xf]
      %v408 = vld [vmem:[%s1 + $0x1e8] sm:$0xf]
      %v409 = vld [vmem:[%s1 + $0x1ec] sm:$0xf]
      %v410 = vld [vmem:[%s1 + $0x1f0] sm:$0xf]
      %v411 = vld [vmem:[%s1 + $0x1f4] sm:$0xf]
      %v412 = vld [vmem:[%s1 + $0x1f8] sm:$0xf]
      %v413 = vld [vmem:[%s1 + $0x1fc] sm:$0xf]
      %v414 = vld [vmem:[%s1 + $0x200] sm:$0xf]
      %v415 = vld [vmem:[%s1 + $0x204] sm:$0xf]
      %v416 = vld [vmem:[%s1 + $0x208] sm:$0xf]
      %v417 = vld [vmem:[%s1 + $0x20c] sm:$0xf]
      %v418 = vld [vmem:[%s1 + $0x210] sm:$0xf]
      %v419 = vld [vmem:[%s1 + $0x214] sm:$0xf]
      %v420 = vld [vmem:[%s1 + $0x218] sm:$0xf]
      %v421 = vld [vmem:[%s1 + $0x21c] sm:$0xf]
      %v422 = vld [vmem:[%s1 + $0x220] sm:$0xf]
      %v423 = vld [vmem:[%s1 + $0x224] sm:$0xf]
      %v424 = vld [vmem:[%s1 + $0x228] sm:$0xf]
      %v425 = vld [vmem:[%s1 + $0x22c] sm:$0xf]
      %v426 = vld [vmem:[%s1 + $0x230] sm:$0xf]
      %v427 = vld [vmem:[%s1 + $0x234] sm:$0xf]
      %v428 = vld [vmem:[%s1 + $0x238] sm:$0xf]
      %v429 = vld [vmem:[%s1 + $0x23c] sm:$0xf]
      %v430 = vld [vmem:[%s1 + $0x240] sm:$0xf]
      %v431 = vld [vmem:[%s1 + $0x244] sm:$0xf]
      %v432 = vld [vmem:[%s1 + $0x248] sm:$0xf]
      %v433 = vld [vmem:[%s1 + $0x24c] sm:$0xf]
      %v434 = vld [vmem:[%s1 + $0x250] sm:$0xf]
      %v435 = vld [vmem:[%s1 + $0x254] sm:$0xf]
      %v436 = vld [vmem:[%s1 + $0x258] sm:$0xf]
      %v437 = vld [vmem:[%s1 + $0x25c] sm:$0xf]
      %v438 = vld [vmem:[%s1 + $0x260] sm:$0xf]
      %v439 = vld [vmem:[%s1 + $0x264] sm:$0xf]
      %v440 = vld [vmem:[%s1 + $0x268] sm:$0xf]
      %v441 = vld [vmem:[%s1 + $0x26c] sm:$0xf]
      %v442 = vld [vmem:[%s1 + $0x270] sm:$0xf]
      %v443 = vld [vmem:[%s1 + $0x274] sm:$0xf]
      %v444 = vld [vmem:[%s1 + $0x278] sm:$0xf]
      %v445 = vld [vmem:[%s1 + $0x27c] sm:$0xf]
      %v446 = vld [vmem:[%s1 + $0x280] sm:$0xf]
      %v447 = vld [vmem:[%s1 + $0x284] sm:$0xf]
      %v448 = vld [vmem:[%s1 + $0x288] sm:$0xf]
      %v449 = vld [vmem:[%s1 + $0x28c] sm:$0xf]
      %v450 = vld [vmem:[%s1 + $0x290] sm:$0xf]
      %v451 = vld [vmem:[%s1 + $0x294] sm:$0xf]
      %v452 = vld [vmem:[%s1 + $0x298] sm:$0xf]
      %v453 = vld [vmem:[%s1 + $0x29c] sm:$0xf]
      %v454 = vld [vmem:[%s1 + $0x2a0] sm:$0xf]
      %v455 = vld [vmem:[%s1 + $0x2a4] sm:$0xf]
      %v456 = vld [vmem:[%s1 + $0x2a8] sm:$0xf]
      %v457 = vld [vmem:[%s1 + $0x2ac] sm:$0xf]
      %v458 = vld [vmem:[%s1 + $0x2b0] sm:$0xf]
      %v459 = vld [vmem:[%s1 + $0x2b4] sm:$0xf]
      %v460 = vld [vmem:[%s1 + $0x2b8] sm:$0xf]
      %v461 = vld [vmem:[%s1 + $0x2bc] sm:$0xf]
      %v462 = vld [vmem:[%s1 + $0x2c0] sm:$0xf]
      %v463 = vld [vmem:[%s1 + $0x2c4] sm:$0xf]
      %v464 = vld [vmem:[%s1 + $0x2c8] sm:$0xf]
      %v465 = vld [vmem:[%s1 + $0x2cc] sm:$0xf]
      %v466 = vld [vmem:[%s1 + $0x2d0] sm:$0xf]
      %v467 = vld [vmem:[%s1 + $0x2d4] sm:$0xf]
      %v468 = vld [vmem:[%s1 + $0x2d8] sm:$0xf]
      %v469 = vld [vmem:[%s1 + $0x2dc] sm:$0xf]
      %v470 = vld [vmem:[%s1 + $0x2e0] sm:$0xf]
      %v471 = vld [vmem:[%s1 + $0x2e4] sm:$0xf]
      %v472 = vld [vmem:[%s1 + $0x2e8] sm:$0xf]
      %v473 = vld [vmem:[%s1 + $0x2ec] sm:$0xf]
      %v474 = vld [vmem:[%s1 + $0x2f0] sm:$0xf]
      %v475 = vld [vmem:[%s1 + $0x2f4] sm:$0xf]
      %v476 = vld [vmem:[%s1 + $0x2f8] sm:$0xf]
      %v477 = vld [vmem:[%s1 + $0x2fc] sm:$0xf]
      %v478 = vld [vmem:[%s1 + $0x300] sm:$0xf]
      %v479 = vld [vmem:[%s1 + $0x304] sm:$0xf]
      %v480 = vld [vmem:[%s1 + $0x308] sm:$0xf]
      %v481 = vld [vmem:[%s1 + $0x30c] sm:$0xf]
      %v482 = vld [vmem:[%s1 + $0x310] sm:$0xf]
      %v483 = vld [vmem:[%s1 + $0x314] sm:$0xf]
      %v484 = vld [vmem:[%s1 + $0x318] sm:$0xf]
      %v485 = vld [vmem:[%s1 + $0x31c] sm:$0xf]
      %v486 = vld [vmem:[%s1 + $0x320] sm:$0xf]
      %v487 = vld [vmem:[%s1 + $0x324] sm:$0xf]
      %v488 = vld [vmem:[%s1 + $0x328] sm:$0xf]
      %v489 = vld [vmem:[%s1 + $0x32c] sm:$0xf]
      %v490 = vld [vmem:[%s1 + $0x330] sm:$0xf]
      %v491 = vld [vmem:[%s1 + $0x334] sm:$0xf]
      %v492 = vld [vmem:[%s1 + $0x338] sm:$0xf]
      %v493 = vld [vmem:[%s1 + $0x33c] sm:$0xf]
      %v494 = vld [vmem:[%s1 + $0x340] sm:$0xf]
      %v495 = vld [vmem:[%s1 + $0x344] sm:$0xf]
      %v496 = vld [vmem:[%s1 + $0x348] sm:$0xf]
      %v497 = vld [vmem:[%s1 + $0x34c] sm:$0xf]
      %v498 = vld [vmem:[%s1 + $0x350] sm:$0xf]
      %v499 = vld [vmem:[%s1 + $0x354] sm:$0xf]
      %v500 = vld [vmem:[%s1 + $0x358] sm:$0xf]
      %v501 = vld [vmem:[%s1 + $0x35c] sm:$0xf]
      %v502 = vld [vmem:[%s1 + $0x360] sm:$0xf]
      %v503 = vld [vmem:[%s1 + $0x364] sm:$0xf]
      %v504 = vld [vmem:[%s1 + $0x368] sm:$0xf]
      %v505 = vld [vmem:[%s1 + $0x36c] sm:$0xf]
      %v506 = vld [vmem:[%s1 + $0x370] sm:$0xf]
      %v507 = vld [vmem:[%s1 + $0x374] sm:$0xf]
      %v508 = vld [vmem:[%s1 + $0x378] sm:$0xf]
      %v509 = vld [vmem:[%s1 + $0x37c] sm:$0xf]
      %v510 = vld [vmem:[%s1 + $0x380] sm:$0xf]
      %v511 = vld [vmem:[%s1 + $0x384] sm:$0xf]
      %v512 = vld [vmem:[%s1 + $0x388] sm:$0xf]
      %v513 = vld [vmem:[%s1 + $0x38c] sm:$0xf]
      %v514 = vld [vmem:[%s1 + $0x390] sm:$0xf]
      %v515 = vld [vmem:[%s1 + $0x394] sm:$0xf]
      %v516 = vld [vmem:[%s1 + $0x398] sm:$0xf]
      %v517 = vld [vmem:[%s1 + $0x39c] sm:$0xf]
      %v518 = vld [vmem:[%s1 + $0x3a0] sm:$0xf]
      %v519 = vld [vmem:[%s1 + $0x3a4] sm:$0xf]
      %v520 = vld [vmem:[%s1 + $0x3a8] sm:$0xf]
      %v521 = vld [vmem:[%s1 + $0x3ac] sm:$0xf]
      %v522 = vld [vmem:[%s1 + $0x3b0] sm:$0xf]
      %v523 = vld [vmem:[%s1 + $0x3b4] sm:$0xf]
      %v524 = vld [vmem:[%s1 + $0x3b8] sm:$0xf]
      %v525 = vld [vmem:[%s1 + $0x3bc] sm:$0xf]
      %v526 = vld [vmem:[%s1 + $0x3c0] sm:$0xf]
      %v527 = vld [vmem:[%s1 + $0x3c4] sm:$0xf]
      %v528 = vld [vmem:[%s1 + $0x3c8] sm:$0xf]
      %v529 = vld [vmem:[%s1 + $0x3cc] sm:$0xf]
      %v530 = vld [vmem:[%s1 + $0x3d0] sm:$0xf]
      %v531 = vld [vmem:[%s1 + $0x3d4] sm:$0xf]
      %v532 = vld [vmem:[%s1 + $0x3d8] sm:$0xf]
      %v533 = vld [vmem:[%s1 + $0x3dc] sm:$0xf]
      %v534 = vld [vmem:[%s1 + $0x3e0] sm:$0xf]
      %v535 = vld [vmem:[%s1 + $0x3e4] sm:$0xf]
      %v536 = vld [vmem:[%s1 + $0x3e8] sm:$0xf]
      %v537 = vld [vmem:[%s1 + $0x3ec] sm:$0xf]
      %v538 = vld [vmem:[%s1 + $0x3f0] sm:$0xf]
      %v539 = vld [vmem:[%s1 + $0x3f4] sm:$0xf]
      %v540 = vld [vmem:[%s1 + $0x3f8] sm:$0xf]
      %v541 = vld [vmem:[%s1 + $0x3fc] sm:$0xf]
      %v606 = vunpack.c.l.b16 %v222
      %v607 = vunpack.c.h.b16 %v222
      %v608 = vunpack.c.l.b16 %v223
      %v609 = vunpack.c.h.b16 %v223
      %v610 = vunpack.c.l.b16 %v224
      %v611 = vunpack.c.h.b16 %v224
      %v612 = vunpack.c.l.b16 %v225
      %v613 = vunpack.c.h.b16 %v225
      %v614 = vunpack.c.l.b16 %v226
      %v615 = vunpack.c.h.b16 %v226
      %v616 = vunpack.c.l.b16 %v227
      %v617 = vunpack.c.h.b16 %v227
      %v618 = vunpack.c.l.b16 %v228
      %v619 = vunpack.c.h.b16 %v228
      %v620 = vunpack.c.l.b16 %v229
      %v621 = vunpack.c.h.b16 %v229
      %v622 = vunpack.c.l.b16 %v230
      %v623 = vunpack.c.h.b16 %v230
      %v624 = vunpack.c.l.b16 %v231
      %v625 = vunpack.c.h.b16 %v231
      %v626 = vunpack.c.l.b16 %v232
      %v627 = vunpack.c.h.b16 %v232
      %v628 = vunpack.c.l.b16 %v233
      %v629 = vunpack.c.h.b16 %v233
      %v630 = vunpack.c.l.b16 %v234
      %v631 = vunpack.c.h.b16 %v234
      %v632 = vunpack.c.l.b16 %v235
      %v633 = vunpack.c.h.b16 %v235
      %v634 = vunpack.c.l.b16 %v236
      %v635 = vunpack.c.h.b16 %v236
      %v636 = vunpack.c.l.b16 %v237
      %v637 = vunpack.c.h.b16 %v237
      %v638 = vunpack.c.l.b16 %v238
      %v639 = vunpack.c.h.b16 %v238
      %v640 = vunpack.c.l.b16 %v239
      %v641 = vunpack.c.h.b16 %v239
      %v642 = vunpack.c.l.b16 %v240
      %v643 = vunpack.c.h.b16 %v240
      %v644 = vunpack.c.l.b16 %v241
      %v645 = vunpack.c.h.b16 %v241
      %v646 = vunpack.c.l.b16 %v242
      %v647 = vunpack.c.h.b16 %v242
      %v648 = vunpack.c.l.b16 %v243
      %v649 = vunpack.c.h.b16 %v243
      %v650 = vunpack.c.l.b16 %v244
      %v651 = vunpack.c.h.b16 %v244
      %v652 = vunpack.c.l.b16 %v245
      %v653 = vunpack.c.h.b16 %v245
      %v654 = vunpack.c.l.b16 %v246
      %v655 = vunpack.c.h.b16 %v246
      %v656 = vunpack.c.l.b16 %v247
      %v657 = vunpack.c.h.b16 %v247
      %v658 = vunpack.c.l.b16 %v248
      %v659 = vunpack.c.h.b16 %v248
      %v660 = vunpack.c.l.b16 %v249
      %v661 = vunpack.c.h.b16 %v249
      %v662 = vunpack.c.l.b16 %v250
      %v663 = vunpack.c.h.b16 %v250
      %v664 = vunpack.c.l.b16 %v251
      %v665 = vunpack.c.h.b16 %v251
      %v666 = vunpack.c.l.b16 %v252
      %v667 = vunpack.c.h.b16 %v252
      %v668 = vunpack.c.l.b16 %v253
      %v669 = vunpack.c.h.b16 %v253
      %v670 = vunpack.c.l.b16 %v254
      %v671 = vunpack.c.h.b16 %v254
      %v672 = vunpack.c.l.b16 %v255
      %v673 = vunpack.c.h.b16 %v255
      %v674 = vunpack.c.l.b16 %v256
      %v675 = vunpack.c.h.b16 %v256
      %v676 = vunpack.c.l.b16 %v257
      %v677 = vunpack.c.h.b16 %v257
      %v678 = vunpack.c.l.b16 %v258
      %v679 = vunpack.c.h.b16 %v258
      %v680 = vunpack.c.l.b16 %v259
      %v681 = vunpack.c.h.b16 %v259
      %v682 = vunpack.c.l.b16 %v260
      %v683 = vunpack.c.h.b16 %v260
      %v684 = vunpack.c.l.b16 %v261
      %v685 = vunpack.c.h.b16 %v261
      %v686 = vunpack.c.l.b16 %v262
      %v687 = vunpack.c.h.b16 %v262
      %v688 = vunpack.c.l.b16 %v263
      %v689 = vunpack.c.h.b16 %v263
      %v690 = vunpack.c.l.b16 %v264
      %v691 = vunpack.c.h.b16 %v264
      %v692 = vunpack.c.l.b16 %v265
      %v693 = vunpack.c.h.b16 %v265
      %v694 = vunpack.c.l.b16 %v266
      %v695 = vunpack.c.h.b16 %v266
      %v696 = vunpack.c.l.b16 %v267
      %v697 = vunpack.c.h.b16 %v267
      %v698 = vunpack.c.l.b16 %v268
      %v699 = vunpack.c.h.b16 %v268
      %v700 = vunpack.c.l.b16 %v269
      %v701 = vunpack.c.h.b16 %v269
      %v702 = vunpack.c.l.b16 %v270
      %v703 = vunpack.c.h.b16 %v270
      %v704 = vunpack.c.l.b16 %v271
      %v705 = vunpack.c.h.b16 %v271
      %v706 = vunpack.c.l.b16 %v272
      %v707 = vunpack.c.h.b16 %v272
      %v708 = vunpack.c.l.b16 %v273
      %v709 = vunpack.c.h.b16 %v273
      %v710 = vunpack.c.l.b16 %v274
      %v711 = vunpack.c.h.b16 %v274
      %v712 = vunpack.c.l.b16 %v275
      %v713 = vunpack.c.h.b16 %v275
      %v714 = vunpack.c.l.b16 %v276
      %v715 = vunpack.c.h.b16 %v276
      %v716 = vunpack.c.l.b16 %v277
      %v717 = vunpack.c.h.b16 %v277
      %v718 = vunpack.c.l.b16 %v278
      %v719 = vunpack.c.h.b16 %v278
      %v720 = vunpack.c.l.b16 %v279
      %v721 = vunpack.c.h.b16 %v279
      %v722 = vunpack.c.l.b16 %v280
      %v723 = vunpack.c.h.b16 %v280
      %v724 = vunpack.c.l.b16 %v281
      %v725 = vunpack.c.h.b16 %v281
      %v726 = vunpack.c.l.b16 %v282
      %v727 = vunpack.c.h.b16 %v282
      %v728 = vunpack.c.l.b16 %v283
      %v729 = vunpack.c.h.b16 %v283
      %v730 = vunpack.c.l.b16 %v284
      %v731 = vunpack.c.h.b16 %v284
      %v732 = vunpack.c.l.b16 %v285
      %v733 = vunpack.c.h.b16 %v285
      %v734 = vpack.c.b16 %v622, %v606
      %v735 = vpack.c.b16 %v623, %v607
      %v736 = vpack.c.b16 %v624, %v608
      %v737 = vpack.c.b16 %v625, %v609
      %v738 = vpack.c.b16 %v626, %v610
      %v739 = vpack.c.b16 %v627, %v611
      %v740 = vpack.c.b16 %v628, %v612
      %v741 = vpack.c.b16 %v629, %v613
      %v742 = vpack.c.b16 %v630, %v614
      %v743 = vpack.c.b16 %v631, %v615
      %v744 = vpack.c.b16 %v632, %v616
      %v745 = vpack.c.b16 %v633, %v617
      %v746 = vpack.c.b16 %v634, %v618
      %v747 = vpack.c.b16 %v635, %v619
      %v748 = vpack.c.b16 %v636, %v620
      %v749 = vpack.c.b16 %v637, %v621
      %v750 = vpack.c.b16 %v654, %v638
      %v751 = vpack.c.b16 %v655, %v639
      %v752 = vpack.c.b16 %v656, %v640
      %v753 = vpack.c.b16 %v657, %v641
      %v754 = vpack.c.b16 %v658, %v642
      %v755 = vpack.c.b16 %v659, %v643
      %v756 = vpack.c.b16 %v660, %v644
      %v757 = vpack.c.b16 %v661, %v645
      %v758 = vpack.c.b16 %v662, %v646
      %v759 = vpack.c.b16 %v663, %v647
      %v760 = vpack.c.b16 %v664, %v648
      %v761 = vpack.c.b16 %v665, %v649
      %v762 = vpack.c.b16 %v666, %v650
      %v763 = vpack.c.b16 %v667, %v651
      %v764 = vpack.c.b16 %v668, %v652
      %v765 = vpack.c.b16 %v669, %v653
      %v766 = vpack.c.b16 %v686, %v670
      %v767 = vpack.c.b16 %v687, %v671
      %v768 = vpack.c.b16 %v688, %v672
      %v769 = vpack.c.b16 %v689, %v673
      %v770 = vpack.c.b16 %v690, %v674
      %v771 = vpack.c.b16 %v691, %v675
      %v772 = vpack.c.b16 %v692, %v676
      %v773 = vpack.c.b16 %v693, %v677
      %v774 = vpack.c.b16 %v694, %v678
      %v775 = vpack.c.b16 %v695, %v679
      %v776 = vpack.c.b16 %v696, %v680
      %v777 = vpack.c.b16 %v697, %v681
      %v778 = vpack.c.b16 %v698, %v682
      %v779 = vpack.c.b16 %v699, %v683
      %v780 = vpack.c.b16 %v700, %v684
      %v781 = vpack.c.b16 %v701, %v685
      %v782 = vpack.c.b16 %v718, %v702
      %v783 = vpack.c.b16 %v719, %v703
      %v784 = vpack.c.b16 %v720, %v704
      %v785 = vpack.c.b16 %v721, %v705
      %v786 = vpack.c.b16 %v722, %v706
      %v787 = vpack.c.b16 %v723, %v707
      %v788 = vpack.c.b16 %v724, %v708
      %v789 = vpack.c.b16 %v725, %v709
      %v790 = vpack.c.b16 %v726, %v710
      %v791 = vpack.c.b16 %v727, %v711
      %v792 = vpack.c.b16 %v728, %v712
      %v793 = vpack.c.b16 %v729, %v713
      %v794 = vpack.c.b16 %v730, %v714
      %v795 = vpack.c.b16 %v731, %v715
      %v796 = vpack.c.b16 %v732, %v716
      %v797 = vpack.c.b16 %v733, %v717
      %v1118 = vunpack.c.l.b16 %v286
      %v1119 = vunpack.c.l.b16 %v287
      %v1120 = vunpack.c.l.b16 %v288
      %v1121 = vunpack.c.l.b16 %v289
      %v1122 = vunpack.c.l.b16 %v290
      %v1123 = vunpack.c.l.b16 %v291
      %v1124 = vunpack.c.l.b16 %v292
      %v1125 = vunpack.c.l.b16 %v293
      %v1126 = vunpack.c.l.b16 %v294
      %v1127 = vunpack.c.l.b16 %v295
      %v1128 = vunpack.c.l.b16 %v296
      %v1129 = vunpack.c.l.b16 %v297
      %v1130 = vunpack.c.l.b16 %v298
      %v1131 = vunpack.c.l.b16 %v299
      %v1132 = vunpack.c.l.b16 %v300
      %v1133 = vunpack.c.l.b16 %v301
      %v1134 = vunpack.c.l.b16 %v302
      %v1135 = vunpack.c.l.b16 %v303
      %v1136 = vunpack.c.l.b16 %v304
      %v1137 = vunpack.c.l.b16 %v305
      %v1138 = vunpack.c.l.b16 %v306
      %v1139 = vunpack.c.l.b16 %v307
      %v1140 = vunpack.c.l.b16 %v308
      %v1141 = vunpack.c.l.b16 %v309
      %v1142 = vunpack.c.l.b16 %v310
      %v1143 = vunpack.c.l.b16 %v311
      %v1144 = vunpack.c.l.b16 %v312
      %v1145 = vunpack.c.l.b16 %v313
      %v1146 = vunpack.c.l.b16 %v314
      %v1147 = vunpack.c.l.b16 %v315
      %v1148 = vunpack.c.l.b16 %v316
      %v1149 = vunpack.c.l.b16 %v317
      %v1150 = vunpack.c.l.b16 %v318
      %v1151 = vunpack.c.l.b16 %v319
      %v1152 = vunpack.c.l.b16 %v320
      %v1153 = vunpack.c.l.b16 %v321
      %v1154 = vunpack.c.l.b16 %v322
      %v1155 = vunpack.c.l.b16 %v323
      %v1156 = vunpack.c.l.b16 %v324
      %v1157 = vunpack.c.l.b16 %v325
      %v1158 = vunpack.c.l.b16 %v326
      %v1159 = vunpack.c.l.b16 %v327
      %v1160 = vunpack.c.l.b16 %v328
      %v1161 = vunpack.c.l.b16 %v329
      %v1162 = vunpack.c.l.b16 %v330
      %v1163 = vunpack.c.l.b16 %v331
      %v1164 = vunpack.c.l.b16 %v332
      %v1165 = vunpack.c.l.b16 %v333
      %v1166 = vunpack.c.l.b16 %v334
      %v1167 = vunpack.c.l.b16 %v335
      %v1168 = vunpack.c.l.b16 %v336
      %v1169 = vunpack.c.l.b16 %v337
      %v1170 = vunpack.c.l.b16 %v338
      %v1171 = vunpack.c.l.b16 %v339
      %v1172 = vunpack.c.l.b16 %v340
      %v1173 = vunpack.c.l.b16 %v341
      %v1174 = vunpack.c.l.b16 %v342
      %v1175 = vunpack.c.l.b16 %v343
      %v1176 = vunpack.c.l.b16 %v344
      %v1177 = vunpack.c.l.b16 %v345
      %v1178 = vunpack.c.l.b16 %v346
      %v1179 = vunpack.c.l.b16 %v347
      %v1180 = vunpack.c.l.b16 %v348
      %v1181 = vunpack.c.l.b16 %v349
      %v1182 = vunpack.c.l.b16 %v350
      %v1183 = vunpack.c.l.b16 %v351
      %v1184 = vunpack.c.l.b16 %v352
      %v1185 = vunpack.c.l.b16 %v353
      %v1186 = vunpack.c.l.b16 %v354
      %v1187 = vunpack.c.l.b16 %v355
      %v1188 = vunpack.c.l.b16 %v356
      %v1189 = vunpack.c.l.b16 %v357
      %v1190 = vunpack.c.l.b16 %v358
      %v1191 = vunpack.c.l.b16 %v359
      %v1192 = vunpack.c.l.b16 %v360
      %v1193 = vunpack.c.l.b16 %v361
      %v1194 = vunpack.c.l.b16 %v362
      %v1195 = vunpack.c.l.b16 %v363
      %v1196 = vunpack.c.l.b16 %v364
      %v1197 = vunpack.c.l.b16 %v365
      %v1198 = vunpack.c.l.b16 %v366
      %v1199 = vunpack.c.l.b16 %v367
      %v1200 = vunpack.c.l.b16 %v368
      %v1201 = vunpack.c.l.b16 %v369
      %v1202 = vunpack.c.l.b16 %v370
      %v1203 = vunpack.c.l.b16 %v371
      %v1204 = vunpack.c.l.b16 %v372
      %v1205 = vunpack.c.l.b16 %v373
      %v1206 = vunpack.c.l.b16 %v374
      %v1207 = vunpack.c.l.b16 %v375
      %v1208 = vunpack.c.l.b16 %v376
      %v1209 = vunpack.c.l.b16 %v377
      %v1210 = vunpack.c.l.b16 %v378
      %v1211 = vunpack.c.l.b16 %v379
      %v1212 = vunpack.c.l.b16 %v380
      %v1213 = vunpack.c.l.b16 %v381
      %v1214 = vunpack.c.l.b16 %v382
      %v1215 = vunpack.c.l.b16 %v383
      %v1216 = vunpack.c.l.b16 %v384
      %v1217 = vunpack.c.l.b16 %v385
      %v1218 = vunpack.c.l.b16 %v386
      %v1219 = vunpack.c.l.b16 %v387
      %v1220 = vunpack.c.l.b16 %v388
      %v1221 = vunpack.c.l.b16 %v389
      %v1222 = vunpack.c.l.b16 %v390
      %v1223 = vunpack.c.l.b16 %v391
      %v1224 = vunpack.c.l.b16 %v392
      %v1225 = vunpack.c.l.b16 %v393
      %v1226 = vunpack.c.l.b16 %v394
      %v1227 = vunpack.c.l.b16 %v395
      %v1228 = vunpack.c.l.b16 %v396
      %v1229 = vunpack.c.l.b16 %v397
      %v1230 = vunpack.c.l.b16 %v398
      %v1231 = vunpack.c.l.b16 %v399
      %v1232 = vunpack.c.l.b16 %v400
      %v1233 = vunpack.c.l.b16 %v401
      %v1234 = vunpack.c.l.b16 %v402
      %v1235 = vunpack.c.l.b16 %v403
      %v1236 = vunpack.c.l.b16 %v404
      %v1237 = vunpack.c.l.b16 %v405
      %v1238 = vunpack.c.l.b16 %v406
      %v1239 = vunpack.c.l.b16 %v407
      %v1240 = vunpack.c.l.b16 %v408
      %v1241 = vunpack.c.l.b16 %v409
      %v1242 = vunpack.c.l.b16 %v410
      %v1243 = vunpack.c.l.b16 %v411
      %v1244 = vunpack.c.l.b16 %v412
      %v1245 = vunpack.c.l.b16 %v413
      %v1246 = vunpack.c.l.b16 %v414
      %v1247 = vunpack.c.l.b16 %v415
      %v1248 = vunpack.c.l.b16 %v416
      %v1249 = vunpack.c.l.b16 %v417
      %v1250 = vunpack.c.l.b16 %v418
      %v1251 = vunpack.c.l.b16 %v419
      %v1252 = vunpack.c.l.b16 %v420
      %v1253 = vunpack.c.l.b16 %v421
      %v1254 = vunpack.c.l.b16 %v422
      %v1255 = vunpack.c.l.b16 %v423
      %v1256 = vunpack.c.l.b16 %v424
      %v1257 = vunpack.c.l.b16 %v425
      %v1258 = vunpack.c.l.b16 %v426
      %v1259 = vunpack.c.l.b16 %v427
      %v1260 = vunpack.c.l.b16 %v428
      %v1261 = vunpack.c.l.b16 %v429
      %v1262 = vunpack.c.l.b16 %v430
      %v1263 = vunpack.c.l.b16 %v431
      %v1264 = vunpack.c.l.b16 %v432
      %v1265 = vunpack.c.l.b16 %v433
      %v1266 = vunpack.c.l.b16 %v434
      %v1267 = vunpack.c.l.b16 %v435
      %v1268 = vunpack.c.l.b16 %v436
      %v1269 = vunpack.c.l.b16 %v437
      %v1270 = vunpack.c.l.b16 %v438
      %v1271 = vunpack.c.l.b16 %v439
      %v1272 = vunpack.c.l.b16 %v440
      %v1273 = vunpack.c.l.b16 %v441
      %v1274 = vunpack.c.l.b16 %v442
      %v1275 = vunpack.c.l.b16 %v443
      %v1276 = vunpack.c.l.b16 %v444
      %v1277 = vunpack.c.l.b16 %v445
      %v1278 = vunpack.c.l.b16 %v446
      %v1279 = vunpack.c.l.b16 %v447
      %v1280 = vunpack.c.l.b16 %v448
      %v1281 = vunpack.c.l.b16 %v449
      %v1282 = vunpack.c.l.b16 %v450
      %v1283 = vunpack.c.l.b16 %v451
      %v1284 = vunpack.c.l.b16 %v452
      %v1285 = vunpack.c.l.b16 %v453
      %v1286 = vunpack.c.l.b16 %v454
      %v1287 = vunpack.c.l.b16 %v455
      %v1288 = vunpack.c.l.b16 %v456
      %v1289 = vunpack.c.l.b16 %v457
      %v1290 = vunpack.c.l.b16 %v458
      %v1291 = vunpack.c.l.b16 %v459
      %v1292 = vunpack.c.l.b16 %v460
      %v1293 = vunpack.c.l.b16 %v461
      %v1294 = vunpack.c.l.b16 %v462
      %v1295 = vunpack.c.l.b16 %v463
      %v1296 = vunpack.c.l.b16 %v464
      %v1297 = vunpack.c.l.b16 %v465
      %v1298 = vunpack.c.l.b16 %v466
      %v1299 = vunpack.c.l.b16 %v467
      %v1300 = vunpack.c.l.b16 %v468
      %v1301 = vunpack.c.l.b16 %v469
      %v1302 = vunpack.c.l.b16 %v470
      %v1303 = vunpack.c.l.b16 %v471
      %v1304 = vunpack.c.l.b16 %v472
      %v1305 = vunpack.c.l.b16 %v473
      %v1306 = vunpack.c.l.b16 %v474
      %v1307 = vunpack.c.l.b16 %v475
      %v1308 = vunpack.c.l.b16 %v476
      %v1309 = vunpack.c.l.b16 %v477
      %v1310 = vunpack.c.l.b16 %v478
      %v1311 = vunpack.c.l.b16 %v479
      %v1312 = vunpack.c.l.b16 %v480
      %v1313 = vunpack.c.l.b16 %v481
      %v1314 = vunpack.c.l.b16 %v482
      %v1315 = vunpack.c.l.b16 %v483
      %v1316 = vunpack.c.l.b16 %v484
      %v1317 = vunpack.c.l.b16 %v485
      %v1318 = vunpack.c.l.b16 %v486
      %v1319 = vunpack.c.l.b16 %v487
      %v1320 = vunpack.c.l.b16 %v488
      %v1321 = vunpack.c.l.b16 %v489
      %v1322 = vunpack.c.l.b16 %v490
      %v1323 = vunpack.c.l.b16 %v491
      %v1324 = vunpack.c.l.b16 %v492
      %v1325 = vunpack.c.l.b16 %v493
      %v1326 = vunpack.c.l.b16 %v494
      %v1327 = vunpack.c.l.b16 %v495
      %v1328 = vunpack.c.l.b16 %v496
      %v1329 = vunpack.c.l.b16 %v497
      %v1330 = vunpack.c.l.b16 %v498
      %v1331 = vunpack.c.l.b16 %v499
      %v1332 = vunpack.c.l.b16 %v500
      %v1333 = vunpack.c.l.b16 %v501
      %v1334 = vunpack.c.l.b16 %v502
      %v1335 = vunpack.c.l.b16 %v503
      %v1336 = vunpack.c.l.b16 %v504
      %v1337 = vunpack.c.l.b16 %v505
      %v1338 = vunpack.c.l.b16 %v506
      %v1339 = vunpack.c.l.b16 %v507
      %v1340 = vunpack.c.l.b16 %v508
      %v1341 = vunpack.c.l.b16 %v509
      %v1342 = vunpack.c.l.b16 %v510
      %v1343 = vunpack.c.l.b16 %v511
      %v1344 = vunpack.c.l.b16 %v512
      %v1345 = vunpack.c.l.b16 %v513
      %v1346 = vunpack.c.l.b16 %v514
      %v1347 = vunpack.c.l.b16 %v515
      %v1348 = vunpack.c.l.b16 %v516
      %v1349 = vunpack.c.l.b16 %v517
      %v1350 = vunpack.c.l.b16 %v518
      %v1351 = vunpack.c.l.b16 %v519
      %v1352 = vunpack.c.l.b16 %v520
      %v1353 = vunpack.c.l.b16 %v521
      %v1354 = vunpack.c.l.b16 %v522
      %v1355 = vunpack.c.l.b16 %v523
      %v1356 = vunpack.c.l.b16 %v524
      %v1357 = vunpack.c.l.b16 %v525
      %v1358 = vunpack.c.l.b16 %v526
      %v1359 = vunpack.c.l.b16 %v527
      %v1360 = vunpack.c.l.b16 %v528
      %v1361 = vunpack.c.l.b16 %v529
      %v1362 = vunpack.c.l.b16 %v530
      %v1363 = vunpack.c.l.b16 %v531
      %v1364 = vunpack.c.l.b16 %v532
      %v1365 = vunpack.c.l.b16 %v533
      %v1366 = vunpack.c.l.b16 %v534
      %v1367 = vunpack.c.l.b16 %v535
      %v1368 = vunpack.c.l.b16 %v536
      %v1369 = vunpack.c.l.b16 %v537
      %v1370 = vunpack.c.l.b16 %v538
      %v1371 = vunpack.c.l.b16 %v539
      %v1372 = vunpack.c.l.b16 %v540
      %v1373 = vunpack.c.l.b16 %v541
      %v1374 = vpack.c.b16 %v1119, %v1118
      %v1375 = vpack.c.b16 %v1121, %v1120
      %v1376 = vpack.c.b16 %v1123, %v1122
      %v1377 = vpack.c.b16 %v1125, %v1124
      %v1378 = vpack.c.b16 %v1127, %v1126
      %v1379 = vpack.c.b16 %v1129, %v1128
      %v1380 = vpack.c.b16 %v1131, %v1130
      %v1381 = vpack.c.b16 %v1133, %v1132
      %v1382 = vpack.c.b16 %v1135, %v1134
      %v1383 = vpack.c.b16 %v1137, %v1136
      %v1384 = vpack.c.b16 %v1139, %v1138
      %v1385 = vpack.c.b16 %v1141, %v1140
      %v1386 = vpack.c.b16 %v1143, %v1142
      %v1387 = vpack.c.b16 %v1145, %v1144
      %v1388 = vpack.c.b16 %v1147, %v1146
      %v1389 = vpack.c.b16 %v1149, %v1148
      %v1390 = vpack.c.b16 %v1151, %v1150
      %v1391 = vpack.c.b16 %v1153, %v1152
      %v1392 = vpack.c.b16 %v1155, %v1154
      %v1393 = vpack.c.b16 %v1157, %v1156
      %v1394 = vpack.c.b16 %v1159, %v1158
      %v1395 = vpack.c.b16 %v1161, %v1160
      %v1396 = vpack.c.b16 %v1163, %v1162
      %v1397 = vpack.c.b16 %v1165, %v1164
      %v1398 = vpack.c.b16 %v1167, %v1166
      %v1399 = vpack.c.b16 %v1169, %v1168
      %v1400 = vpack.c.b16 %v1171, %v1170
      %v1401 = vpack.c.b16 %v1173, %v1172
      %v1402 = vpack.c.b16 %v1175, %v1174
      %v1403 = vpack.c.b16 %v1177, %v1176
      %v1404 = vpack.c.b16 %v1179, %v1178
      %v1405 = vpack.c.b16 %v1181, %v1180
      %v1406 = vpack.c.b16 %v1183, %v1182
      %v1407 = vpack.c.b16 %v1185, %v1184
      %v1408 = vpack.c.b16 %v1187, %v1186
      %v1409 = vpack.c.b16 %v1189, %v1188
      %v1410 = vpack.c.b16 %v1191, %v1190
      %v1411 = vpack.c.b16 %v1193, %v1192
      %v1412 = vpack.c.b16 %v1195, %v1194
      %v1413 = vpack.c.b16 %v1197, %v1196
      %v1414 = vpack.c.b16 %v1199, %v1198
      %v1415 = vpack.c.b16 %v1201, %v1200
      %v1416 = vpack.c.b16 %v1203, %v1202
      %v1417 = vpack.c.b16 %v1205, %v1204
      %v1418 = vpack.c.b16 %v1207, %v1206
      %v1419 = vpack.c.b16 %v1209, %v1208
      %v1420 = vpack.c.b16 %v1211, %v1210
      %v1421 = vpack.c.b16 %v1213, %v1212
      %v1422 = vpack.c.b16 %v1215, %v1214
      %v1423 = vpack.c.b16 %v1217, %v1216
      %v1424 = vpack.c.b16 %v1219, %v1218
      %v1425 = vpack.c.b16 %v1221, %v1220
      %v1426 = vpack.c.b16 %v1223, %v1222
      %v1427 = vpack.c.b16 %v1225, %v1224
      %v1428 = vpack.c.b16 %v1227, %v1226
      %v1429 = vpack.c.b16 %v1229, %v1228
      %v1430 = vpack.c.b16 %v1231, %v1230
      %v1431 = vpack.c.b16 %v1233, %v1232
      %v1432 = vpack.c.b16 %v1235, %v1234
      %v1433 = vpack.c.b16 %v1237, %v1236
      %v1434 = vpack.c.b16 %v1239, %v1238
      %v1435 = vpack.c.b16 %v1241, %v1240
      %v1436 = vpack.c.b16 %v1243, %v1242
      %v1437 = vpack.c.b16 %v1245, %v1244
      %v1438 = vpack.c.b16 %v1247, %v1246
      %v1439 = vpack.c.b16 %v1249, %v1248
      %v1440 = vpack.c.b16 %v1251, %v1250
      %v1441 = vpack.c.b16 %v1253, %v1252
      %v1442 = vpack.c.b16 %v1255, %v1254
      %v1443 = vpack.c.b16 %v1257, %v1256
      %v1444 = vpack.c.b16 %v1259, %v1258
      %v1445 = vpack.c.b16 %v1261, %v1260
      %v1446 = vpack.c.b16 %v1263, %v1262
      %v1447 = vpack.c.b16 %v1265, %v1264
      %v1448 = vpack.c.b16 %v1267, %v1266
      %v1449 = vpack.c.b16 %v1269, %v1268
      %v1450 = vpack.c.b16 %v1271, %v1270
      %v1451 = vpack.c.b16 %v1273, %v1272
      %v1452 = vpack.c.b16 %v1275, %v1274
      %v1453 = vpack.c.b16 %v1277, %v1276
      %v1454 = vpack.c.b16 %v1279, %v1278
      %v1455 = vpack.c.b16 %v1281, %v1280
      %v1456 = vpack.c.b16 %v1283, %v1282
      %v1457 = vpack.c.b16 %v1285, %v1284
      %v1458 = vpack.c.b16 %v1287, %v1286
      %v1459 = vpack.c.b16 %v1289, %v1288
      %v1460 = vpack.c.b16 %v1291, %v1290
      %v1461 = vpack.c.b16 %v1293, %v1292
      %v1462 = vpack.c.b16 %v1295, %v1294
      %v1463 = vpack.c.b16 %v1297, %v1296
      %v1464 = vpack.c.b16 %v1299, %v1298
      %v1465 = vpack.c.b16 %v1301, %v1300
      %v1466 = vpack.c.b16 %v1303, %v1302
      %v1467 = vpack.c.b16 %v1305, %v1304
      %v1468 = vpack.c.b16 %v1307, %v1306
      %v1469 = vpack.c.b16 %v1309, %v1308
      %v1470 = vpack.c.b16 %v1311, %v1310
      %v1471 = vpack.c.b16 %v1313, %v1312
      %v1472 = vpack.c.b16 %v1315, %v1314
      %v1473 = vpack.c.b16 %v1317, %v1316
      %v1474 = vpack.c.b16 %v1319, %v1318
      %v1475 = vpack.c.b16 %v1321, %v1320
      %v1476 = vpack.c.b16 %v1323, %v1322
      %v1477 = vpack.c.b16 %v1325, %v1324
      %v1478 = vpack.c.b16 %v1327, %v1326
      %v1479 = vpack.c.b16 %v1329, %v1328
      %v1480 = vpack.c.b16 %v1331, %v1330
      %v1481 = vpack.c.b16 %v1333, %v1332
      %v1482 = vpack.c.b16 %v1335, %v1334
      %v1483 = vpack.c.b16 %v1337, %v1336
      %v1484 = vpack.c.b16 %v1339, %v1338
      %v1485 = vpack.c.b16 %v1341, %v1340
      %v1486 = vpack.c.b16 %v1343, %v1342
      %v1487 = vpack.c.b16 %v1345, %v1344
      %v1488 = vpack.c.b16 %v1347, %v1346
      %v1489 = vpack.c.b16 %v1349, %v1348
      %v1490 = vpack.c.b16 %v1351, %v1350
      %v1491 = vpack.c.b16 %v1353, %v1352
      %v1492 = vpack.c.b16 %v1355, %v1354
      %v1493 = vpack.c.b16 %v1357, %v1356
      %v1494 = vpack.c.b16 %v1359, %v1358
      %v1495 = vpack.c.b16 %v1361, %v1360
      %v1496 = vpack.c.b16 %v1363, %v1362
      %v1497 = vpack.c.b16 %v1365, %v1364
      %v1498 = vpack.c.b16 %v1367, %v1366
      %v1499 = vpack.c.b16 %v1369, %v1368
      %v1500 = vpack.c.b16 %v1371, %v1370
      %v1501 = vpack.c.b16 %v1373, %v1372
      %1630 = vmatprep.subr.bf16.mxu0 0
      %1631 = vmatpush1.bf16.msra.mxu0 %v1374
      %1632 = vmatprep.subr.bf16.mxu0 0
      %1633 = vmatpush1.bf16.msra.mxu0 %v1375
      %1634 = vmatprep.subr.bf16.mxu0 0
      %1635 = vmatpush1.bf16.msra.mxu0 %v1376
      %1636 = vmatprep.subr.bf16.mxu0 0
      %1637 = vmatpush1.bf16.msra.mxu0 %v1377
      %1638 = vmatprep.subr.bf16.mxu0 0
      %1639 = vmatpush1.bf16.msra.mxu0 %v1378
      %1640 = vmatprep.subr.bf16.mxu0 0
      %1641 = vmatpush1.bf16.msra.mxu0 %v1379
      %1642 = vmatprep.subr.bf16.mxu0 0
      %1643 = vmatpush1.bf16.msra.mxu0 %v1380
      %1644 = vmatprep.subr.bf16.mxu0 0
      %1645 = vmatpush1.bf16.msra.mxu0 %v1381
      %1646 = vmatprep.subr.bf16.mxu0 0
      %1647 = vmatpush1.bf16.msra.mxu0 %v1382
      %1648 = vmatprep.subr.bf16.mxu0 0
      %1649 = vmatpush1.bf16.msra.mxu0 %v1383
      %1650 = vmatprep.subr.bf16.mxu0 0
      %1651 = vmatpush1.bf16.msra.mxu0 %v1384
      %1652 = vmatprep.subr.bf16.mxu0 0
      %1653 = vmatpush1.bf16.msra.mxu0 %v1385
      %1654 = vmatprep.subr.bf16.mxu0 0
      %1655 = vmatpush1.bf16.msra.mxu0 %v1386
      %1656 = vmatprep.subr.bf16.mxu0 0
      %1657 = vmatpush1.bf16.msra.mxu0 %v1387
      %1658 = vmatprep.subr.bf16.mxu0 0
      %1659 = vmatpush1.bf16.msra.mxu0 %v1388
      %1660 = vmatprep.subr.bf16.mxu0 0
      %1661 = vmatpush1.bf16.msra.mxu0 %v1389
      %1662 = vmatprep.mubr.bf16.mxu0 %v735
      %1663 = vmatmul.mubr.bf16.gmra.mrb[0].mxu0 %v734
      %v1664 = vpop.f32.mrb[0].mxu0
      %v1665 = vadd.f32 0.0, %v1664
      %v1666 = vpop.f32.mrb[0].mxu0
      %v1667 = vpop.f32.mrb[0].mxu0
      %v1668 = vadd.f32 0.0, %v1667
      %v1669 = vpop.f32.mrb[0].mxu0
      %1670 = vmatprep.mubr.bf16.mxu0 %v751
      %1671 = vmatmul.mubr.bf16.gmra.mrb[0].mxu0 %v750
      %v1672 = vpop.f32.mrb[0].mxu0
      %v1673 = vadd.f32 0.0, %v1672
      %v1674 = vpop.f32.mrb[0].mxu0
      %v1675 = vpop.f32.mrb[0].mxu0
      %v1676 = vadd.f32 0.0, %v1675
      %v1677 = vpop.f32.mrb[0].mxu0
      %1678 = vmatprep.mubr.bf16.mxu0 %v767
      %1679 = vmatmul.mubr.bf16.gmra.mrb[0].mxu0 %v766
      %v1680 = vpop.f32.mrb[0].mxu0
      %v1681 = vadd.f32 0.0, %v1680
      %v1682 = vpop.f32.mrb[0].mxu0
      %v1683 = vpop.f32.mrb[0].mxu0
      %v1684 = vadd.f32 0.0, %v1683
      %v1685 = vpop.f32.mrb[0].mxu0
      %1686 = vmatprep.mubr.bf16.mxu0 %v783
      %1687 = vmatmul.mubr.bf16.gmra.mrb[0].mxu0 %v782
      %v1688 = vpop.f32.mrb[0].mxu0
      %v1689 = vadd.f32 0.0, %v1688
      %v1690 = vpop.f32.mrb[0].mxu0
      %v1691 = vpop.f32.mrb[0].mxu0
      %v1692 = vadd.f32 0.0, %v1691
      %v1693 = vpop.f32.mrb[0].mxu0
      %1694 = vdwg.mxu0
      %1695 = vmatprep.subr.bf16.mxu0 0
      %1696 = vmatpush1.bf16.msra.mxu0 %v1390
      %1697 = vmatprep.subr.bf16.mxu0 0
      %1698 = vmatpush1.bf16.msra.mxu0 %v1391
      %1699 = vmatprep.subr.bf16.mxu0 0
      %1700 = vmatpush1.bf16.msra.mxu0 %v1392
      %1701 = vmatprep.subr.bf16.mxu0 0
      %1702 = vmatpush1.bf16.msra.mxu0 %v1393
      %1703 = vmatprep.subr.bf16.mxu0 0
      %1704 = vmatpush1.bf16.msra.mxu0 %v1394
      %1705 = vmatprep.subr.bf16.mxu0 0
      %1706 = vmatpush1.bf16.msra.mxu0 %v1395
      %1707 = vmatprep.subr.bf16.mxu0 0
      %1708 = vmatpush1.bf16.msra.mxu0 %v1396
      %1709 = vmatprep.subr.bf16.mxu0 0
      %1710 = vmatpush1.bf16.msra.mxu0 %v1397
      %1711 = vmatprep.subr.bf16.mxu0 0
      %1712 = vmatpush1.bf16.msra.mxu0 %v1398
      %1713 = vmatprep.subr.bf16.mxu0 0
      %1714 = vmatpush1.bf16.msra.mxu0 %v1399
      %1715 = vmatprep.subr.bf16.mxu0 0
      %1716 = vmatpush1.bf16.msra.mxu0 %v1400
      %1717 = vmatprep.subr.bf16.mxu0 0
      %1718 = vmatpush1.bf16.msra.mxu0 %v1401
      %1719 = vmatprep.subr.bf16.mxu0 0
      %1720 = vmatpush1.bf16.msra.mxu0 %v1402
      %1721 = vmatprep.subr.bf16.mxu0 0
      %1722 = vmatpush1.bf16.msra.mxu0 %v1403
      %1723 = vmatprep.subr.bf16.mxu0 0
      %1724 = vmatpush1.bf16.msra.mxu0 %v1404
      %1725 = vmatprep.subr.bf16.mxu0 0
      %1726 = vmatpush1.bf16.msra.mxu0 %v1405
      %1727 = vmatprep.mubr.bf16.mxu0 %v737
      %1728 = vmatmul.mubr.bf16.gmra.mrb[0].mxu0 %v736
      %v1729 = vpop.f32.mrb[0].mxu0
      %v1730 = vadd.f32 %v1665, %v1729
      %v1731 = vpop.f32.mrb[0].mxu0
      %v1732 = vpop.f32.mrb[0].mxu0
      %v1733 = vadd.f32 %v1668, %v1732
      %v1734 = vpop.f32.mrb[0].mxu0
      %1735 = vmatprep.mubr.bf16.mxu0 %v753
      %1736 = vmatmul.mubr.bf16.gmra.mrb[0].mxu0 %v752
      %v1737 = vpop.f32.mrb[0].mxu0
      %v1738 = vadd.f32 %v1673, %v1737
      %v1739 = vpop.f32.mrb[0].mxu0
      %v1740 = vpop.f32.mrb[0].mxu0
      %v1741 = vadd.f32 %v1676, %v1740
      %v1742 = vpop.f32.mrb[0].mxu0
      %1743 = vmatprep.mubr.bf16.mxu0 %v769
      %1744 = vmatmul.mubr.bf16.gmra.mrb[0].mxu0 %v768
      %v1745 = vpop.f32.mrb[0].mxu0
      %v1746 = vadd.f32 %v1681, %v1745
      %v1747 = vpop.f32.mrb[0].mxu0
      %v1748 = vpop.f32.mrb[0].mxu0
      %v1749 = vadd.f32 %v1684, %v1748
      %v1750 = vpop.f32.mrb[0].mxu0
      %1751 = vmatprep.mubr.bf16.mxu0 %v785
      %1752 = vmatmul.mubr.bf16.gmra.mrb[0].mxu0 %v784
      %v1753 = vpop.f32.mrb[0].mxu0
      %v1754 = vadd.f32 %v1689, %v1753
      %v1755 = vpop.f32.mrb[0].mxu0
      %v1756 = vpop.f32.mrb[0].mxu0
      %v1757 = vadd.f32 %v1692, %v1756
      %v1758 = vpop.f32.mrb[0].mxu0
      %1759 = vdwg.mxu0
      %1760 = vmatprep.subr.bf16.mxu0 0
      %1761 = vmatpush1.bf16.msra.mxu0 %v1406
      %1762 = vmatprep.subr.bf16.mxu0 0
      %1763 = vmatpush1.bf16.msra.mxu0 %v1407
      %1764 = vmatprep.subr.bf16.mxu0 0
      %1765 = vmatpush1.bf16.msra.mxu0 %v1408
      %1766 = vmatprep.subr.bf16.mxu0 0
      %1767 = vmatpush1.bf16.msra.mxu0 %v1409
      %1768 = vmatprep.subr.bf16.mxu0 0
      %1769 = vmatpush1.bf16.msra.mxu0 %v1410
      %1770 = vmatprep.subr.bf16.mxu0 0
      %1771 = vmatpush1.bf16.msra.mxu0 %v1411
      %1772 = vmatprep.subr.bf16.mxu0 0
      %1773 = vmatpush1.bf16.msra.mxu0 %v1412
      %1774 = vmatprep.subr.bf16.mxu0 0
      %1775 = vmatpush1.bf16.msra.mxu0 %v1413
      %1776 = vmatprep.subr.bf16.mxu0 0
      %1777 = vmatpush1.bf16.msra.mxu0 %v1414
      %1778 = vmatprep.subr.bf16.mxu0 0
      %1779 = vmatpush1.bf16.msra.mxu0 %v1415
      %1780 = vmatprep.subr.bf16.mxu0 0
      %1781 = vmatpush1.bf16.msra.mxu0 %v1416
      %1782 = vmatprep.subr.bf16.mxu0 0
      %1783 = vmatpush1.bf16.msra.mxu0 %v1417
      %1784 = vmatprep.subr.bf16.mxu0 0
      %1785 = vmatpush1.bf16.msra.mxu0 %v1418
      %1786 = vmatprep.subr.bf16.mxu0 0
      %1787 = vmatpush1.bf16.msra.mxu0 %v1419
      %1788 = vmatprep.subr.bf16.mxu0 0
      %1789 = vmatpush1.bf16.msra.mxu0 %v1420
      %1790 = vmatprep.subr.bf16.mxu0 0
      %1791 = vmatpush1.bf16.msra.mxu0 %v1421
      %1792 = vmatprep.mubr.bf16.mxu0 %v739
      %1793 = vmatmul.mubr.bf16.gmra.mrb[0].mxu0 %v738
      %v1794 = vpop.f32.mrb[0].mxu0
      %v1795 = vadd.f32 %v1730, %v1794
      %v1796 = vpop.f32.mrb[0].mxu0
      %v1797 = vpop.f32.mrb[0].mxu0
      %v1798 = vadd.f32 %v1733, %v1797
      %v1799 = vpop.f32.mrb[0].mxu0
      %1800 = vmatprep.mubr.bf16.mxu0 %v755
      %1801 = vmatmul.mubr.bf16.gmra.mrb[0].mxu0 %v754
      %v1802 = vpop.f32.mrb[0].mxu0
      %v1803 = vadd.f32 %v1738, %v1802
      %v1804 = vpop.f32.mrb[0].mxu0
      %v1805 = vpop.f32.mrb[0].mxu0
      %v1806 = vadd.f32 %v1741, %v1805
      %v1807 = vpop.f32.mrb[0].mxu0
      %1808 = vmatprep.mubr.bf16.mxu0 %v771
      %1809 = vmatmul.mubr.bf16.gmra.mrb[0].mxu0 %v770
      %v1810 = vpop.f32.mrb[0].mxu0
      %v1811 = vadd.f32 %v1746, %v1810
      %v1812 = vpop.f32.mrb[0].mxu0
      %v1813 = vpop.f32.mrb[0].mxu0
      %v1814 = vadd.f32 %v1749, %v1813
      %v1815 = vpop.f32.mrb[0].mxu0
      %1816 = vmatprep.mubr.bf16.mxu0 %v787
      %1817 = vmatmul.mubr.bf16.gmra.mrb[0].mxu0 %v786
      %v1818 = vpop.f32.mrb[0].mxu0
      %v1819 = vadd.f32 %v1754, %v1818
      %v1820 = vpop.f32.mrb[0].mxu0
      %v1821 = vpop.f32.mrb[0].mxu0
      %v1822 = vadd.f32 %v1757, %v1821
      %v1823 = vpop.f32.mrb[0].mxu0
      %1824 = vdwg.mxu0
      %1825 = vmatprep.subr.bf16.mxu0 0
      %1826 = vmatpush1.bf16.msra.mxu0 %v1422
      %1827 = vmatprep.subr.bf16.mxu0 0
      %1828 = vmatpush1.bf16.msra.mxu0 %v1423
      %1829 = vmatprep.subr.bf16.mxu0 0
      %1830 = vmatpush1.bf16.msra.mxu0 %v1424
      %1831 = vmatprep.subr.bf16.mxu0 0
      %1832 = vmatpush1.bf16.msra.mxu0 %v1425
      %1833 = vmatprep.subr.bf16.mxu0 0
      %1834 = vmatpush1.bf16.msra.mxu0 %v1426
      %1835 = vmatprep.subr.bf16.mxu0 0
      %1836 = vmatpush1.bf16.msra.mxu0 %v1427
      %1837 = vmatprep.subr.bf16.mxu0 0
      %1838 = vmatpush1.bf16.msra.mxu0 %v1428
      %1839 = vmatprep.subr.bf16.mxu0 0
      %1840 = vmatpush1.bf16.msra.mxu0 %v1429
      %1841 = vmatprep.subr.bf16.mxu0 0
      %1842 = vmatpush1.bf16.msra.mxu0 %v1430
      %1843 = vmatprep.subr.bf16.mxu0 0
      %1844 = vmatpush1.bf16.msra.mxu0 %v1431
      %1845 = vmatprep.subr.bf16.mxu0 0
      %1846 = vmatpush1.bf16.msra.mxu0 %v1432
      %1847 = vmatprep.subr.bf16.mxu0 0
      %1848 = vmatpush1.bf16.msra.mxu0 %v1433
      %1849 = vmatprep.subr.bf16.mxu0 0
      %1850 = vmatpush1.bf16.msra.mxu0 %v1434
      %1851 = vmatprep.subr.bf16.mxu0 0
      %1852 = vmatpush1.bf16.msra.mxu0 %v1435
      %1853 = vmatprep.subr.bf16.mxu0 0
      %1854 = vmatpush1.bf16.msra.mxu0 %v1436
      %1855 = vmatprep.subr.bf16.mxu0 0
      %1856 = vmatpush1.bf16.msra.mxu0 %v1437
      %1857 = vmatprep.mubr.bf16.mxu0 %v741
      %1858 = vmatmul.mubr.bf16.gmra.mrb[0].mxu0 %v740
      %v1859 = vpop.f32.mrb[0].mxu0
      %v1860 = vadd.f32 %v1795, %v1859
      %v1861 = vpop.f32.mrb[0].mxu0
      %v1862 = vpop.f32.mrb[0].mxu0
      %v1863 = vadd.f32 %v1798, %v1862
      %v1864 = vpop.f32.mrb[0].mxu0
      %1865 = vmatprep.mubr.bf16.mxu0 %v757
      %1866 = vmatmul.mubr.bf16.gmra.mrb[0].mxu0 %v756
      %v1867 = vpop.f32.mrb[0].mxu0
      %v1868 = vadd.f32 %v1803, %v1867
      %v1869 = vpop.f32.mrb[0].mxu0
      %v1870 = vpop.f32.mrb[0].mxu0
      %v1871 = vadd.f32 %v1806, %v1870
      %v1872 = vpop.f32.mrb[0].mxu0
      %1873 = vmatprep.mubr.bf16.mxu0 %v773
      %1874 = vmatmul.mubr.bf16.gmra.mrb[0].mxu0 %v772
      %v1875 = vpop.f32.mrb[0].mxu0
      %v1876 = vadd.f32 %v1811, %v1875
      %v1877 = vpop.f32.mrb[0].mxu0
      %v1878 = vpop.f32.mrb[0].mxu0
      %v1879 = vadd.f32 %v1814, %v1878
      %v1880 = vpop.f32.mrb[0].mxu0
      %1881 = vmatprep.mubr.bf16.mxu0 %v789
      %1882 = vmatmul.mubr.bf16.gmra.mrb[0].mxu0 %v788
      %v1883 = vpop.f32.mrb[0].mxu0
      %v1884 = vadd.f32 %v1819, %v1883
      %v1885 = vpop.f32.mrb[0].mxu0
      %v1886 = vpop.f32.mrb[0].mxu0
      %v1887 = vadd.f32 %v1822, %v1886
      %v1888 = vpop.f32.mrb[0].mxu0
      %1889 = vdwg.mxu0
      %1890 = vmatprep.subr.bf16.mxu0 0
      %1891 = vmatpush1.bf16.msra.mxu0 %v1438
      %1892 = vmatprep.subr.bf16.mxu0 0
      %1893 = vmatpush1.bf16.msra.mxu0 %v1439
      %1894 = vmatprep.subr.bf16.mxu0 0
      %1895 = vmatpush1.bf16.msra.mxu0 %v1440
      %1896 = vmatprep.subr.bf16.mxu0 0
      %1897 = vmatpush1.bf16.msra.mxu0 %v1441
      %1898 = vmatprep.subr.bf16.mxu0 0
      %1899 = vmatpush1.bf16.msra.mxu0 %v1442
      %1900 = vmatprep.subr.bf16.mxu0 0
      %1901 = vmatpush1.bf16.msra.mxu0 %v1443
      %1902 = vmatprep.subr.bf16.mxu0 0
      %1903 = vmatpush1.bf16.msra.mxu0 %v1444
      %1904 = vmatprep.subr.bf16.mxu0 0
      %1905 = vmatpush1.bf16.msra.mxu0 %v1445
      %1906 = vmatprep.subr.bf16.mxu0 0
      %1907 = vmatpush1.bf16.msra.mxu0 %v1446
      %1908 = vmatprep.subr.bf16.mxu0 0
      %1909 = vmatpush1.bf16.msra.mxu0 %v1447
      %1910 = vmatprep.subr.bf16.mxu0 0
      %1911 = vmatpush1.bf16.msra.mxu0 %v1448
      %1912 = vmatprep.subr.bf16.mxu0 0
      %1913 = vmatpush1.bf16.msra.mxu0 %v1449
      %1914 = vmatprep.subr.bf16.mxu0 0
      %1915 = vmatpush1.bf16.msra.mxu0 %v1450
      %1916 = vmatprep.subr.bf16.mxu0 0
      %1917 = vmatpush1.bf16.msra.mxu0 %v1451
      %1918 = vmatprep.subr.bf16.mxu0 0
      %1919 = vmatpush1.bf16.msra.mxu0 %v1452
      %1920 = vmatprep.subr.bf16.mxu0 0
      %1921 = vmatpush1.bf16.msra.mxu0 %v1453
      %1922 = vmatprep.mubr.bf16.mxu0 %v743
      %1923 = vmatmul.mubr.bf16.gmra.mrb[0].mxu0 %v742
      %v1924 = vpop.f32.mrb[0].mxu0
      %v1925 = vadd.f32 %v1860, %v1924
      %v1926 = vpop.f32.mrb[0].mxu0
      %v1927 = vpop.f32.mrb[0].mxu0
      %v1928 = vadd.f32 %v1863, %v1927
      %v1929 = vpop.f32.mrb[0].mxu0
      %1930 = vmatprep.mubr.bf16.mxu0 %v759
      %1931 = vmatmul.mubr.bf16.gmra.mrb[0].mxu0 %v758
      %v1932 = vpop.f32.mrb[0].mxu0
      %v1933 = vadd.f32 %v1868, %v1932
      %v1934 = vpop.f32.mrb[0].mxu0
      %v1935 = vpop.f32.mrb[0].mxu0
      %v1936 = vadd.f32 %v1871, %v1935
      %v1937 = vpop.f32.mrb[0].mxu0
      %1938 = vmatprep.mubr.bf16.mxu0 %v775
      %1939 = vmatmul.mubr.bf16.gmra.mrb[0].mxu0 %v774
      %v1940 = vpop.f32.mrb[0].mxu0
      %v1941 = vadd.f32 %v1876, %v1940
      %v1942 = vpop.f32.mrb[0].mxu0
      %v1943 = vpop.f32.mrb[0].mxu0
      %v1944 = vadd.f32 %v1879, %v1943
      %v1945 = vpop.f32.mrb[0].mxu0
      %1946 = vmatprep.mubr.bf16.mxu0 %v791
      %1947 = vmatmul.mubr.bf16.gmra.mrb[0].mxu0 %v790
      %v1948 = vpop.f32.mrb[0].mxu0
      %v1949 = vadd.f32 %v1884, %v1948
      %v1950 = vpop.f32.mrb[0].mxu0
      %v1951 = vpop.f32.mrb[0].mxu0
      %v1952 = vadd.f32 %v1887, %v1951
      %v1953 = vpop.f32.mrb[0].mxu0
      %1954 = vdwg.mxu0
      %1955 = vmatprep.subr.bf16.mxu0 0
      %1956 = vmatpush1.bf16.msra.mxu0 %v1454
      %1957 = vmatprep.subr.bf16.mxu0 0
      %1958 = vmatpush1.bf16.msra.mxu0 %v1455
      %1959 = vmatprep.subr.bf16.mxu0 0
      %1960 = vmatpush1.bf16.msra.mxu0 %v1456
      %1961 = vmatprep.subr.bf16.mxu0 0
      %1962 = vmatpush1.bf16.msra.mxu0 %v1457
      %1963 = vmatprep.subr.bf16.mxu0 0
      %1964 = vmatpush1.bf16.msra.mxu0 %v1458
      %1965 = vmatprep.subr.bf16.mxu0 0
      %1966 = vmatpush1.bf16.msra.mxu0 %v1459
      %1967 = vmatprep.subr.bf16.mxu0 0
      %1968 = vmatpush1.bf16.msra.mxu0 %v1460
      %1969 = vmatprep.subr.bf16.mxu0 0
      %1970 = vmatpush1.bf16.msra.mxu0 %v1461
      %1971 = vmatprep.subr.bf16.mxu0 0
      %1972 = vmatpush1.bf16.msra.mxu0 %v1462
      %1973 = vmatprep.subr.bf16.mxu0 0
      %1974 = vmatpush1.bf16.msra.mxu0 %v1463
      %1975 = vmatprep.subr.bf16.mxu0 0
      %1976 = vmatpush1.bf16.msra.mxu0 %v1464
      %1977 = vmatprep.subr.bf16.mxu0 0
      %1978 = vmatpush1.bf16.msra.mxu0 %v1465
      %1979 = vmatprep.subr.bf16.mxu0 0
      %1980 = vmatpush1.bf16.msra.mxu0 %v1466
      %1981 = vmatprep.subr.bf16.mxu0 0
      %1982 = vmatpush1.bf16.msra.mxu0 %v1467
      %1983 = vmatprep.subr.bf16.mxu0 0
      %1984 = vmatpush1.bf16.msra.mxu0 %v1468
      %1985 = vmatprep.subr.bf16.mxu0 0
      %1986 = vmatpush1.bf16.msra.mxu0 %v1469
      %1987 = vmatprep.mubr.bf16.mxu0 %v745
      %1988 = vmatmul.mubr.bf16.gmra.mrb[0].mxu0 %v744
      %v1989 = vpop.f32.mrb[0].mxu0
      %v1990 = vadd.f32 %v1925, %v1989
      %v1991 = vpop.f32.mrb[0].mxu0
      %v1992 = vpop.f32.mrb[0].mxu0
      %v1993 = vadd.f32 %v1928, %v1992
      %v1994 = vpop.f32.mrb[0].mxu0
      %1995 = vmatprep.mubr.bf16.mxu0 %v761
      %1996 = vmatmul.mubr.bf16.gmra.mrb[0].mxu0 %v760
      %v1997 = vpop.f32.mrb[0].mxu0
      %v1998 = vadd.f32 %v1933, %v1997
      %v1999 = vpop.f32.mrb[0].mxu0
      %v2000 = vpop.f32.mrb[0].mxu0
      %v2001 = vadd.f32 %v1936, %v2000
      %v2002 = vpop.f32.mrb[0].mxu0
      %2003 = vmatprep.mubr.bf16.mxu0 %v777
      %2004 = vmatmul.mubr.bf16.gmra.mrb[0].mxu0 %v776
      %v2005 = vpop.f32.mrb[0].mxu0
      %v2006 = vadd.f32 %v1941, %v2005
      %v2007 = vpop.f32.mrb[0].mxu0
      %v2008 = vpop.f32.mrb[0].mxu0
      %v2009 = vadd.f32 %v1944, %v2008
      %v2010 = vpop.f32.mrb[0].mxu0
      %2011 = vmatprep.mubr.bf16.mxu0 %v793
      %2012 = vmatmul.mubr.bf16.gmra.mrb[0].mxu0 %v792
      %v2013 = vpop.f32.mrb[0].mxu0
      %v2014 = vadd.f32 %v1949, %v2013
      %v2015 = vpop.f32.mrb[0].mxu0
      %v2016 = vpop.f32.mrb[0].mxu0
      %v2017 = vadd.f32 %v1952, %v2016
      %v2018 = vpop.f32.mrb[0].mxu0
      %2019 = vdwg.mxu0
      %2020 = vmatprep.subr.bf16.mxu0 0
      %2021 = vmatpush1.bf16.msra.mxu0 %v1470
      %2022 = vmatprep.subr.bf16.mxu0 0
      %2023 = vmatpush1.bf16.msra.mxu0 %v1471
      %2024 = vmatprep.subr.bf16.mxu0 0
      %2025 = vmatpush1.bf16.msra.mxu0 %v1472
      %2026 = vmatprep.subr.bf16.mxu0 0
      %2027 = vmatpush1.bf16.msra.mxu0 %v1473
      %2028 = vmatprep.subr.bf16.mxu0 0
      %2029 = vmatpush1.bf16.msra.mxu0 %v1474
      %2030 = vmatprep.subr.bf16.mxu0 0
      %2031 = vmatpush1.bf16.msra.mxu0 %v1475
      %2032 = vmatprep.subr.bf16.mxu0 0
      %2033 = vmatpush1.bf16.msra.mxu0 %v1476
      %2034 = vmatprep.subr.bf16.mxu0 0
      %2035 = vmatpush1.bf16.msra.mxu0 %v1477
      %2036 = vmatprep.subr.bf16.mxu0 0
      %2037 = vmatpush1.bf16.msra.mxu0 %v1478
      %2038 = vmatprep.subr.bf16.mxu0 0
      %2039 = vmatpush1.bf16.msra.mxu0 %v1479
      %2040 = vmatprep.subr.bf16.mxu0 0
      %2041 = vmatpush1.bf16.msra.mxu0 %v1480
      %2042 = vmatprep.subr.bf16.mxu0 0
      %2043 = vmatpush1.bf16.msra.mxu0 %v1481
      %2044 = vmatprep.subr.bf16.mxu0 0
      %2045 = vmatpush1.bf16.msra.mxu0 %v1482
      %2046 = vmatprep.subr.bf16.mxu0 0
      %2047 = vmatpush1.bf16.msra.mxu0 %v1483
      %2048 = vmatprep.subr.bf16.mxu0 0
      %2049 = vmatpush1.bf16.msra.mxu0 %v1484
      %2050 = vmatprep.subr.bf16.mxu0 0
      %2051 = vmatpush1.bf16.msra.mxu0 %v1485
      %2052 = vmatprep.mubr.bf16.mxu0 %v747
      %2053 = vmatmul.mubr.bf16.gmra.mrb[0].mxu0 %v746
      %v2054 = vpop.f32.mrb[0].mxu0
      %v2055 = vadd.f32 %v1990, %v2054
      %v2056 = vpop.f32.mrb[0].mxu0
      %v2057 = vpop.f32.mrb[0].mxu0
      %v2058 = vadd.f32 %v1993, %v2057
      %v2059 = vpop.f32.mrb[0].mxu0
      %2060 = vmatprep.mubr.bf16.mxu0 %v763
      %2061 = vmatmul.mubr.bf16.gmra.mrb[0].mxu0 %v762
      %v2062 = vpop.f32.mrb[0].mxu0
      %v2063 = vadd.f32 %v1998, %v2062
      %v2064 = vpop.f32.mrb[0].mxu0
      %v2065 = vpop.f32.mrb[0].mxu0
      %v2066 = vadd.f32 %v2001, %v2065
      %v2067 = vpop.f32.mrb[0].mxu0
      %2068 = vmatprep.mubr.bf16.mxu0 %v779
      %2069 = vmatmul.mubr.bf16.gmra.mrb[0].mxu0 %v778
      %v2070 = vpop.f32.mrb[0].mxu0
      %v2071 = vadd.f32 %v2006, %v2070
      %v2072 = vpop.f32.mrb[0].mxu0
      %v2073 = vpop.f32.mrb[0].mxu0
      %v2074 = vadd.f32 %v2009, %v2073
      %v2075 = vpop.f32.mrb[0].mxu0
      %2076 = vmatprep.mubr.bf16.mxu0 %v795
      %2077 = vmatmul.mubr.bf16.gmra.mrb[0].mxu0 %v794
      %v2078 = vpop.f32.mrb[0].mxu0
      %v2079 = vadd.f32 %v2014, %v2078
      %v2080 = vpop.f32.mrb[0].mxu0
      %v2081 = vpop.f32.mrb[0].mxu0
      %v2082 = vadd.f32 %v2017, %v2081
      %v2083 = vpop.f32.mrb[0].mxu0
      %2084 = vdwg.mxu0
      %2085 = vmatprep.subr.bf16.mxu0 0
      %2086 = vmatpush1.bf16.msra.mxu0 %v1486
      %2087 = vmatprep.subr.bf16.mxu0 0
      %2088 = vmatpush1.bf16.msra.mxu0 %v1487
      %2089 = vmatprep.subr.bf16.mxu0 0
      %2090 = vmatpush1.bf16.msra.mxu0 %v1488
      %2091 = vmatprep.subr.bf16.mxu0 0
      %2092 = vmatpush1.bf16.msra.mxu0 %v1489
      %2093 = vmatprep.subr.bf16.mxu0 0
      %2094 = vmatpush1.bf16.msra.mxu0 %v1490
      %2095 = vmatprep.subr.bf16.mxu0 0
      %2096 = vmatpush1.bf16.msra.mxu0 %v1491
      %2097 = vmatprep.subr.bf16.mxu0 0
      %2098 = vmatpush1.bf16.msra.mxu0 %v1492
      %2099 = vmatprep.subr.bf16.mxu0 0
      %2100 = vmatpush1.bf16.msra.mxu0 %v1493
      %2101 = vmatprep.subr.bf16.mxu0 0
      %2102 = vmatpush1.bf16.msra.mxu0 %v1494
      %2103 = vmatprep.subr.bf16.mxu0 0
      %2104 = vmatpush1.bf16.msra.mxu0 %v1495
      %2105 = vmatprep.subr.bf16.mxu0 0
      %2106 = vmatpush1.bf16.msra.mxu0 %v1496
      %2107 = vmatprep.subr.bf16.mxu0 0
      %2108 = vmatpush1.bf16.msra.mxu0 %v1497
      %2109 = vmatprep.subr.bf16.mxu0 0
      %2110 = vmatpush1.bf16.msra.mxu0 %v1498
      %2111 = vmatprep.subr.bf16.mxu0 0
      %2112 = vmatpush1.bf16.msra.mxu0 %v1499
      %2113 = vmatprep.subr.bf16.mxu0 0
      %2114 = vmatpush1.bf16.msra.mxu0 %v1500
      %2115 = vmatprep.subr.bf16.mxu0 0
      %2116 = vmatpush1.bf16.msra.mxu0 %v1501
      %2117 = vmatprep.mubr.bf16.mxu0 %v749
      %2118 = vmatmul.mubr.bf16.gmra.mrb[0].mxu0 %v748
      %v2119 = vpop.f32.mrb[0].mxu0
      %v2120 = vadd.f32 %v2055, %v2119
      %v2121 = vpop.f32.mrb[0].mxu0
      %v2122 = vpop.f32.mrb[0].mxu0
      %v2123 = vadd.f32 %v2058, %v2122
      %v2124 = vpop.f32.mrb[0].mxu0
      %2125 = vmatprep.mubr.bf16.mxu0 %v765
      %2126 = vmatmul.mubr.bf16.gmra.mrb[0].mxu0 %v764
      %v2127 = vpop.f32.mrb[0].mxu0
      %v2128 = vadd.f32 %v2063, %v2127
      %v2129 = vpop.f32.mrb[0].mxu0
      %v2130 = vpop.f32.mrb[0].mxu0
      %v2131 = vadd.f32 %v2066, %v2130
      %v2132 = vpop.f32.mrb[0].mxu0
      %2133 = vmatprep.mubr.bf16.mxu0 %v781
      %2134 = vmatmul.mubr.bf16.gmra.mrb[0].mxu0 %v780
      %v2135 = vpop.f32.mrb[0].mxu0
      %v2136 = vadd.f32 %v2071, %v2135
      %v2137 = vpop.f32.mrb[0].mxu0
      %v2138 = vpop.f32.mrb[0].mxu0
      %v2139 = vadd.f32 %v2074, %v2138
      %v2140 = vpop.f32.mrb[0].mxu0
      %2141 = vmatprep.mubr.bf16.mxu0 %v797
      %2142 = vmatmul.mubr.bf16.gmra.mrb[0].mxu0 %v796
      %v2143 = vpop.f32.mrb[0].mxu0
      %v2144 = vadd.f32 %v2079, %v2143
      %v2145 = vpop.f32.mrb[0].mxu0
      %v2146 = vpop.f32.mrb[0].mxu0
      %v2147 = vadd.f32 %v2082, %v2146
      %v2148 = vpop.f32.mrb[0].mxu0
      %2149 = vdwg.mxu0
      %2150 = vst [vmem:[%s213] sm:$0xff] %v2120
      %2151 = vst [vmem:[%s213 + $0x8] sm:$0xff] %v2123
      %2152 = vst [vmem:[%s213 + $0x10] sm:$0xff] %v2128
      %2153 = vst [vmem:[%s213 + $0x18] sm:$0xff] %v2131
      %2154 = vst [vmem:[%s213 + $0x20] sm:$0xff] %v2136
      %2155 = vst [vmem:[%s213 + $0x28] sm:$0xff] %v2139
      %2156 = vst [vmem:[%s213 + $0x30] sm:$0xff] %v2144
      %2157 = vst [vmem:[%s213 + $0x38] sm:$0xff] %v2147
      %v2158 = vadd.f32 %v2120, %v2123
      %v2159 = vadd.f32 %v2158, %v2128
      %v2160 = vadd.f32 %v2159, %v2131
      %v2161 = vadd.f32 %v2160, %v2136
      %v2162 = vadd.f32 %v2161, %v2139
      %v2163 = vadd.f32 %v2162, %v2144
      %v2164 = vadd.f32 %v2163, %v2147
      %v2165 = vrot.slane %v2164, 4
      %v2166 = vadd.f32 %v2164, %v2165
      %v2167 = vrot.slane %v2166, 2
      %v2168 = vadd.f32 %v2166, %v2167
      %v2169 = vrot.slane %v2168, 1
      %v2170 = vadd.f32 %v2168, %v2169
      %2171 = vst [vmem:[%s217] sm:$0x1] %v2170
      %v2172 = vmul.f32 %v2120, %v2120
      %v2173 = vmul.f32 %v2123, %v2123
      %v2174 = vmul.f32 %v2128, %v2128
      %v2175 = vmul.f32 %v2131, %v2131
      %v2176 = vmul.f32 %v2136, %v2136
      %v2177 = vmul.f32 %v2139, %v2139
      %v2178 = vmul.f32 %v2144, %v2144
      %v2179 = vmul.f32 %v2147, %v2147
      %v2180 = vadd.f32 %v2172, %v2173
      %v2181 = vadd.f32 %v2180, %v2174
      %v2182 = vadd.f32 %v2181, %v2175
      %v2183 = vadd.f32 %v2182, %v2176
      %v2184 = vadd.f32 %v2183, %v2177
      %v2185 = vadd.f32 %v2184, %v2178
      %v2186 = vadd.f32 %v2185, %v2179
      %v2187 = vrot.slane %v2186, 4
      %v2188 = vadd.f32 %v2186, %v2187
      %v2189 = vrot.slane %v2188, 2
      %v2190 = vadd.f32 %v2188, %v2189
      %v2191 = vrot.slane %v2190, 1
      %v2192 = vadd.f32 %v2190, %v2191
      %2193 = vst [vmem:[%s220] sm:$0x1] %v2192
      %s2194 = smul.u32 8, %s16
      %p2195 = scmp.lt.s32.totalorder %s2194, 15
      %s2196 = scalar_select %p2195, %s2194, 15
      %s2197 = smul.addr %s2196, 8
      %s2198 = scalar_lea.vmem %s2, %s2197
      %p2199 = scmp.lt.s32.totalorder %s16, 1
      %s2200 = scalar_select %p2199, %s16, 1
      %s2201 = scalar_lea.vmem %s3, %s2200
      %p2202 = scmp.lt.s32.totalorder %s16, 1
      %s2203 = scalar_select %p2202, %s16, 1
      %s2204 = scalar_lea.vmem %s4, %s2203
      // Predicated region
      $region29: #{conditional_discriminator_forward.6} parent=27 // pred_check
        %p2205 = pneg %p81
      $region30: #{conditional_discriminator_forward.6} parent=27 // pred_check_branch
        %2207 = sbr.rel (%p2205) target = $region32
      $region31: #{conditional_discriminator_forward.6} parent=27 // pred_region
        %s2208 = smul.u32 8, %s16
      $region32: #{conditional_discriminator_forward.6} parent=27 // pred_fallthru
        _
      // Predicated region
      $region33: #{conditional_discriminator_forward.6} parent=27 // pred_check
        %p2209 = pneg %p107
      $region34: #{conditional_discriminator_forward.6} parent=27 // pred_check_branch
        %2211 = sbr.rel (%p2209) target = $region36
      $region35: #{conditional_discriminator_forward.6} parent=27 // pred_region
        _
      $region36: #{conditional_discriminator_forward.6} parent=27 // pred_fallthru
        _
      // Predicated region
      $region37: #{conditional_discriminator_forward.6} parent=27 // pred_check
        %p2212 = pneg %p133
      $region38: #{conditional_discriminator_forward.6} parent=27 // pred_check_branch
        %2214 = sbr.rel (%p2212) target = $region40
      $region39: #{conditional_discriminator_forward.6} parent=27 // pred_region
        _
      $region40: #{conditional_discriminator_forward.6} parent=27 // pred_fallthru
        _
    $region28: #{conditional_discriminator_forward.6} parent=5 // pred_fallthru
      _
    %p2215 = scmp.le.s32.totalorder 2, %s11
    // Predicated region
    $region41: #{conditional_discriminator_forward.6} parent=5 // pred_check
      %p2216 = pneg %p2215
    $region42: #{conditional_discriminator_forward.6} parent=5 // pred_check_branch
      %2218 = sbr.rel (%p2216) target = $region44
    $region43: #{conditional_discriminator_forward.6} parent=5 // pred_region
      %s2219 = ssub.s32 %s11, 2
      // Predicated region
      $region45: #{conditional_discriminator_forward.6} parent=43 // pred_check
        %p2220 = pneg %p87
      $region46: #{conditional_discriminator_forward.6} parent=43 // pred_check_branch
        %2222 = sbr.rel (%p2220) target = $region48
      $region47: #{conditional_discriminator_forward.6} parent=43 // pred_region
        %s2223 = smul.u32 8, %s17
        %p2224 = scmp.lt.s32.totalorder %s2223, 15
        %s2225 = scalar_select %p2224, %s2223, 15
        %s2226 = smul.addr %s2225, 8
        %s2227 = scalar_lea.vmem %s2, %s2226
      $region48: #{conditional_discriminator_forward.6} parent=43 // pred_fallthru
        _
      // Predicated region
      $region49: #{conditional_discriminator_forward.6} parent=43 // pred_check
        %p2228 = pneg %p113
      $region50: #{conditional_discriminator_forward.6} parent=43 // pred_check_branch
        %2230 = sbr.rel (%p2228) target = $region52
      $region51: #{conditional_discriminator_forward.6} parent=43 // pred_region
        %p2231 = scmp.lt.s32.totalorder %s17, 1
        %s2232 = scalar_select %p2231, %s17, 1
        %s2233 = scalar_lea.vmem %s3, %s2232
      $region52: #{conditional_discriminator_forward.6} parent=43 // pred_fallthru
        _
      // Predicated region
      $region53: #{conditional_discriminator_forward.6} parent=43 // pred_check
        %p2234 = pneg %p139
      $region54: #{conditional_discriminator_forward.6} parent=43 // pred_check_branch
        %2236 = sbr.rel (%p2234) target = $region56
      $region55: #{conditional_discriminator_forward.6} parent=43 // pred_region
        %p2237 = scmp.lt.s32.totalorder %s17, 1
        %s2238 = scalar_select %p2237, %s17, 1
        %s2239 = scalar_lea.vmem %s4, %s2238
      $region56: #{conditional_discriminator_forward.6} parent=43 // pred_fallthru
        _
    $region44: #{conditional_discriminator_forward.6} parent=5 // pred_fallthru
      _
  $region6: #{conditional_discriminator_forward.6} parent=0 // loop_footer
    %s15 = sadd.s32 1, %s11
  $region7: #{conditional_discriminator_forward.6} parent=0 // loop_footer_branch
    %10 = sbr.rel target = $region3
  $region8: #{conditional_discriminator_forward.6} parent=0 // loop_exit
    _

// kernel: conditional_discriminator_forward.9
$region0: #{conditional_discriminator_forward.9}
  #allocation0 [shape = 'u32[]', space=smem, size = 0x4, offset = 0x4, fixed_abs, tag = 'smem constant byte address 0x4 - core index']
  #allocation1 [shape = 'u32[144,128]{1,0:T(1,128)}', space=vmem, size = 0x12000, scoped, tag = 'internal scratch']
  #allocation2 [shape = 'f32[1,1]{1,0:T(1,128)S(1)}', space=vmem, size = 0x200, scoped, tag = 'scoped memory for conditional_discriminator_forward.9']
  %s0 = inlined_call_operand.vmem [shape: f32[32,256], index: 0, kind: input, shape index: {}]
  %s1 = inlined_call_operand.vmem [shape: f32[2,1,256], index: 1, kind: input, shape index: {}]
  %s2 = inlined_call_operand.vmem [shape: f32[2,1,256], index: 2, kind: input, shape index: {}]
  %s3 = inlined_call_operand.vmem [shape: f32[1,256], index: 3, kind: input, shape index: {}]
  %s4 = inlined_call_operand.vmem [shape: f32[1,256], index: 4, kind: input, shape index: {}]
  %s5 = inlined_call_operand.vmem [shape: f32[16,256], index: 5, kind: input, shape index: {}]
  %s6 = inlined_call_operand.<no memory space> [shape: f32[1,1], index: 6, kind: input, shape index: {}]
  %s7 = inlined_call_operand.vmem [shape: f32[2,1,1], index: 7, kind: output, shape index: {}]
  %s8 = sld [smem:[#allocation0]]
  $region61: #{conditional_discriminator_forward.9} parent=0
    _
  %s10 = ssub.s32 1, %s8
  %s11 = scalar_select 0, %s10, %s8
  %v12 = vstv %s6
  %13 = vst [vmem:[#allocation2] sm:$0x1] %v12
  loop: start=0, step=1, limit=4
  $region2: #{conditional_discriminator_forward.9} parent=0 // loop_pre_header
    _
  $region3: #{conditional_discriminator_forward.9} parent=0 // loop_header
    %s15 = sphi 0, %s19
    %p16 = scmp.ge.s32.totalorder %s15, 4
    %s25 = sphi 0, %s27
    %s28 = sphi 0, %s25
    %s29 = sphi 0, %s28
    %s45 = sphi 0, %s29
    %s49 = sphi 0, %s49
    %s51 = sphi 0, %s49
    %s52 = sphi 0, %s51
    %s66 = sphi 0, %s52
    %s70 = sphi 0, %s70
    %s72 = sphi 0, %s70
    %s73 = sphi 0, %s72
    %s87 = sphi 0, %s73
    %s91 = sphi 0, %s91
    %s93 = sphi 0, %s91
    %s94 = sphi 0, %s93
    %s108 = sphi 0, %s94
    %s112 = sphi 0, %s112
    %s114 = sphi 0, %s112
    %s115 = sphi 0, %s114
    %s129 = sphi 0, %s115
    %s133 = sphi 0, %s133
    %s135 = sphi 0, %s133
    %s136 = sphi 0, %s135
    %s150 = sphi 0, %s136
    %s154 = sphi 0, %s154
    %s156 = sphi 0, %s154
    %s157 = sphi 0, %s156
    %s171 = sphi 0, %s157
    %s177 = sphi 0, %s179
    %s180 = sphi 0, %s177
    %s181 = sphi 0, %s180
    %s197 = sphi 0, %s181
  $region4: #{conditional_discriminator_forward.9} parent=0 // loop_header_branch
    %18 = sbr.rel (%p16) target = $region8
  $region5: #{conditional_discriminator_forward.9} parent=0 // loop_body
    %s20 = ssub.s32 %s15, 1
    %s21 = ssub.s32 %s15, 2
    %s22 = sadd.s32 %s15, 1
    %s23 = ssub.s32 %s15, %s22
    %p24 = scmp.eq.s32.totalorder %s23, 0
    %s26 = sadd.s32 %s25, 1
    %s27 = scalar_select %p24, %s25, %s26
    %p30 = pneg %p24
    %p31 = scmp.eq.s32.totalorder %s15, 1
    %p32 = por %p30, %p31
    %p33 = scmp.ne.s32.totalorder %s25, %s28
    %p34 = scmp.eq.s32.totalorder %s15, 0
    %p35 = por %p33, %p34
    %p36 = scmp.ne.s32.totalorder %s25, %s28
    %p37 = scmp.eq.s32.totalorder %s20, 1
    %p38 = por %p36, %p37
    %p39 = scmp.ne.s32.totalorder %s28, %s29
    %p40 = scmp.eq.s32.totalorder %s20, 0
    %p41 = por %p39, %p40
    %p42 = scmp.ne.s32.totalorder %s28, %s29
    %p43 = scmp.eq.s32.totalorder %s21, 1
    %p44 = por %p42, %p43
    %p46 = scmp.ne.s32.totalorder %s29, %s45
    %p47 = scmp.eq.s32.totalorder %s21, 0
    %p48 = por %p46, %p47
    %s50 = sadd.s32 %s49, 1
    %p53 = scmp.eq.s32.totalorder %s15, 1
    %p54 = scmp.ne.s32.totalorder %s49, %s51
    %p55 = scmp.eq.s32.totalorder %s15, 0
    %p56 = por %p54, %p55
    %p57 = scmp.ne.s32.totalorder %s49, %s51
    %p58 = scmp.eq.s32.totalorder %s20, 1
    %p59 = por %p57, %p58
    %p60 = scmp.ne.s32.totalorder %s51, %s52
    %p61 = scmp.eq.s32.totalorder %s20, 0
    %p62 = por %p60, %p61
    %p63 = scmp.ne.s32.totalorder %s51, %s52
    %p64 = scmp.eq.s32.totalorder %s21, 1
    %p65 = por %p63, %p64
    %p67 = scmp.ne.s32.totalorder %s52, %s66
    %p68 = scmp.eq.s32.totalorder %s21, 0
    %p69 = por %p67, %p68
    %s71 = sadd.s32 %s70, 1
    %p74 = scmp.eq.s32.totalorder %s15, 1
    %p75 = scmp.ne.s32.totalorder %s70, %s72
    %p76 = scmp.eq.s32.totalorder %s15, 0
    %p77 = por %p75, %p76
    %p78 = scmp.ne.s32.totalorder %s70, %s72
    %p79 = scmp.eq.s32.totalorder %s20, 1
    %p80 = por %p78, %p79
    %p81 = scmp.ne.s32.totalorder %s72, %s73
    %p82 = scmp.eq.s32.totalorder %s20, 0
    %p83 = por %p81, %p82
    %p84 = scmp.ne.s32.totalorder %s72, %s73
    %p85 = scmp.eq.s32.totalorder %s21, 1
    %p86 = por %p84, %p85
    %p88 = scmp.ne.s32.totalorder %s73, %s87
    %p89 = scmp.eq.s32.totalorder %s21, 0
    %p90 = por %p88, %p89
    %s92 = sadd.s32 %s91, 1
    %p95 = scmp.eq.s32.totalorder %s15, 1
    %p96 = scmp.ne.s32.totalorder %s91, %s93
    %p97 = scmp.eq.s32.totalorder %s15, 0
    %p98 = por %p96, %p97
    %p99 = scmp.ne.s32.totalorder %s91, %s93
    %p100 = scmp.eq.s32.totalorder %s20, 1
    %p101 = por %p99, %p100
    %p102 = scmp.ne.s32.totalorder %s93, %s94
    %p103 = scmp.eq.s32.totalorder %s20, 0
    %p104 = por %p102, %p103
    %p105 = scmp.ne.s32.totalorder %s93, %s94
    %p106 = scmp.eq.s32.totalorder %s21, 1
    %p107 = por %p105, %p106
    %p109 = scmp.ne.s32.totalorder %s94, %s108
    %p110 = scmp.eq.s32.totalorder %s21, 0
    %p111 = por %p109, %p110
    %s113 = sadd.s32 %s112, 1
    %p116 = scmp.eq.s32.totalorder %s15, 1
    %p117 = scmp.ne.s32.totalorder %s112, %s114
    %p118 = scmp.eq.s32.totalorder %s15, 0
    %p119 = por %p117, %p118
    %p120 = scmp.ne.s32.totalorder %s112, %s114
    %p121 = scmp.eq.s32.totalorder %s20, 1
    %p122 = por %p120, %p121
    %p123 = scmp.ne.s32.totalorder %s114, %s115
    %p124 = scmp.eq.s32.totalorder %s20, 0
    %p125 = por %p123, %p124
    %p126 = scmp.ne.s32.totalorder %s114, %s115
    %p127 = scmp.eq.s32.totalorder %s21, 1
    %p128 = por %p126, %p127
    %p130 = scmp.ne.s32.totalorder %s115, %s129
    %p131 = scmp.eq.s32.totalorder %s21, 0
    %p132 = por %p130, %p131
    %s134 = sadd.s32 %s133, 1
    %p137 = scmp.eq.s32.totalorder %s15, 1
    %p138 = scmp.ne.s32.totalorder %s133, %s135
    %p139 = scmp.eq.s32.totalorder %s15, 0
    %p140 = por %p138, %p139
    %p141 = scmp.ne.s32.totalorder %s133, %s135
    %p142 = scmp.eq.s32.totalorder %s20, 1
    %p143 = por %p141, %p142
    %p144 = scmp.ne.s32.totalorder %s135, %s136
    %p145 = scmp.eq.s32.totalorder %s20, 0
    %p146 = por %p144, %p145
    %p147 = scmp.ne.s32.totalorder %s135, %s136
    %p148 = scmp.eq.s32.totalorder %s21, 1
    %p149 = por %p147, %p148
    %p151 = scmp.ne.s32.totalorder %s136, %s150
    %p152 = scmp.eq.s32.totalorder %s21, 0
    %p153 = por %p151, %p152
    %s155 = sadd.s32 %s154, 1
    %p158 = scmp.eq.s32.totalorder %s15, 1
    %p159 = scmp.ne.s32.totalorder %s154, %s156
    %p160 = scmp.eq.s32.totalorder %s15, 0
    %p161 = por %p159, %p160
    %p162 = scmp.ne.s32.totalorder %s154, %s156
    %p163 = scmp.eq.s32.totalorder %s20, 1
    %p164 = por %p162, %p163
    %p165 = scmp.ne.s32.totalorder %s156, %s157
    %p166 = scmp.eq.s32.totalorder %s20, 0
    %p167 = por %p165, %p166
    %p168 = scmp.ne.s32.totalorder %s156, %s157
    %p169 = scmp.eq.s32.totalorder %s21, 1
    %p170 = por %p168, %p169
    %p172 = scmp.ne.s32.totalorder %s157, %s171
    %p173 = scmp.eq.s32.totalorder %s21, 0
    %p174 = por %p172, %p173
    %s175 = ssub.s32 %s15, %s22
    %p176 = scmp.eq.s32.totalorder %s175, 0
    %s178 = sadd.s32 %s177, 1
    %s179 = scalar_select %p176, %s177, %s178
    %p182 = pneg %p176
    %p183 = scmp.eq.s32.totalorder %s15, 1
    %p184 = por %p182, %p183
    %p185 = scmp.ne.s32.totalorder %s177, %s180
    %p186 = scmp.eq.s32.totalorder %s15, 0
    %p187 = por %p185, %p186
    %p188 = scmp.ne.s32.totalorder %s177, %s180
    %p189 = scmp.eq.s32.totalorder %s20, 1
    %p190 = por %p188, %p189
    %p191 = scmp.ne.s32.totalorder %s180, %s181
    %p192 = scmp.eq.s32.totalorder %s20, 0
    %p193 = por %p191, %p192
    %p194 = scmp.ne.s32.totalorder %s180, %s181
    %p195 = scmp.eq.s32.totalorder %s21, 1
    %p196 = por %p194, %p195
    %p198 = scmp.ne.s32.totalorder %s181, %s197
    %p199 = scmp.eq.s32.totalorder %s21, 0
    %p200 = por %p198, %p199
    %p201 = scmp.le.s32.totalorder 1, %s15
    %p202 = scmp.lt.s32.totalorder %s15, 3
    %p203 = pnand %p201, %p202
    %p204 = pneg %p203
    // Predicated region
    $region9: #{conditional_discriminator_forward.9} parent=5 // pred_check
      _
    $region10: #{conditional_discriminator_forward.9} parent=5 // pred_check_branch
      %206 = sbr.rel (%p203) target = $region12
    $region11: #{conditional_discriminator_forward.9} parent=5 // pred_region
      %s207 = ssub.s32 %s15, 1
      // Predicated region
      $region13: #{conditional_discriminator_forward.9} parent=11 // pred_check
        %p208 = pneg %p62
      $region14: #{conditional_discriminator_forward.9} parent=11 // pred_check_branch
        %210 = sbr.rel (%p208) target = $region16
      $region15: #{conditional_discriminator_forward.9} parent=11 // pred_region
        _
      $region16: #{conditional_discriminator_forward.9} parent=11 // pred_fallthru
        _
      // Predicated region
      $region17: #{conditional_discriminator_forward.9} parent=11 // pred_check
        %p211 = pneg %p83
      $region18: #{conditional_discriminator_forward.9} parent=11 // pred_check_branch
        %213 = sbr.rel (%p211) target = $region20
      $region19: #{conditional_discriminator_forward.9} parent=11 // pred_region
        _
      $region20: #{conditional_discriminator_forward.9} parent=11 // pred_fallthru
        _
      // Predicated region
      $region21: #{conditional_discriminator_forward.9} parent=11 // pred_check
        %p214 = pneg %p104
      $region22: #{conditional_discriminator_forward.9} parent=11 // pred_check_branch
        %216 = sbr.rel (%p214) target = $region24
      $region23: #{conditional_discriminator_forward.9} parent=11 // pred_region
        _
      $region24: #{conditional_discriminator_forward.9} parent=11 // pred_fallthru
        _
      // Predicated region
      $region25: #{conditional_discriminator_forward.9} parent=11 // pred_check
        %p217 = pneg %p125
      $region26: #{conditional_discriminator_forward.9} parent=11 // pred_check_branch
        %219 = sbr.rel (%p217) target = $region28
      $region27: #{conditional_discriminator_forward.9} parent=11 // pred_region
        _
      $region28: #{conditional_discriminator_forward.9} parent=11 // pred_fallthru
        _
      // Predicated region
      $region29: #{conditional_discriminator_forward.9} parent=11 // pred_check
        %p220 = pneg %p146
      $region30: #{conditional_discriminator_forward.9} parent=11 // pred_check_branch
        %222 = sbr.rel (%p220) target = $region32
      $region31: #{conditional_discriminator_forward.9} parent=11 // pred_region
        _
      $region32: #{conditional_discriminator_forward.9} parent=11 // pred_fallthru
        _
      // Predicated region
      $region33: #{conditional_discriminator_forward.9} parent=11 // pred_check
        %p223 = pneg %p167
      $region34: #{conditional_discriminator_forward.9} parent=11 // pred_check_branch
        %225 = sbr.rel (%p223) target = $region36
      $region35: #{conditional_discriminator_forward.9} parent=11 // pred_region
        _
      $region36: #{conditional_discriminator_forward.9} parent=11 // pred_fallthru
        _
    $region12: #{conditional_discriminator_forward.9} parent=5 // pred_fallthru
      _
    %p226 = scmp.lt.s32.totalorder %s15, 2
    // Predicated region
    $region37: #{conditional_discriminator_forward.9} parent=5 // pred_check
      %p227 = pneg %p226
    $region38: #{conditional_discriminator_forward.9} parent=5 // pred_check_branch
      %229 = sbr.rel (%p227) target = $region40
    $region39: #{conditional_discriminator_forward.9} parent=5 // pred_region
      // Predicated region
      $region41: #{conditional_discriminator_forward.9} parent=39 // pred_check
        %p230 = pneg %p35
      $region42: #{conditional_discriminator_forward.9} parent=39 // pred_check_branch
        %232 = sbr.rel (%p230) target = $region44
      $region43: #{conditional_discriminator_forward.9} parent=39 // pred_region
        %s233 = smul.u32 2, %s15
        %p234 = scmp.lt.s32.totalorder %s233, 3
        %s235 = scalar_select %p234, %s233, 3
        %s236 = smul.addr %s235, 2
        %s237 = smul.addr %s236, 8
        %s238 = scalar_lea.vmem %s0, %s237
        %s239 = smul.u32 2, %s15
      $region44: #{conditional_discriminator_forward.9} parent=39 // pred_fallthru
        _
    $region40: #{conditional_discriminator_forward.9} parent=5 // pred_fallthru
      _
    %p240 = scmp.le.s32.totalorder 1, %s15
    %p241 = scmp.lt.s32.totalorder %s15, 3
    %p242 = pnand %p240, %p241
    %p243 = pneg %p242
    // Predicated region
    $region45: #{conditional_discriminator_forward.9} parent=5 // pred_check
      _
    $region46: #{conditional_discriminator_forward.9} parent=5 // pred_check_branch
      %245 = sbr.rel (%p242) target = $region48
    $region47: #{conditional_discriminator_forward.9} parent=5 // pred_region
      %s246 = ssub.s32 %s15, 1
      %s247 = smul.u32 2, %s20
      %p248 = scmp.lt.s32.totalorder %s247, 3
      %s249 = scalar_select %p248, %s247, 3
      %s250 = smul.addr %s249, 2
      %s251 = smul.addr %s250, 8
      %s252 = scalar_lea.vmem %s0, %s251
      %p253 = pneg %p41
      %p254 = pneg %p38
      %p255 = pneg %p62
      %p256 = pneg %p59
      %p257 = pneg %p83
      %p258 = pneg %p80
      %p259 = pneg %p104
      %p260 = pneg %p101
      %p261 = pneg %p125
      %p262 = pneg %p122
      %p263 = pneg %p146
      %p264 = pneg %p143
      %p265 = pneg %p167
      %p266 = pneg %p164
      %p267 = pneg %p193
      %p268 = pneg %p190
      %p269 = scmp.lt.s32.totalorder %s20, 1
      %s270 = scalar_select %p269, %s20, 1
      %s271 = scalar_lea.vmem %s7, %s270
      %s272 = smul.u32 2, %s20
      %p273 = scmp.lt.s32.totalorder %s272, 3
      %s274 = scalar_select %p273, %s272, 3
      %s275 = smul.addr %s274, 2
      %s276 = smul.addr %s275, 8
      %s277 = scalar_lea.vmem %s0, %s276
      %s278 = smul.u32 2, %s20
      %p279 = scmp.lt.s32.totalorder %s20, 1
      %s280 = scalar_select %p279, %s20, 1
      %s281 = scalar_lea.vmem %s7, %s280
      %v282 = vld [vmem:[%s1] sm:$0x3]
      %v283 = vld [vmem:[%s1 + $0x2] sm:$0x3]
      %v286 = vlaneseq
      %v287 = vshrl.u32 %v286, 7
      %v288 = vsub.s32 0, %v287
      %v289 = vrot.slane %v282, %v288
      %v290 = vlaneseq
      %v291 = vshrl.u32 %v290, 7
      %v292 = vsub.s32 1, %v291
      %v293 = vrot.slane %v282, %v292
      %v294 = vlaneseq
      %v295 = vshrl.u32 %v294, 7
      %v296 = vsub.s32 0, %v295
      %v297 = vrot.slane %v283, %v296
      %v298 = vlaneseq
      %v299 = vshrl.u32 %v298, 7
      %v300 = vsub.s32 1, %v299
      %v301 = vrot.slane %v283, %v300
      %vm306 = vcmask 1040384
      %v307 = vsel %vm306, %v289, 0.0
      %v308 = vsel %vm306, %v297, 0.0
      %v309 = vadd.f32 %v307, %v308
      %v310 = vsel %vm306, %v293, 0.0
      %v311 = vsel %vm306, %v301, 0.0
      %v312 = vadd.f32 %v310, %v311
      %v313 = vmul.f32 %v309, 0.03125
      %v314 = vmul.f32 %v312, 0.03125
      %v315 = vld [vmem:[%s2] sm:$0x3]
      %v316 = vld [vmem:[%s2 + $0x2] sm:$0x3]
      %v319 = vlaneseq
      %v320 = vshrl.u32 %v319, 7
      %v321 = vsub.s32 0, %v320
      %v322 = vrot.slane %v315, %v321
      %v323 = vlaneseq
      %v324 = vshrl.u32 %v323, 7
      %v325 = vsub.s32 1, %v324
      %v326 = vrot.slane %v315, %v325
      %v327 = vlaneseq
      %v328 = vshrl.u32 %v327, 7
      %v329 = vsub.s32 0, %v328
      %v330 = vrot.slane %v316, %v329
      %v331 = vlaneseq
      %v332 = vshrl.u32 %v331, 7
      %v333 = vsub.s32 1, %v332
      %v334 = vrot.slane %v316, %v333
      %v339 = vsel %vm306, %v322, 0.0
      %v340 = vsel %vm306, %v330, 0.0
      %v341 = vadd.f32 %v339, %v340
      %v342 = vsel %vm306, %v326, 0.0
      %v343 = vsel %vm306, %v334, 0.0
      %v344 = vadd.f32 %v342, %v343
      %v345 = vmul.f32 %v341, 0.03125
      %v346 = vmul.f32 %v344, 0.03125
      %v347 = vmul.f32 %v313, %v313
      %v348 = vmul.f32 %v314, %v314
      %v349 = vsub.f32 %v345, %v347
      %v350 = vsub.f32 %v346, %v348
      %v351 = vld [vmem:[%s3] sm:$0x3]
      %v352 = vadd.f32 %v349, 1e-05
      %v353 = vadd.f32 %v350, 1e-05
      %v354 = vrsqrt.pop %v352
      %v355 = vrsqrt.pop %v353
      %v358 = vcombine.low %v354, %v355
      %v360 = vunpack.c.l.s4 1966171168
      %v361 = vunpack.c.0.s8 %v360
      %v362 = vlaneseq
      %v363 = vshrl.u32 %v362, 7
      %v364 = vsub.s32 %v361, %v363
      %v365 = vrot.slane %v358, %v364
      %v367 = vunpack.c.l.s4 1966171168
      %v368 = vunpack.c.0.s8 %v367
      %v369 = vlaneseq
      %v370 = vshrl.u32 %v369, 7
      %v371 = vsub.s32 %v368, %v370
      %v372 = vrot.slane %v365, %v371
      %v374 = vmul.f32 %v351, %v372
      %v375 = vld [vmem:[%s4] sm:$0x3]
      %v377 = vlaneseq
      %v378 = vshrl.u32 %v377, 7
      %v379 = vsub.s32 0, %v378
      %v380 = vrot.slane %v374, %v379
      %v381 = vlaneseq
      %v382 = vshrl.u32 %v381, 7
      %v383 = vsub.s32 1, %v382
      %v384 = vrot.slane %v374, %v383
      %v387 = vmul.f32 %v313, %v380
      %v388 = vmul.f32 %v314, %v384
      %v391 = vcombine.low %v387, %v388
      %v393 = vunpack.c.l.s4 1966171168
      %v394 = vunpack.c.0.s8 %v393
      %v395 = vlaneseq
      %v396 = vshrl.u32 %v395, 7
      %v397 = vsub.s32 %v394, %v396
      %v398 = vrot.slane %v391, %v397
      %v400 = vunpack.c.l.s4 1966171168
      %v401 = vunpack.c.0.s8 %v400
      %v402 = vlaneseq
      %v403 = vshrl.u32 %v402, 7
      %v404 = vsub.s32 %v401, %v403
      %v405 = vrot.slane %v398, %v404
      %v407 = vsub.f32 %v375, %v405
      %v408 = vld [vmem:[%s277] sm:$0xff]
      %v409 = vld [vmem:[%s277 + $0x8] sm:$0xff]
      %v410 = vld [vmem:[%s277 + $0x10] sm:$0xff]
      %v411 = vld [vmem:[%s277 + $0x18] sm:$0xff]
      %v412 = vmul.f32 %v408, %v380
      %v413 = vmul.f32 %v409, %v384
      %v414 = vmul.f32 %v410, %v380
      %v415 = vmul.f32 %v411, %v384
      %v417 = vlaneseq
      %v418 = vshrl.u32 %v417, 7
      %v419 = vsub.s32 0, %v418
      %v420 = vrot.slane %v407, %v419
      %v421 = vlaneseq
      %v422 = vshrl.u32 %v421, 7
      %v423 = vsub.s32 1, %v422
      %v424 = vrot.slane %v407, %v423
      %v427 = vadd.f32 %v412, %v420
      %v428 = vadd.f32 %v413, %v424
      %v429 = vadd.f32 %v414, %v420
      %v430 = vadd.f32 %v415, %v424
      %vm431 = vcmp.ge.f32.partialorder %v427, 0.0
      %vm432 = vcmp.ge.f32.partialorder %v428, 0.0
      %vm433 = vcmp.ge.f32.partialorder %v429, 0.0
      %vm434 = vcmp.ge.f32.partialorder %v430, 0.0
      %v435 = vmul.f32 %v427, 0.2
      %v436 = vmul.f32 %v428, 0.2
      %v437 = vmul.f32 %v429, 0.2
      %v438 = vmul.f32 %v430, 0.2
      %v439 = vsel %vm431, %v427, %v435
      %v440 = vsel %vm432, %v428, %v436
      %v441 = vsel %vm433, %v429, %v437
      %v442 = vsel %vm434, %v430, %v438
      %v443 = vld [vmem:[%s5] sm:$0xff]
      %v444 = vld [vmem:[%s5 + $0x8] sm:$0xff]
      %v445 = vld [vmem:[%s5 + $0x10] sm:$0xff]
      %v446 = vld [vmem:[%s5 + $0x18] sm:$0xff]
      %v447 = vmul.f32 %v439, %v443
      %v448 = vmul.f32 %v440, %v444
      %v449 = vmul.f32 %v441, %v445
      %v450 = vmul.f32 %v442, %v446
      %v451 = vadd.f32 %v447, %v448
      %452 = vadd.xlane.f32.xlu0 %v451
      %v453 = vpop.xlane.xlu0 %452
      %v454 = vadd.f32 %v449, %v450
      %455 = vadd.xlane.f32.xlu0 %v454
      %v456 = vpop.xlane.xlu0 %455
      %v457 = vadd.f32 %v453, %v456
      %v458 = vrot.slane %v457, 4
      %v459 = vadd.f32 %v457, %v458
      %v460 = vrot.slane %v459, 2
      %v461 = vadd.f32 %v459, %v460
      %v462 = vrot.slane %v461, 1
      %v463 = vadd.f32 %v461, %v462
      %v464 = vld [vmem:[#allocation2] sm:$0x1]
      %v465 = vadd.f32 %v463, %v464
      %vm466 = vcmask 0
      %467 = vst.msk [vmem:[%s281] sm:$0x1] %vm466, %v465
      %p468 = scmp.lt.s32.totalorder %s20, 1
      %s469 = scalar_select %p468, %s20, 1
      %s470 = scalar_lea.vmem %s7, %s469
      // Predicated region
      $region49: #{conditional_discriminator_forward.9} parent=47 // pred_check
        %p471 = pneg %p190
      $region50: #{conditional_discriminator_forward.9} parent=47 // pred_check_branch
        %473 = sbr.rel (%p471) target = $region52
      $region51: #{conditional_discriminator_forward.9} parent=47 // pred_region
        _
      $region52: #{conditional_discriminator_forward.9} parent=47 // pred_fallthru
        _
    $region48: #{conditional_discriminator_forward.9} parent=5 // pred_fallthru
      _
    %p474 = scmp.le.s32.totalorder 2, %s15
    // Predicated region
    $region53: #{conditional_discriminator_forward.9} parent=5 // pred_check
      %p475 = pneg %p474
    $region54: #{conditional_discriminator_forward.9} parent=5 // pred_check_branch
      %477 = sbr.rel (%p475) target = $region56
    $region55: #{conditional_discriminator_forward.9} parent=5 // pred_region
      %s478 = ssub.s32 %s15, 2
      // Predicated region
      $region57: #{conditional_discriminator_forward.9} parent=55 // pred_check
        %p479 = pneg %p196
      $region58: #{conditional_discriminator_forward.9} parent=55 // pred_check_branch
        %481 = sbr.rel (%p479) target = $region60
      $region59: #{conditional_discriminator_forward.9} parent=55 // pred_region
        %p482 = scmp.lt.s32.totalorder %s21, 1
        %s483 = scalar_select %p482, %s21, 1
        %s484 = scalar_lea.vmem %s7, %s483
      $region60: #{conditional_discriminator_forward.9} parent=55 // pred_fallthru
        _
    $region56: #{conditional_discriminator_forward.9} parent=5 // pred_fallthru
      _
  $region6: #{conditional_discriminator_forward.9} parent=0 // loop_footer
    %s19 = sadd.s32 1, %s15
  $region7: #{conditional_discriminator_forward.9} parent=0 // loop_footer_branch
    %14 = sbr.rel target = $region3
  $region8: #{conditional_discriminator_forward.9} parent=0 // loop_exit
    _

// kernel: conditional_discriminator_forward.8
$region0: #{conditional_discriminator_forward.8}
  #allocation0 [shape = 'u32[]', space=smem, size = 0x4, offset = 0x4, fixed_abs, tag = 'smem constant byte address 0x4 - core index']
  #allocation1 [shape = 'u32[144,128]{1,0:T(1,128)}', space=vmem, size = 0x12000, scoped, tag = 'internal scratch']
  %s0 = inlined_call_operand.vmem [shape: bf16[32,2048], index: 0, kind: input, shape index: {}]
  %s1 = inlined_call_operand.vmem [shape: bf16[2048,256], index: 1, kind: input, shape index: {}]
  %s2 = inlined_call_operand.vmem [shape: f32[32,256], index: 2, kind: output, shape index: {0}]
  %s3 = inlined_call_operand.vmem [shape: f32[2,1,256], index: 3, kind: output, shape index: {1}]
  %s4 = inlined_call_operand.vmem [shape: f32[2,1,256], index: 4, kind: output, shape index: {2}]
  %5 = xla_tuple %s2, %s3, %s4
  %s6 = sld [smem:[#allocation0]]
  $region57: #{conditional_discriminator_forward.8} parent=0
    _
  %s8 = ssub.s32 1, %s6
  %s9 = scalar_select 0, %s8, %s6
  loop: start=0, step=1, limit=4
  $region2: #{conditional_discriminator_forward.8} parent=0 // loop_pre_header
    _
  $region3: #{conditional_discriminator_forward.8} parent=0 // loop_header
    %s11 = sphi 0, %s15
    %p12 = scmp.ge.s32.totalorder %s11, 4
    %s21 = sphi 0, %s23
    %s24 = sphi 0, %s21
    %s25 = sphi 0, %s24
    %s41 = sphi 0, %s25
    %s45 = sphi 0, %s45
    %s47 = sphi 0, %s45
    %s48 = sphi 0, %s47
    %s62 = sphi 0, %s48
    %s68 = sphi 0, %s70
    %s71 = sphi 0, %s68
    %s72 = sphi 0, %s71
    %s88 = sphi 0, %s72
    %s94 = sphi 0, %s96
    %s97 = sphi 0, %s94
    %s98 = sphi 0, %s97
    %s114 = sphi 0, %s98
    %s120 = sphi 0, %s122
    %s123 = sphi 0, %s120
    %s124 = sphi 0, %s123
    %s140 = sphi 0, %s124
  $region4: #{conditional_discriminator_forward.8} parent=0 // loop_header_branch
    %14 = sbr.rel (%p12) target = $region8
  $region5: #{conditional_discriminator_forward.8} parent=0 // loop_body
    %s16 = ssub.s32 %s11, 1
    %s17 = ssub.s32 %s11, 2
    %s18 = sadd.s32 %s11, 1
    %s19 = ssub.s32 %s11, %s18
    %p20 = scmp.eq.s32.totalorder %s19, 0
    %s22 = sadd.s32 %s21, 1
    %s23 = scalar_select %p20, %s21, %s22
    %p26 = pneg %p20
    %p27 = scmp.eq.s32.totalorder %s11, 1
    %p28 = por %p26, %p27
    %p29 = scmp.ne.s32.totalorder %s21, %s24
    %p30 = scmp.eq.s32.totalorder %s11, 0
    %p31 = por %p29, %p30
    %p32 = scmp.ne.s32.totalorder %s21, %s24
    %p33 = scmp.eq.s32.totalorder %s16, 1
    %p34 = por %p32, %p33
    %p35 = scmp.ne.s32.totalorder %s24, %s25
    %p36 = scmp.eq.s32.totalorder %s16, 0
    %p37 = por %p35, %p36
    %p38 = scmp.ne.s32.totalorder %s24, %s25
    %p39 = scmp.eq.s32.totalorder %s17, 1
    %p40 = por %p38, %p39
    %p42 = scmp.ne.s32.totalorder %s25, %s41
    %p43 = scmp.eq.s32.totalorder %s17, 0
    %p44 = por %p42, %p43
    %s46 = sadd.s32 %s45, 1
    %p49 = scmp.eq.s32.totalorder %s11, 1
    %p50 = scmp.ne.s32.totalorder %s45, %s47
    %p51 = scmp.eq.s32.totalorder %s11, 0
    %p52 = por %p50, %p51
    %p53 = scmp.ne.s32.totalorder %s45, %s47
    %p54 = scmp.eq.s32.totalorder %s16, 1
    %p55 = por %p53, %p54
    %p56 = scmp.ne.s32.totalorder %s47, %s48
    %p57 = scmp.eq.s32.totalorder %s16, 0
    %p58 = por %p56, %p57
    %p59 = scmp.ne.s32.totalorder %s47, %s48
    %p60 = scmp.eq.s32.totalorder %s17, 1
    %p61 = por %p59, %p60
    %p63 = scmp.ne.s32.totalorder %s48, %s62
    %p64 = scmp.eq.s32.totalorder %s17, 0
    %p65 = por %p63, %p64
    %s66 = ssub.s32 %s11, %s18
    %p67 = scmp.eq.s32.totalorder %s66, 0
    %s69 = sadd.s32 %s68, 1
    %s70 = scalar_select %p67, %s68, %s69
    %p73 = pneg %p67
    %p74 = scmp.eq.s32.totalorder %s11, 1
    %p75 = por %p73, %p74
    %p76 = scmp.ne.s32.totalorder %s68, %s71
    %p77 = scmp.eq.s32.totalorder %s11, 0
    %p78 = por %p76, %p77
    %p79 = scmp.ne.s32.totalorder %s68, %s71
    %p80 = scmp.eq.s32.totalorder %s16, 1
    %p81 = por %p79, %p80
    %p82 = scmp.ne.s32.totalorder %s71, %s72
    %p83 = scmp.eq.s32.totalorder %s16, 0
    %p84 = por %p82, %p83
    %p85 = scmp.ne.s32.totalorder %s71, %s72
    %p86 = scmp.eq.s32.totalorder %s17, 1
    %p87 = por %p85, %p86
    %p89 = scmp.ne.s32.totalorder %s72, %s88
    %p90 = scmp.eq.s32.totalorder %s17, 0
    %p91 = por %p89, %p90
    %s92 = ssub.s32 %s11, %s18
    %p93 = scmp.eq.s32.totalorder %s92, 0
    %s95 = sadd.s32 %s94, 1
    %s96 = scalar_select %p93, %s94, %s95
    %p99 = pneg %p93
    %p100 = scmp.eq.s32.totalorder %s11, 1
    %p101 = por %p99, %p100
    %p102 = scmp.ne.s32.totalorder %s94, %s97
    %p103 = scmp.eq.s32.totalorder %s11, 0
    %p104 = por %p102, %p103
    %p105 = scmp.ne.s32.totalorder %s94, %s97
    %p106 = scmp.eq.s32.totalorder %s16, 1
    %p107 = por %p105, %p106
    %p108 = scmp.ne.s32.totalorder %s97, %s98
    %p109 = scmp.eq.s32.totalorder %s16, 0
    %p110 = por %p108, %p109
    %p111 = scmp.ne.s32.totalorder %s97, %s98
    %p112 = scmp.eq.s32.totalorder %s17, 1
    %p113 = por %p111, %p112
    %p115 = scmp.ne.s32.totalorder %s98, %s114
    %p116 = scmp.eq.s32.totalorder %s17, 0
    %p117 = por %p115, %p116
    %s118 = ssub.s32 %s11, %s18
    %p119 = scmp.eq.s32.totalorder %s118, 0
    %s121 = sadd.s32 %s120, 1
    %s122 = scalar_select %p119, %s120, %s121
    %p125 = pneg %p119
    %p126 = scmp.eq.s32.totalorder %s11, 1
    %p127 = por %p125, %p126
    %p128 = scmp.ne.s32.totalorder %s120, %s123
    %p129 = scmp.eq.s32.totalorder %s11, 0
    %p130 = por %p128, %p129
    %p131 = scmp.ne.s32.totalorder %s120, %s123
    %p132 = scmp.eq.s32.totalorder %s16, 1
    %p133 = por %p131, %p132
    %p134 = scmp.ne.s32.totalorder %s123, %s124
    %p135 = scmp.eq.s32.totalorder %s16, 0
    %p136 = por %p134, %p135
    %p137 = scmp.ne.s32.totalorder %s123, %s124
    %p138 = scmp.eq.s32.totalorder %s17, 1
    %p139 = por %p137, %p138
    %p141 = scmp.ne.s32.totalorder %s124, %s140
    %p142 = scmp.eq.s32.totalorder %s17, 0
    %p143 = por %p141, %p142
    %p144 = scmp.le.s32.totalorder 1, %s11
    %p145 = scmp.lt.s32.totalorder %s11, 3
    %p146 = pnand %p144, %p145
    %p147 = pneg %p146
    // Predicated region
    $region9: #{conditional_discriminator_forward.8} parent=5 // pred_check
      _
    $region10: #{conditional_discriminator_forward.8} parent=5 // pred_check_branch
      %149 = sbr.rel (%p146) target = $region12
    $region11: #{conditional_discriminator_forward.8} parent=5 // pred_region
      %s150 = ssub.s32 %s11, 1
      // Predicated region
      $region13: #{conditional_discriminator_forward.8} parent=11 // pred_check
        %p151 = pneg %p58
      $region14: #{conditional_discriminator_forward.8} parent=11 // pred_check_branch
        %153 = sbr.rel (%p151) target = $region16
      $region15: #{conditional_discriminator_forward.8} parent=11 // pred_region
        _
      $region16: #{conditional_discriminator_forward.8} parent=11 // pred_fallthru
        _
    $region12: #{conditional_discriminator_forward.8} parent=5 // pred_fallthru
      _
    %p154 = scmp.lt.s32.totalorder %s11, 2
    // Predicated region
    $region17: #{conditional_discriminator_forward.8} parent=5 // pred_check
      %p155 = pneg %p154
    $region18: #{conditional_discriminator_forward.8} parent=5 // pred_check_branch
      %157 = sbr.rel (%p155) target = $region20
    $region19: #{conditional_discriminator_forward.8} parent=5 // pred_region
      // Predicated region
      $region21: #{conditional_discriminator_forward.8} parent=19 // pred_check
        %p158 = pneg %p31
      $region22: #{conditional_discriminator_forward.8} parent=19 // pred_check_branch
        %160 = sbr.rel (%p158) target = $region24
      $region23: #{conditional_discriminator_forward.8} parent=19 // pred_region
        %s161 = smul.u32 2, %s11
        %p162 = scmp.lt.s32.totalorder %s161, 3
        %s163 = scalar_select %p162, %s161, 3
        %s164 = smul.addr %s163, 16
        %s165 = smul.addr %s164, 4
        %s166 = scalar_lea.vmem %s0, %s165
        %s167 = smul.u32 2, %s11
      $region24: #{conditional_discriminator_forward.8} parent=19 // pred_fallthru
        _
    $region20: #{conditional_discriminator_forward.8} parent=5 // pred_fallthru
      _
    %p168 = scmp.le.s32.totalorder 1, %s11
    %p169 = scmp.lt.s32.totalorder %s11, 3
    %p170 = pnand %p168, %p169
    %p171 = pneg %p170
    // Predicated region
    $region25: #{conditional_discriminator_forward.8} parent=5 // pred_check
      _
    $region26: #{conditional_discriminator_forward.8} parent=5 // pred_check_branch
      %173 = sbr.rel (%p170) target = $region28
    $region27: #{conditional_discriminator_forward.8} parent=5 // pred_region
      %s174 = ssub.s32 %s11, 1
      %s175 = smul.u32 2, %s16
      %p176 = scmp.lt.s32.totalorder %s175, 3
      %s177 = scalar_select %p176, %s175, 3
      %s178 = smul.addr %s177, 16
      %s179 = smul.addr %s178, 4
      %s180 = scalar_lea.vmem %s0, %s179
      %p181 = pneg %p37
      %p182 = pneg %p34
      %p183 = pneg %p58
      %p184 = pneg %p55
      %p185 = pneg %p84
      %p186 = pneg %p81
      %s187 = smul.u32 2, %s16
      %p188 = scmp.lt.s32.totalorder %s187, 3
      %s189 = scalar_select %p188, %s187, 3
      %s190 = smul.addr %s189, 2
      %s191 = smul.addr %s190, 8
      %s192 = scalar_lea.vmem %s2, %s191
      %p193 = pneg %p110
      %p194 = pneg %p107
      %p195 = scmp.lt.s32.totalorder %s16, 1
      %s196 = scalar_select %p195, %s16, 1
      %s197 = smul.addr %s196, 2
      %s198 = scalar_lea.vmem %s3, %s197
      %p199 = pneg %p136
      %p200 = pneg %p133
      %p201 = scmp.lt.s32.totalorder %s16, 1
      %s202 = scalar_select %p201, %s16, 1
      %s203 = smul.addr %s202, 2
      %s204 = scalar_lea.vmem %s4, %s203
      %s205 = smul.u32 2, %s16
      %p206 = scmp.lt.s32.totalorder %s205, 3
      %s207 = scalar_select %p206, %s205, 3
      %s208 = smul.addr %s207, 16
      %s209 = smul.addr %s208, 4
      %s210 = scalar_lea.vmem %s0, %s209
      %s211 = smul.u32 2, %s16
      %s212 = smul.u32 2, %s16
      %p213 = scmp.lt.s32.totalorder %s212, 3
      %s214 = scalar_select %p213, %s212, 3
      %s215 = smul.addr %s214, 2
      %s216 = smul.addr %s215, 8
      %s217 = scalar_lea.vmem %s2, %s216
      %s218 = smul.u32 2, %s16
      %p219 = scmp.lt.s32.totalorder %s16, 1
      %s220 = scalar_select %p219, %s16, 1
      %s221 = smul.addr %s220, 2
      %s222 = scalar_lea.vmem %s3, %s221
      %p223 = scmp.lt.s32.totalorder %s16, 1
      %s224 = scalar_select %p223, %s16, 1
      %s225 = smul.addr %s224, 2
      %s226 = scalar_lea.vmem %s4, %s225
      %v227 = vld [vmem:[%s210] sm:$0xff]
      %v228 = vld [vmem:[%s210 + $0x8] sm:$0xff]
      %v229 = vld [vmem:[%s210 + $0x10] sm:$0xff]
      %v230 = vld [vmem:[%s210 + $0x18] sm:$0xff]
      %v231 = vld [vmem:[%s210 + $0x20] sm:$0xff]
      %v232 = vld [vmem:[%s210 + $0x28] sm:$0xff]
      %v233 = vld [vmem:[%s210 + $0x30] sm:$0xff]
      %v234 = vld [vmem:[%s210 + $0x38] sm:$0xff]
      %v235 = vld [vmem:[%s210 + $0x40] sm:$0xff]
      %v236 = vld [vmem:[%s210 + $0x48] sm:$0xff]
      %v237 = vld [vmem:[%s210 + $0x50] sm:$0xff]
      %v238 = vld [vmem:[%s210 + $0x58] sm:$0xff]
      %v239 = vld [vmem:[%s210 + $0x60] sm:$0xff]
      %v240 = vld [vmem:[%s210 + $0x68] sm:$0xff]
      %v241 = vld [vmem:[%s210 + $0x70] sm:$0xff]
      %v242 = vld [vmem:[%s210 + $0x78] sm:$0xff]
      %v243 = vld [vmem:[%s1] sm:$0xff]
      %v244 = vld [vmem:[%s1 + $0x8] sm:$0xff]
      %v245 = vld [vmem:[%s1 + $0x10] sm:$0xff]
      %v246 = vld [vmem:[%s1 + $0x18] sm:$0xff]
      %v247 = vld [vmem:[%s1 + $0x20] sm:$0xff]
      %v248 = vld [vmem:[%s1 + $0x28] sm:$0xff]
      %v249 = vld [vmem:[%s1 + $0x30] sm:$0xff]
      %v250 = vld [vmem:[%s1 + $0x38] sm:$0xff]
      %v251 = vld [vmem:[%s1 + $0x40] sm:$0xff]
      %v252 = vld [vmem:[%s1 + $0x48] sm:$0xff]
      %v253 = vld [vmem:[%s1 + $0x50] sm:$0xff]
      %v254 = vld [vmem:[%s1 + $0x58] sm:$0xff]
      %v255 = vld [vmem:[%s1 + $0x60] sm:$0xff]
      %v256 = vld [vmem:[%s1 + $0x68] sm:$0xff]
      %v257 = vld [vmem:[%s1 + $0x70] sm:$0xff]
      %v258 = vld [vmem:[%s1 + $0x78] sm:$0xff]
      %v259 = vld [vmem:[%s1 + $0x80] sm:$0xff]
      %v260 = vld [vmem:[%s1 + $0x88] sm:$0xff]
      %v261 = vld [vmem:[%s1 + $0x90] sm:$0xff]
      %v262 = vld [vmem:[%s1 + $0x98] sm:$0xff]
      %v263 = vld [vmem:[%s1 + $0xa0] sm:$0xff]
      %v264 = vld [vmem:[%s1 + $0xa8] sm:$0xff]
      %v265 = vld [vmem:[%s1 + $0xb0] sm:$0xff]
      %v266 = vld [vmem:[%s1 + $0xb8] sm:$0xff]
      %v267 = vld [vmem:[%s1 + $0xc0] sm:$0xff]
      %v268 = vld [vmem:[%s1 + $0xc8] sm:$0xff]
      %v269 = vld [vmem:[%s1 + $0xd0] sm:$0xff]
      %v270 = vld [vmem:[%s1 + $0xd8] sm:$0xff]
      %v271 = vld [vmem:[%s1 + $0xe0] sm:$0xff]
      %v272 = vld [vmem:[%s1 + $0xe8] sm:$0xff]
      %v273 = vld [vmem:[%s1 + $0xf0] sm:$0xff]
      %v274 = vld [vmem:[%s1 + $0xf8] sm:$0xff]
      %v275 = vld [vmem:[%s1 + $0x100] sm:$0xff]
      %v276 = vld [vmem:[%s1 + $0x108] sm:$0xff]
      %v277 = vld [vmem:[%s1 + $0x110] sm:$0xff]
      %v278 = vld [vmem:[%s1 + $0x118] sm:$0xff]
      %v279 = vld [vmem:[%s1 + $0x120] sm:$0xff]
      %v280 = vld [vmem:[%s1 + $0x128] sm:$0xff]
      %v281 = vld [vmem:[%s1 + $0x130] sm:$0xff]
      %v282 = vld [vmem:[%s1 + $0x138] sm:$0xff]
      %v283 = vld [vmem:[%s1 + $0x140] sm:$0xff]
      %v284 = vld [vmem:[%s1 + $0x148] sm:$0xff]
      %v285 = vld [vmem:[%s1 + $0x150] sm:$0xff]
      %v286 = vld [vmem:[%s1 + $0x158] sm:$0xff]
      %v287 = vld [vmem:[%s1 + $0x160] sm:$0xff]
      %v288 = vld [vmem:[%s1 + $0x168] sm:$0xff]
      %v289 = vld [vmem:[%s1 + $0x170] sm:$0xff]
      %v290 = vld [vmem:[%s1 + $0x178] sm:$0xff]
      %v291 = vld [vmem:[%s1 + $0x180] sm:$0xff]
      %v292 = vld [vmem:[%s1 + $0x188] sm:$0xff]
      %v293 = vld [vmem:[%s1 + $0x190] sm:$0xff]
      %v294 = vld [vmem:[%s1 + $0x198] sm:$0xff]
      %v295 = vld [vmem:[%s1 + $0x1a0] sm:$0xff]
      %v296 = vld [vmem:[%s1 + $0x1a8] sm:$0xff]
      %v297 = vld [vmem:[%s1 + $0x1b0] sm:$0xff]
      %v298 = vld [vmem:[%s1 + $0x1b8] sm:$0xff]
      %v299 = vld [vmem:[%s1 + $0x1c0] sm:$0xff]
      %v300 = vld [vmem:[%s1 + $0x1c8] sm:$0xff]
      %v301 = vld [vmem:[%s1 + $0x1d0] sm:$0xff]
      %v302 = vld [vmem:[%s1 + $0x1d8] sm:$0xff]
      %v303 = vld [vmem:[%s1 + $0x1e0] sm:$0xff]
      %v304 = vld [vmem:[%s1 + $0x1e8] sm:$0xff]
      %v305 = vld [vmem:[%s1 + $0x1f0] sm:$0xff]
      %v306 = vld [vmem:[%s1 + $0x1f8] sm:$0xff]
      %v307 = vld [vmem:[%s1 + $0x200] sm:$0xff]
      %v308 = vld [vmem:[%s1 + $0x208] sm:$0xff]
      %v309 = vld [vmem:[%s1 + $0x210] sm:$0xff]
      %v310 = vld [vmem:[%s1 + $0x218] sm:$0xff]
      %v311 = vld [vmem:[%s1 + $0x220] sm:$0xff]
      %v312 = vld [vmem:[%s1 + $0x228] sm:$0xff]
      %v313 = vld [vmem:[%s1 + $0x230] sm:$0xff]
      %v314 = vld [vmem:[%s1 + $0x238] sm:$0xff]
      %v315 = vld [vmem:[%s1 + $0x240] sm:$0xff]
      %v316 = vld [vmem:[%s1 + $0x248] sm:$0xff]
      %v317 = vld [vmem:[%s1 + $0x250] sm:$0xff]
      %v318 = vld [vmem:[%s1 + $0x258] sm:$0xff]
      %v319 = vld [vmem:[%s1 + $0x260] sm:$0xff]
      %v320 = vld [vmem:[%s1 + $0x268] sm:$0xff]
      %v321 = vld [vmem:[%s1 + $0x270] sm:$0xff]
      %v322 = vld [vmem:[%s1 + $0x278] sm:$0xff]
      %v323 = vld [vmem:[%s1 + $0x280] sm:$0xff]
      %v324 = vld [vmem:[%s1 + $0x288] sm:$0xff]
      %v325 = vld [vmem:[%s1 + $0x290] sm:$0xff]
      %v326 = vld [vmem:[%s1 + $0x298] sm:$0xff]
      %v327 = vld [vmem:[%s1 + $0x2a0] sm:$0xff]
      %v328 = vld [vmem:[%s1 + $0x2a8] sm:$0xff]
      %v329 = vld [vmem:[%s1 + $0x2b0] sm:$0xff]
      %v330 = vld [vmem:[%s1 + $0x2b8] sm:$0xff]
      %v331 = vld [vmem:[%s1 + $0x2c0] sm:$0xff]
      %v332 = vld [vmem:[%s1 + $0x2c8] sm:$0xff]
      %v333 = vld [vmem:[%s1 + $0x2d0] sm:$0xff]
      %v334 = vld [vmem:[%s1 + $0x2d8] sm:$0xff]
      %v335 = vld [vmem:[%s1 + $0x2e0] sm:$0xff]
      %v336 = vld [vmem:[%s1 + $0x2e8] sm:$0xff]
      %v337 = vld [vmem:[%s1 + $0x2f0] sm:$0xff]
      %v338 = vld [vmem:[%s1 + $0x2f8] sm:$0xff]
      %v339 = vld [vmem:[%s1 + $0x300] sm:$0xff]
      %v340 = vld [vmem:[%s1 + $0x308] sm:$0xff]
      %v341 = vld [vmem:[%s1 + $0x310] sm:$0xff]
      %v342 = vld [vmem:[%s1 + $0x318] sm:$0xff]
      %v343 = vld [vmem:[%s1 + $0x320] sm:$0xff]
      %v344 = vld [vmem:[%s1 + $0x328] sm:$0xff]
      %v345 = vld [vmem:[%s1 + $0x330] sm:$0xff]
      %v346 = vld [vmem:[%s1 + $0x338] sm:$0xff]
      %v347 = vld [vmem:[%s1 + $0x340] sm:$0xff]
      %v348 = vld [vmem:[%s1 + $0x348] sm:$0xff]
      %v349 = vld [vmem:[%s1 + $0x350] sm:$0xff]
      %v350 = vld [vmem:[%s1 + $0x358] sm:$0xff]
      %v351 = vld [vmem:[%s1 + $0x360] sm:$0xff]
      %v352 = vld [vmem:[%s1 + $0x368] sm:$0xff]
      %v353 = vld [vmem:[%s1 + $0x370] sm:$0xff]
      %v354 = vld [vmem:[%s1 + $0x378] sm:$0xff]
      %v355 = vld [vmem:[%s1 + $0x380] sm:$0xff]
      %v356 = vld [vmem:[%s1 + $0x388] sm:$0xff]
      %v357 = vld [vmem:[%s1 + $0x390] sm:$0xff]
      %v358 = vld [vmem:[%s1 + $0x398] sm:$0xff]
      %v359 = vld [vmem:[%s1 + $0x3a0] sm:$0xff]
      %v360 = vld [vmem:[%s1 + $0x3a8] sm:$0xff]
      %v361 = vld [vmem:[%s1 + $0x3b0] sm:$0xff]
      %v362 = vld [vmem:[%s1 + $0x3b8] sm:$0xff]
      %v363 = vld [vmem:[%s1 + $0x3c0] sm:$0xff]
      %v364 = vld [vmem:[%s1 + $0x3c8] sm:$0xff]
      %v365 = vld [vmem:[%s1 + $0x3d0] sm:$0xff]
      %v366 = vld [vmem:[%s1 + $0x3d8] sm:$0xff]
      %v367 = vld [vmem:[%s1 + $0x3e0] sm:$0xff]
      %v368 = vld [vmem:[%s1 + $0x3e8] sm:$0xff]
      %v369 = vld [vmem:[%s1 + $0x3f0] sm:$0xff]
      %v370 = vld [vmem:[%s1 + $0x3f8] sm:$0xff]
      %v371 = vld [vmem:[%s1 + $0x400] sm:$0xff]
      %v372 = vld [vmem:[%s1 + $0x408] sm:$0xff]
      %v373 = vld [vmem:[%s1 + $0x410] sm:$0xff]
      %v374 = vld [vmem:[%s1 + $0x418] sm:$0xff]
      %v375 = vld [vmem:[%s1 + $0x420] sm:$0xff]
      %v376 = vld [vmem:[%s1 + $0x428] sm:$0xff]
      %v377 = vld [vmem:[%s1 + $0x430] sm:$0xff]
      %v378 = vld [vmem:[%s1 + $0x438] sm:$0xff]
      %v379 = vld [vmem:[%s1 + $0x440] sm:$0xff]
      %v380 = vld [vmem:[%s1 + $0x448] sm:$0xff]
      %v381 = vld [vmem:[%s1 + $0x450] sm:$0xff]
      %v382 = vld [vmem:[%s1 + $0x458] sm:$0xff]
      %v383 = vld [vmem:[%s1 + $0x460] sm:$0xff]
      %v384 = vld [vmem:[%s1 + $0x468] sm:$0xff]
      %v385 = vld [vmem:[%s1 + $0x470] sm:$0xff]
      %v386 = vld [vmem:[%s1 + $0x478] sm:$0xff]
      %v387 = vld [vmem:[%s1 + $0x480] sm:$0xff]
      %v388 = vld [vmem:[%s1 + $0x488] sm:$0xff]
      %v389 = vld [vmem:[%s1 + $0x490] sm:$0xff]
      %v390 = vld [vmem:[%s1 + $0x498] sm:$0xff]
      %v391 = vld [vmem:[%s1 + $0x4a0] sm:$0xff]
      %v392 = vld [vmem:[%s1 + $0x4a8] sm:$0xff]
      %v393 = vld [vmem:[%s1 + $0x4b0] sm:$0xff]
      %v394 = vld [vmem:[%s1 + $0x4b8] sm:$0xff]
      %v395 = vld [vmem:[%s1 + $0x4c0] sm:$0xff]
      %v396 = vld [vmem:[%s1 + $0x4c8] sm:$0xff]
      %v397 = vld [vmem:[%s1 + $0x4d0] sm:$0xff]
      %v398 = vld [vmem:[%s1 + $0x4d8] sm:$0xff]
      %v399 = vld [vmem:[%s1 + $0x4e0] sm:$0xff]
      %v400 = vld [vmem:[%s1 + $0x4e8] sm:$0xff]
      %v401 = vld [vmem:[%s1 + $0x4f0] sm:$0xff]
      %v402 = vld [vmem:[%s1 + $0x4f8] sm:$0xff]
      %v403 = vld [vmem:[%s1 + $0x500] sm:$0xff]
      %v404 = vld [vmem:[%s1 + $0x508] sm:$0xff]
      %v405 = vld [vmem:[%s1 + $0x510] sm:$0xff]
      %v406 = vld [vmem:[%s1 + $0x518] sm:$0xff]
      %v407 = vld [vmem:[%s1 + $0x520] sm:$0xff]
      %v408 = vld [vmem:[%s1 + $0x528] sm:$0xff]
      %v409 = vld [vmem:[%s1 + $0x530] sm:$0xff]
      %v410 = vld [vmem:[%s1 + $0x538] sm:$0xff]
      %v411 = vld [vmem:[%s1 + $0x540] sm:$0xff]
      %v412 = vld [vmem:[%s1 + $0x548] sm:$0xff]
      %v413 = vld [vmem:[%s1 + $0x550] sm:$0xff]
      %v414 = vld [vmem:[%s1 + $0x558] sm:$0xff]
      %v415 = vld [vmem:[%s1 + $0x560] sm:$0xff]
      %v416 = vld [vmem:[%s1 + $0x568] sm:$0xff]
      %v417 = vld [vmem:[%s1 + $0x570] sm:$0xff]
      %v418 = vld [vmem:[%s1 + $0x578] sm:$0xff]
      %v419 = vld [vmem:[%s1 + $0x580] sm:$0xff]
      %v420 = vld [vmem:[%s1 + $0x588] sm:$0xff]
      %v421 = vld [vmem:[%s1 + $0x590] sm:$0xff]
      %v422 = vld [vmem:[%s1 + $0x598] sm:$0xff]
      %v423 = vld [vmem:[%s1 + $0x5a0] sm:$0xff]
      %v424 = vld [vmem:[%s1 + $0x5a8] sm:$0xff]
      %v425 = vld [vmem:[%s1 + $0x5b0] sm:$0xff]
      %v426 = vld [vmem:[%s1 + $0x5b8] sm:$0xff]
      %v427 = vld [vmem:[%s1 + $0x5c0] sm:$0xff]
      %v428 = vld [vmem:[%s1 + $0x5c8] sm:$0xff]
      %v429 = vld [vmem:[%s1 + $0x5d0] sm:$0xff]
      %v430 = vld [vmem:[%s1 + $0x5d8] sm:$0xff]
      %v431 = vld [vmem:[%s1 + $0x5e0] sm:$0xff]
      %v432 = vld [vmem:[%s1 + $0x5e8] sm:$0xff]
      %v433 = vld [vmem:[%s1 + $0x5f0] sm:$0xff]
      %v434 = vld [vmem:[%s1 + $0x5f8] sm:$0xff]
      %v435 = vld [vmem:[%s1 + $0x600] sm:$0xff]
      %v436 = vld [vmem:[%s1 + $0x608] sm:$0xff]
      %v437 = vld [vmem:[%s1 + $0x610] sm:$0xff]
      %v438 = vld [vmem:[%s1 + $0x618] sm:$0xff]
      %v439 = vld [vmem:[%s1 + $0x620] sm:$0xff]
      %v440 = vld [vmem:[%s1 + $0x628] sm:$0xff]
      %v441 = vld [vmem:[%s1 + $0x630] sm:$0xff]
      %v442 = vld [vmem:[%s1 + $0x638] sm:$0xff]
      %v443 = vld [vmem:[%s1 + $0x640] sm:$0xff]
      %v444 = vld [vmem:[%s1 + $0x648] sm:$0xff]
      %v445 = vld [vmem:[%s1 + $0x650] sm:$0xff]
      %v446 = vld [vmem:[%s1 + $0x658] sm:$0xff]
      %v447 = vld [vmem:[%s1 + $0x660] sm:$0xff]
      %v448 = vld [vmem:[%s1 + $0x668] sm:$0xff]
      %v449 = vld [vmem:[%s1 + $0x670] sm:$0xff]
      %v450 = vld [vmem:[%s1 + $0x678] sm:$0xff]
      %v451 = vld [vmem:[%s1 + $0x680] sm:$0xff]
      %v452 = vld [vmem:[%s1 + $0x688] sm:$0xff]
      %v453 = vld [vmem:[%s1 + $0x690] sm:$0xff]
      %v454 = vld [vmem:[%s1 + $0x698] sm:$0xff]
      %v455 = vld [vmem:[%s1 + $0x6a0] sm:$0xff]
      %v456 = vld [vmem:[%s1 + $0x6a8] sm:$0xff]
      %v457 = vld [vmem:[%s1 + $0x6b0] sm:$0xff]
      %v458 = vld [vmem:[%s1 + $0x6b8] sm:$0xff]
      %v459 = vld [vmem:[%s1 + $0x6c0] sm:$0xff]
      %v460 = vld [vmem:[%s1 + $0x6c8] sm:$0xff]
      %v461 = vld [vmem:[%s1 + $0x6d0] sm:$0xff]
      %v462 = vld [vmem:[%s1 + $0x6d8] sm:$0xff]
      %v463 = vld [vmem:[%s1 + $0x6e0] sm:$0xff]
      %v464 = vld [vmem:[%s1 + $0x6e8] sm:$0xff]
      %v465 = vld [vmem:[%s1 + $0x6f0] sm:$0xff]
      %v466 = vld [vmem:[%s1 + $0x6f8] sm:$0xff]
      %v467 = vld [vmem:[%s1 + $0x700] sm:$0xff]
      %v468 = vld [vmem:[%s1 + $0x708] sm:$0xff]
      %v469 = vld [vmem:[%s1 + $0x710] sm:$0xff]
      %v470 = vld [vmem:[%s1 + $0x718] sm:$0xff]
      %v471 = vld [vmem:[%s1 + $0x720] sm:$0xff]
      %v472 = vld [vmem:[%s1 + $0x728] sm:$0xff]
      %v473 = vld [vmem:[%s1 + $0x730] sm:$0xff]
      %v474 = vld [vmem:[%s1 + $0x738] sm:$0xff]
      %v475 = vld [vmem:[%s1 + $0x740] sm:$0xff]
      %v476 = vld [vmem:[%s1 + $0x748] sm:$0xff]
      %v477 = vld [vmem:[%s1 + $0x750] sm:$0xff]
      %v478 = vld [vmem:[%s1 + $0x758] sm:$0xff]
      %v479 = vld [vmem:[%s1 + $0x760] sm:$0xff]
      %v480 = vld [vmem:[%s1 + $0x768] sm:$0xff]
      %v481 = vld [vmem:[%s1 + $0x770] sm:$0xff]
      %v482 = vld [vmem:[%s1 + $0x778] sm:$0xff]
      %v483 = vld [vmem:[%s1 + $0x780] sm:$0xff]
      %v484 = vld [vmem:[%s1 + $0x788] sm:$0xff]
      %v485 = vld [vmem:[%s1 + $0x790] sm:$0xff]
      %v486 = vld [vmem:[%s1 + $0x798] sm:$0xff]
      %v487 = vld [vmem:[%s1 + $0x7a0] sm:$0xff]
      %v488 = vld [vmem:[%s1 + $0x7a8] sm:$0xff]
      %v489 = vld [vmem:[%s1 + $0x7b0] sm:$0xff]
      %v490 = vld [vmem:[%s1 + $0x7b8] sm:$0xff]
      %v491 = vld [vmem:[%s1 + $0x7c0] sm:$0xff]
      %v492 = vld [vmem:[%s1 + $0x7c8] sm:$0xff]
      %v493 = vld [vmem:[%s1 + $0x7d0] sm:$0xff]
      %v494 = vld [vmem:[%s1 + $0x7d8] sm:$0xff]
      %v495 = vld [vmem:[%s1 + $0x7e0] sm:$0xff]
      %v496 = vld [vmem:[%s1 + $0x7e8] sm:$0xff]
      %v497 = vld [vmem:[%s1 + $0x7f0] sm:$0xff]
      %v498 = vld [vmem:[%s1 + $0x7f8] sm:$0xff]
      %v515 = vunpack.c.l.b16 %v227
      %v516 = vunpack.c.h.b16 %v227
      %v517 = vunpack.c.l.b16 %v228
      %v518 = vunpack.c.h.b16 %v228
      %v519 = vunpack.c.l.b16 %v229
      %v520 = vunpack.c.h.b16 %v229
      %v521 = vunpack.c.l.b16 %v230
      %v522 = vunpack.c.h.b16 %v230
      %v523 = vunpack.c.l.b16 %v231
      %v524 = vunpack.c.h.b16 %v231
      %v525 = vunpack.c.l.b16 %v232
      %v526 = vunpack.c.h.b16 %v232
      %v527 = vunpack.c.l.b16 %v233
      %v528 = vunpack.c.h.b16 %v233
      %v529 = vunpack.c.l.b16 %v234
      %v530 = vunpack.c.h.b16 %v234
      %v531 = vunpack.c.l.b16 %v235
      %v532 = vunpack.c.h.b16 %v235
      %v533 = vunpack.c.l.b16 %v236
      %v534 = vunpack.c.h.b16 %v236
      %v535 = vunpack.c.l.b16 %v237
      %v536 = vunpack.c.h.b16 %v237
      %v537 = vunpack.c.l.b16 %v238
      %v538 = vunpack.c.h.b16 %v238
      %v539 = vunpack.c.l.b16 %v239
      %v540 = vunpack.c.h.b16 %v239
      %v541 = vunpack.c.l.b16 %v240
      %v542 = vunpack.c.h.b16 %v240
      %v543 = vunpack.c.l.b16 %v241
      %v544 = vunpack.c.h.b16 %v241
      %v545 = vunpack.c.l.b16 %v242
      %v546 = vunpack.c.h.b16 %v242
      %v547 = vpack.c.b16 %v531, %v515
      %v548 = vpack.c.b16 %v532, %v516
      %v549 = vpack.c.b16 %v533, %v517
      %v550 = vpack.c.b16 %v534, %v518
      %v551 = vpack.c.b16 %v535, %v519
      %v552 = vpack.c.b16 %v536, %v520
      %v553 = vpack.c.b16 %v537, %v521
      %v554 = vpack.c.b16 %v538, %v522
      %v555 = vpack.c.b16 %v539, %v523
      %v556 = vpack.c.b16 %v540, %v524
      %v557 = vpack.c.b16 %v541, %v525
      %v558 = vpack.c.b16 %v542, %v526
      %v559 = vpack.c.b16 %v543, %v527
      %v560 = vpack.c.b16 %v544, %v528
      %v561 = vpack.c.b16 %v545, %v529
      %v562 = vpack.c.b16 %v546, %v530
      %v835 = vunpack.c.l.b16 %v243
      %v836 = vunpack.c.h.b16 %v243
      %v837 = vunpack.c.l.b16 %v244
      %v838 = vunpack.c.h.b16 %v244
      %v839 = vunpack.c.l.b16 %v245
      %v840 = vunpack.c.h.b16 %v245
      %v841 = vunpack.c.l.b16 %v246
      %v842 = vunpack.c.h.b16 %v246
      %v843 = vunpack.c.l.b16 %v247
      %v844 = vunpack.c.h.b16 %v247
      %v845 = vunpack.c.l.b16 %v248
      %v846 = vunpack.c.h.b16 %v248
      %v847 = vunpack.c.l.b16 %v249
      %v848 = vunpack.c.h.b16 %v249
      %v849 = vunpack.c.l.b16 %v250
      %v850 = vunpack.c.h.b16 %v250
      %v851 = vunpack.c.l.b16 %v251
      %v852 = vunpack.c.h.b16 %v251
      %v853 = vunpack.c.l.b16 %v252
      %v854 = vunpack.c.h.b16 %v252
      %v855 = vunpack.c.l.b16 %v253
      %v856 = vunpack.c.h.b16 %v253
      %v857 = vunpack.c.l.b16 %v254
      %v858 = vunpack.c.h.b16 %v254
      %v859 = vunpack.c.l.b16 %v255
      %v860 = vunpack.c.h.b16 %v255
      %v861 = vunpack.c.l.b16 %v256
      %v862 = vunpack.c.h.b16 %v256
      %v863 = vunpack.c.l.b16 %v257
      %v864 = vunpack.c.h.b16 %v257
      %v865 = vunpack.c.l.b16 %v258
      %v866 = vunpack.c.h.b16 %v258
      %v867 = vunpack.c.l.b16 %v259
      %v868 = vunpack.c.h.b16 %v259
      %v869 = vunpack.c.l.b16 %v260
      %v870 = vunpack.c.h.b16 %v260
      %v871 = vunpack.c.l.b16 %v261
      %v872 = vunpack.c.h.b16 %v261
      %v873 = vunpack.c.l.b16 %v262
      %v874 = vunpack.c.h.b16 %v262
      %v875 = vunpack.c.l.b16 %v263
      %v876 = vunpack.c.h.b16 %v263
      %v877 = vunpack.c.l.b16 %v264
      %v878 = vunpack.c.h.b16 %v264
      %v879 = vunpack.c.l.b16 %v265
      %v880 = vunpack.c.h.b16 %v265
      %v881 = vunpack.c.l.b16 %v266
      %v882 = vunpack.c.h.b16 %v266
      %v883 = vunpack.c.l.b16 %v267
      %v884 = vunpack.c.h.b16 %v267
      %v885 = vunpack.c.l.b16 %v268
      %v886 = vunpack.c.h.b16 %v268
      %v887 = vunpack.c.l.b16 %v269
      %v888 = vunpack.c.h.b16 %v269
      %v889 = vunpack.c.l.b16 %v270
      %v890 = vunpack.c.h.b16 %v270
      %v891 = vunpack.c.l.b16 %v271
      %v892 = vunpack.c.h.b16 %v271
      %v893 = vunpack.c.l.b16 %v272
      %v894 = vunpack.c.h.b16 %v272
      %v895 = vunpack.c.l.b16 %v273
      %v896 = vunpack.c.h.b16 %v273
      %v897 = vunpack.c.l.b16 %v274
      %v898 = vunpack.c.h.b16 %v274
      %v899 = vunpack.c.l.b16 %v275
      %v900 = vunpack.c.h.b16 %v275
      %v901 = vunpack.c.l.b16 %v276
      %v902 = vunpack.c.h.b16 %v276
      %v903 = vunpack.c.l.b16 %v277
      %v904 = vunpack.c.h.b16 %v277
      %v905 = vunpack.c.l.b16 %v278
      %v906 = vunpack.c.h.b16 %v278
      %v907 = vunpack.c.l.b16 %v279
      %v908 = vunpack.c.h.b16 %v279
      %v909 = vunpack.c.l.b16 %v280
      %v910 = vunpack.c.h.b16 %v280
      %v911 = vunpack.c.l.b16 %v281
      %v912 = vunpack.c.h.b16 %v281
      %v913 = vunpack.c.l.b16 %v282
      %v914 = vunpack.c.h.b16 %v282
      %v915 = vunpack.c.l.b16 %v283
      %v916 = vunpack.c.h.b16 %v283
      %v917 = vunpack.c.l.b16 %v284
      %v918 = vunpack.c.h.b16 %v284
      %v919 = vunpack.c.l.b16 %v285
      %v920 = vunpack.c.h.b16 %v285
      %v921 = vunpack.c.l.b16 %v286
      %v922 = vunpack.c.h.b16 %v286
      %v923 = vunpack.c.l.b16 %v287
      %v924 = vunpack.c.h.b16 %v287
      %v925 = vunpack.c.l.b16 %v288
      %v926 = vunpack.c.h.b16 %v288
      %v927 = vunpack.c.l.b16 %v289
      %v928 = vunpack.c.h.b16 %v289
      %v929 = vunpack.c.l.b16 %v290
      %v930 = vunpack.c.h.b16 %v290
      %v931 = vunpack.c.l.b16 %v291
      %v932 = vunpack.c.h.b16 %v291
      %v933 = vunpack.c.l.b16 %v292
      %v934 = vunpack.c.h.b16 %v292
      %v935 = vunpack.c.l.b16 %v293
      %v936 = vunpack.c.h.b16 %v293
      %v937 = vunpack.c.l.b16 %v294
      %v938 = vunpack.c.h.b16 %v294
      %v939 = vunpack.c.l.b16 %v295
      %v940 = vunpack.c.h.b16 %v295
      %v941 = vunpack.c.l.b16 %v296
      %v942 = vunpack.c.h.b16 %v296
      %v943 = vunpack.c.l.b16 %v297
      %v944 = vunpack.c.h.b16 %v297
      %v945 = vunpack.c.l.b16 %v298
      %v946 = vunpack.c.h.b16 %v298
      %v947 = vunpack.c.l.b16 %v299
      %v948 = vunpack.c.h.b16 %v299
      %v949 = vunpack.c.l.b16 %v300
      %v950 = vunpack.c.h.b16 %v300
      %v951 = vunpack.c.l.b16 %v301
      %v952 = vunpack.c.h.b16 %v301
      %v953 = vunpack.c.l.b16 %v302
      %v954 = vunpack.c.h.b16 %v302
      %v955 = vunpack.c.l.b16 %v303
      %v956 = vunpack.c.h.b16 %v303
      %v957 = vunpack.c.l.b16 %v304
      %v958 = vunpack.c.h.b16 %v304
      %v959 = vunpack.c.l.b16 %v305
      %v960 = vunpack.c.h.b16 %v305
      %v961 = vunpack.c.l.b16 %v306
      %v962 = vunpack.c.h.b16 %v306
      %v963 = vunpack.c.l.b16 %v307
      %v964 = vunpack.c.h.b16 %v307
      %v965 = vunpack.c.l.b16 %v308
      %v966 = vunpack.c.h.b16 %v308
      %v967 = vunpack.c.l.b16 %v309
      %v968 = vunpack.c.h.b16 %v309
      %v969 = vunpack.c.l.b16 %v310
      %v970 = vunpack.c.h.b16 %v310
      %v971 = vunpack.c.l.b16 %v311
      %v972 = vunpack.c.h.b16 %v311
      %v973 = vunpack.c.l.b16 %v312
      %v974 = vunpack.c.h.b16 %v312
      %v975 = vunpack.c.l.b16 %v313
      %v976 = vunpack.c.h.b16 %v313
      %v977 = vunpack.c.l.b16 %v314
      %v978 = vunpack.c.h.b16 %v314
      %v979 = vunpack.c.l.b16 %v315
      %v980 = vunpack.c.h.b16 %v315
      %v981 = vunpack.c.l.b16 %v316
      %v982 = vunpack.c.h.b16 %v316
      %v983 = vunpack.c.l.b16 %v317
      %v984 = vunpack.c.h.b16 %v317
      %v985 = vunpack.c.l.b16 %v318
      %v986 = vunpack.c.h.b16 %v318
      %v987 = vunpack.c.l.b16 %v319
      %v988 = vunpack.c.h.b16 %v319
      %v989 = vunpack.c.l.b16 %v320
      %v990 = vunpack.c.h.b16 %v320
      %v991 = vunpack.c.l.b16 %v321
      %v992 = vunpack.c.h.b16 %v321
      %v993 = vunpack.c.l.b16 %v322
      %v994 = vunpack.c.h.b16 %v322
      %v995 = vunpack.c.l.b16 %v323
      %v996 = vunpack.c.h.b16 %v323
      %v997 = vunpack.c.l.b16 %v324
      %v998 = vunpack.c.h.b16 %v324
      %v999 = vunpack.c.l.b16 %v325
      %v1000 = vunpack.c.h.b16 %v325
      %v1001 = vunpack.c.l.b16 %v326
      %v1002 = vunpack.c.h.b16 %v326
      %v1003 = vunpack.c.l.b16 %v327
      %v1004 = vunpack.c.h.b16 %v327
      %v1005 = vunpack.c.l.b16 %v328
      %v1006 = vunpack.c.h.b16 %v328
      %v1007 = vunpack.c.l.b16 %v329
      %v1008 = vunpack.c.h.b16 %v329
      %v1009 = vunpack.c.l.b16 %v330
      %v1010 = vunpack.c.h.b16 %v330
      %v1011 = vunpack.c.l.b16 %v331
      %v1012 = vunpack.c.h.b16 %v331
      %v1013 = vunpack.c.l.b16 %v332
      %v1014 = vunpack.c.h.b16 %v332
      %v1015 = vunpack.c.l.b16 %v333
      %v1016 = vunpack.c.h.b16 %v333
      %v1017 = vunpack.c.l.b16 %v334
      %v1018 = vunpack.c.h.b16 %v334
      %v1019 = vunpack.c.l.b16 %v335
      %v1020 = vunpack.c.h.b16 %v335
      %v1021 = vunpack.c.l.b16 %v336
      %v1022 = vunpack.c.h.b16 %v336
      %v1023 = vunpack.c.l.b16 %v337
      %v1024 = vunpack.c.h.b16 %v337
      %v1025 = vunpack.c.l.b16 %v338
      %v1026 = vunpack.c.h.b16 %v338
      %v1027 = vunpack.c.l.b16 %v339
      %v1028 = vunpack.c.h.b16 %v339
      %v1029 = vunpack.c.l.b16 %v340
      %v1030 = vunpack.c.h.b16 %v340
      %v1031 = vunpack.c.l.b16 %v341
      %v1032 = vunpack.c.h.b16 %v341
      %v1033 = vunpack.c.l.b16 %v342
      %v1034 = vunpack.c.h.b16 %v342
      %v1035 = vunpack.c.l.b16 %v343
      %v1036 = vunpack.c.h.b16 %v343
      %v1037 = vunpack.c.l.b16 %v344
      %v1038 = vunpack.c.h.b16 %v344
      %v1039 = vunpack.c.l.b16 %v345
      %v1040 = vunpack.c.h.b16 %v345
      %v1041 = vunpack.c.l.b16 %v346
      %v1042 = vunpack.c.h.b16 %v346
      %v1043 = vunpack.c.l.b16 %v347
      %v1044 = vunpack.c.h.b16 %v347
      %v1045 = vunpack.c.l.b16 %v348
      %v1046 = vunpack.c.h.b16 %v348
      %v1047 = vunpack.c.l.b16 %v349
      %v1048 = vunpack.c.h.b16 %v349
      %v1049 = vunpack.c.l.b16 %v350
      %v1050 = vunpack.c.h.b16 %v350
      %v1051 = vunpack.c.l.b16 %v351
      %v1052 = vunpack.c.h.b16 %v351
      %v1053 = vunpack.c.l.b16 %v352
      %v1054 = vunpack.c.h.b16 %v352
      %v1055 = vunpack.c.l.b16 %v353
      %v1056 = vunpack.c.h.b16 %v353
      %v1057 = vunpack.c.l.b16 %v354
      %v1058 = vunpack.c.h.b16 %v354
      %v1059 = vunpack.c.l.b16 %v355
      %v1060 = vunpack.c.h.b16 %v355
      %v1061 = vunpack.c.l.b16 %v356
      %v1062 = vunpack.c.h.b16 %v356
      %v1063 = vunpack.c.l.b16 %v357
      %v1064 = vunpack.c.h.b16 %v357
      %v1065 = vunpack.c.l.b16 %v358
      %v1066 = vunpack.c.h.b16 %v358
      %v1067 = vunpack.c.l.b16 %v359
      %v1068 = vunpack.c.h.b16 %v359
      %v1069 = vunpack.c.l.b16 %v360
      %v1070 = vunpack.c.h.b16 %v360
      %v1071 = vunpack.c.l.b16 %v361
      %v1072 = vunpack.c.h.b16 %v361
      %v1073 = vunpack.c.l.b16 %v362
      %v1074 = vunpack.c.h.b16 %v362
      %v1075 = vunpack.c.l.b16 %v363
      %v1076 = vunpack.c.h.b16 %v363
      %v1077 = vunpack.c.l.b16 %v364
      %v1078 = vunpack.c.h.b16 %v364
      %v1079 = vunpack.c.l.b16 %v365
      %v1080 = vunpack.c.h.b16 %v365
      %v1081 = vunpack.c.l.b16 %v366
      %v1082 = vunpack.c.h.b16 %v366
      %v1083 = vunpack.c.l.b16 %v367
      %v1084 = vunpack.c.h.b16 %v367
      %v1085 = vunpack.c.l.b16 %v368
      %v1086 = vunpack.c.h.b16 %v368
      %v1087 = vunpack.c.l.b16 %v369
      %v1088 = vunpack.c.h.b16 %v369
      %v1089 = vunpack.c.l.b16 %v370
      %v1090 = vunpack.c.h.b16 %v370
      %v1091 = vunpack.c.l.b16 %v371
      %v1092 = vunpack.c.h.b16 %v371
      %v1093 = vunpack.c.l.b16 %v372
      %v1094 = vunpack.c.h.b16 %v372
      %v1095 = vunpack.c.l.b16 %v373
      %v1096 = vunpack.c.h.b16 %v373
      %v1097 = vunpack.c.l.b16 %v374
      %v1098 = vunpack.c.h.b16 %v374
      %v1099 = vunpack.c.l.b16 %v375
      %v1100 = vunpack.c.h.b16 %v375
      %v1101 = vunpack.c.l.b16 %v376
      %v1102 = vunpack.c.h.b16 %v376
      %v1103 = vunpack.c.l.b16 %v377
      %v1104 = vunpack.c.h.b16 %v377
      %v1105 = vunpack.c.l.b16 %v378
      %v1106 = vunpack.c.h.b16 %v378
      %v1107 = vunpack.c.l.b16 %v379
      %v1108 = vunpack.c.h.b16 %v379
      %v1109 = vunpack.c.l.b16 %v380
      %v1110 = vunpack.c.h.b16 %v380
      %v1111 = vunpack.c.l.b16 %v381
      %v1112 = vunpack.c.h.b16 %v381
      %v1113 = vunpack.c.l.b16 %v382
      %v1114 = vunpack.c.h.b16 %v382
      %v1115 = vunpack.c.l.b16 %v383
      %v1116 = vunpack.c.h.b16 %v383
      %v1117 = vunpack.c.l.b16 %v384
      %v1118 = vunpack.c.h.b16 %v384
      %v1119 = vunpack.c.l.b16 %v385
      %v1120 = vunpack.c.h.b16 %v385
      %v1121 = vunpack.c.l.b16 %v386
      %v1122 = vunpack.c.h.b16 %v386
      %v1123 = vunpack.c.l.b16 %v387
      %v1124 = vunpack.c.h.b16 %v387
      %v1125 = vunpack.c.l.b16 %v388
      %v1126 = vunpack.c.h.b16 %v388
      %v1127 = vunpack.c.l.b16 %v389
      %v1128 = vunpack.c.h.b16 %v389
      %v1129 = vunpack.c.l.b16 %v390
      %v1130 = vunpack.c.h.b16 %v390
      %v1131 = vunpack.c.l.b16 %v391
      %v1132 = vunpack.c.h.b16 %v391
      %v1133 = vunpack.c.l.b16 %v392
      %v1134 = vunpack.c.h.b16 %v392
      %v1135 = vunpack.c.l.b16 %v393
      %v1136 = vunpack.c.h.b16 %v393
      %v1137 = vunpack.c.l.b16 %v394
      %v1138 = vunpack.c.h.b16 %v394
      %v1139 = vunpack.c.l.b16 %v395
      %v1140 = vunpack.c.h.b16 %v395
      %v1141 = vunpack.c.l.b16 %v396
      %v1142 = vunpack.c.h.b16 %v396
      %v1143 = vunpack.c.l.b16 %v397
      %v1144 = vunpack.c.h.b16 %v397
      %v1145 = vunpack.c.l.b16 %v398
      %v1146 = vunpack.c.h.b16 %v398
      %v1147 = vunpack.c.l.b16 %v399
      %v1148 = vunpack.c.h.b16 %v399
      %v1149 = vunpack.c.l.b16 %v400
      %v1150 = vunpack.c.h.b16 %v400
      %v1151 = vunpack.c.l.b16 %v401
      %v1152 = vunpack.c.h.b16 %v401
      %v1153 = vunpack.c.l.b16 %v402
      %v1154 = vunpack.c.h.b16 %v402
      %v1155 = vunpack.c.l.b16 %v403
      %v1156 = vunpack.c.h.b16 %v403
      %v1157 = vunpack.c.l.b16 %v404
      %v1158 = vunpack.c.h.b16 %v404
      %v1159 = vunpack.c.l.b16 %v405
      %v1160 = vunpack.c.h.b16 %v405
      %v1161 = vunpack.c.l.b16 %v406
      %v1162 = vunpack.c.h.b16 %v406
      %v1163 = vunpack.c.l.b16 %v407
      %v1164 = vunpack.c.h.b16 %v407
      %v1165 = vunpack.c.l.b16 %v408
      %v1166 = vunpack.c.h.b16 %v408
      %v1167 = vunpack.c.l.b16 %v409
      %v1168 = vunpack.c.h.b16 %v409
      %v1169 = vunpack.c.l.b16 %v410
      %v1170 = vunpack.c.h.b16 %v410
      %v1171 = vunpack.c.l.b16 %v411
      %v1172 = vunpack.c.h.b16 %v411
      %v1173 = vunpack.c.l.b16 %v412
      %v1174 = vunpack.c.h.b16 %v412
      %v1175 = vunpack.c.l.b16 %v413
      %v1176 = vunpack.c.h.b16 %v413
      %v1177 = vunpack.c.l.b16 %v414
      %v1178 = vunpack.c.h.b16 %v414
      %v1179 = vunpack.c.l.b16 %v415
      %v1180 = vunpack.c.h.b16 %v415
      %v1181 = vunpack.c.l.b16 %v416
      %v1182 = vunpack.c.h.b16 %v416
      %v1183 = vunpack.c.l.b16 %v417
      %v1184 = vunpack.c.h.b16 %v417
      %v1185 = vunpack.c.l.b16 %v418
      %v1186 = vunpack.c.h.b16 %v418
      %v1187 = vunpack.c.l.b16 %v419
      %v1188 = vunpack.c.h.b16 %v419
      %v1189 = vunpack.c.l.b16 %v420
      %v1190 = vunpack.c.h.b16 %v420
      %v1191 = vunpack.c.l.b16 %v421
      %v1192 = vunpack.c.h.b16 %v421
      %v1193 = vunpack.c.l.b16 %v422
      %v1194 = vunpack.c.h.b16 %v422
      %v1195 = vunpack.c.l.b16 %v423
      %v1196 = vunpack.c.h.b16 %v423
      %v1197 = vunpack.c.l.b16 %v424
      %v1198 = vunpack.c.h.b16 %v424
      %v1199 = vunpack.c.l.b16 %v425
      %v1200 = vunpack.c.h.b16 %v425
      %v1201 = vunpack.c.l.b16 %v426
      %v1202 = vunpack.c.h.b16 %v426
      %v1203 = vunpack.c.l.b16 %v427
      %v1204 = vunpack.c.h.b16 %v427
      %v1205 = vunpack.c.l.b16 %v428
      %v1206 = vunpack.c.h.b16 %v428
      %v1207 = vunpack.c.l.b16 %v429
      %v1208 = vunpack.c.h.b16 %v429
      %v1209 = vunpack.c.l.b16 %v430
      %v1210 = vunpack.c.h.b16 %v430
      %v1211 = vunpack.c.l.b16 %v431
      %v1212 = vunpack.c.h.b16 %v431
      %v1213 = vunpack.c.l.b16 %v432
      %v1214 = vunpack.c.h.b16 %v432
      %v1215 = vunpack.c.l.b16 %v433
      %v1216 = vunpack.c.h.b16 %v433
      %v1217 = vunpack.c.l.b16 %v434
      %v1218 = vunpack.c.h.b16 %v434
      %v1219 = vunpack.c.l.b16 %v435
      %v1220 = vunpack.c.h.b16 %v435
      %v1221 = vunpack.c.l.b16 %v436
      %v1222 = vunpack.c.h.b16 %v436
      %v1223 = vunpack.c.l.b16 %v437
      %v1224 = vunpack.c.h.b16 %v437
      %v1225 = vunpack.c.l.b16 %v438
      %v1226 = vunpack.c.h.b16 %v438
      %v1227 = vunpack.c.l.b16 %v439
      %v1228 = vunpack.c.h.b16 %v439
      %v1229 = vunpack.c.l.b16 %v440
      %v1230 = vunpack.c.h.b16 %v440
      %v1231 = vunpack.c.l.b16 %v441
      %v1232 = vunpack.c.h.b16 %v441
      %v1233 = vunpack.c.l.b16 %v442
      %v1234 = vunpack.c.h.b16 %v442
      %v1235 = vunpack.c.l.b16 %v443
      %v1236 = vunpack.c.h.b16 %v443
      %v1237 = vunpack.c.l.b16 %v444
      %v1238 = vunpack.c.h.b16 %v444
      %v1239 = vunpack.c.l.b16 %v445
      %v1240 = vunpack.c.h.b16 %v445
      %v1241 = vunpack.c.l.b16 %v446
      %v1242 = vunpack.c.h.b16 %v446
      %v1243 = vunpack.c.l.b16 %v447
      %v1244 = vunpack.c.h.b16 %v447
      %v1245 = vunpack.c.l.b16 %v448
      %v1246 = vunpack.c.h.b16 %v448
      %v1247 = vunpack.c.l.b16 %v449
      %v1248 = vunpack.c.h.b16 %v449
      %v1249 = vunpack.c.l.b16 %v450
      %v1250 = vunpack.c.h.b16 %v450
      %v1251 = vunpack.c.l.b16 %v451
      %v1252 = vunpack.c.h.b16 %v451
      %v1253 = vunpack.c.l.b16 %v452
      %v1254 = vunpack.c.h.b16 %v452
      %v1255 = vunpack.c.l.b16 %v453
      %v1256 = vunpack.c.h.b16 %v453
      %v1257 = vunpack.c.l.b16 %v454
      %v1258 = vunpack.c.h.b16 %v454
      %v1259 = vunpack.c.l.b16 %v455
      %v1260 = vunpack.c.h.b16 %v455
      %v1261 = vunpack.c.l.b16 %v456
      %v1262 = vunpack.c.h.b16 %v456
      %v1263 = vunpack.c.l.b16 %v457
      %v1264 = vunpack.c.h.b16 %v457
      %v1265 = vunpack.c.l.b16 %v458
      %v1266 = vunpack.c.h.b16 %v458
      %v1267 = vunpack.c.l.b16 %v459
      %v1268 = vunpack.c.h.b16 %v459
      %v1269 = vunpack.c.l.b16 %v460
      %v1270 = vunpack.c.h.b16 %v460
      %v1271 = vunpack.c.l.b16 %v461
      %v1272 = vunpack.c.h.b16 %v461
      %v1273 = vunpack.c.l.b16 %v462
      %v1274 = vunpack.c.h.b16 %v462
      %v1275 = vunpack.c.l.b16 %v463
      %v1276 = vunpack.c.h.b16 %v463
      %v1277 = vunpack.c.l.b16 %v464
      %v1278 = vunpack.c.h.b16 %v464
      %v1279 = vunpack.c.l.b16 %v465
      %v1280 = vunpack.c.h.b16 %v465
      %v1281 = vunpack.c.l.b16 %v466
      %v1282 = vunpack.c.h.b16 %v466
      %v1283 = vunpack.c.l.b16 %v467
      %v1284 = vunpack.c.h.b16 %v467
      %v1285 = vunpack.c.l.b16 %v468
      %v1286 = vunpack.c.h.b16 %v468
      %v1287 = vunpack.c.l.b16 %v469
      %v1288 = vunpack.c.h.b16 %v469
      %v1289 = vunpack.c.l.b16 %v470
      %v1290 = vunpack.c.h.b16 %v470
      %v1291 = vunpack.c.l.b16 %v471
      %v1292 = vunpack.c.h.b16 %v471
      %v1293 = vunpack.c.l.b16 %v472
      %v1294 = vunpack.c.h.b16 %v472
      %v1295 = vunpack.c.l.b16 %v473
      %v1296 = vunpack.c.h.b16 %v473
      %v1297 = vunpack.c.l.b16 %v474
      %v1298 = vunpack.c.h.b16 %v474
      %v1299 = vunpack.c.l.b16 %v475
      %v1300 = vunpack.c.h.b16 %v475
      %v1301 = vunpack.c.l.b16 %v476
      %v1302 = vunpack.c.h.b16 %v476
      %v1303 = vunpack.c.l.b16 %v477
      %v1304 = vunpack.c.h.b16 %v477
      %v1305 = vunpack.c.l.b16 %v478
      %v1306 = vunpack.c.h.b16 %v478
      %v1307 = vunpack.c.l.b16 %v479
      %v1308 = vunpack.c.h.b16 %v479
      %v1309 = vunpack.c.l.b16 %v480
      %v1310 = vunpack.c.h.b16 %v480
      %v1311 = vunpack.c.l.b16 %v481
      %v1312 = vunpack.c.h.b16 %v481
      %v1313 = vunpack.c.l.b16 %v482
      %v1314 = vunpack.c.h.b16 %v482
      %v1315 = vunpack.c.l.b16 %v483
      %v1316 = vunpack.c.h.b16 %v483
      %v1317 = vunpack.c.l.b16 %v484
      %v1318 = vunpack.c.h.b16 %v484
      %v1319 = vunpack.c.l.b16 %v485
      %v1320 = vunpack.c.h.b16 %v485
      %v1321 = vunpack.c.l.b16 %v486
      %v1322 = vunpack.c.h.b16 %v486
      %v1323 = vunpack.c.l.b16 %v487
      %v1324 = vunpack.c.h.b16 %v487
      %v1325 = vunpack.c.l.b16 %v488
      %v1326 = vunpack.c.h.b16 %v488
      %v1327 = vunpack.c.l.b16 %v489
      %v1328 = vunpack.c.h.b16 %v489
      %v1329 = vunpack.c.l.b16 %v490
      %v1330 = vunpack.c.h.b16 %v490
      %v1331 = vunpack.c.l.b16 %v491
      %v1332 = vunpack.c.h.b16 %v491
      %v1333 = vunpack.c.l.b16 %v492
      %v1334 = vunpack.c.h.b16 %v492
      %v1335 = vunpack.c.l.b16 %v493
      %v1336 = vunpack.c.h.b16 %v493
      %v1337 = vunpack.c.l.b16 %v494
      %v1338 = vunpack.c.h.b16 %v494
      %v1339 = vunpack.c.l.b16 %v495
      %v1340 = vunpack.c.h.b16 %v495
      %v1341 = vunpack.c.l.b16 %v496
      %v1342 = vunpack.c.h.b16 %v496
      %v1343 = vunpack.c.l.b16 %v497
      %v1344 = vunpack.c.h.b16 %v497
      %v1345 = vunpack.c.l.b16 %v498
      %v1346 = vunpack.c.h.b16 %v498
      %v1347 = vpack.c.b16 %v837, %v835
      %v1348 = vpack.c.b16 %v838, %v836
      %v1349 = vpack.c.b16 %v841, %v839
      %v1350 = vpack.c.b16 %v842, %v840
      %v1351 = vpack.c.b16 %v845, %v843
      %v1352 = vpack.c.b16 %v846, %v844
      %v1353 = vpack.c.b16 %v849, %v847
      %v1354 = vpack.c.b16 %v850, %v848
      %v1355 = vpack.c.b16 %v853, %v851
      %v1356 = vpack.c.b16 %v854, %v852
      %v1357 = vpack.c.b16 %v857, %v855
      %v1358 = vpack.c.b16 %v858, %v856
      %v1359 = vpack.c.b16 %v861, %v859
      %v1360 = vpack.c.b16 %v862, %v860
      %v1361 = vpack.c.b16 %v865, %v863
      %v1362 = vpack.c.b16 %v866, %v864
      %v1363 = vpack.c.b16 %v869, %v867
      %v1364 = vpack.c.b16 %v870, %v868
      %v1365 = vpack.c.b16 %v873, %v871
      %v1366 = vpack.c.b16 %v874, %v872
      %v1367 = vpack.c.b16 %v877, %v875
      %v1368 = vpack.c.b16 %v878, %v876
      %v1369 = vpack.c.b16 %v881, %v879
      %v1370 = vpack.c.b16 %v882, %v880
      %v1371 = vpack.c.b16 %v885, %v883
      %v1372 = vpack.c.b16 %v886, %v884
      %v1373 = vpack.c.b16 %v889, %v887
      %v1374 = vpack.c.b16 %v890, %v888
      %v1375 = vpack.c.b16 %v893, %v891
      %v1376 = vpack.c.b16 %v894, %v892
      %v1377 = vpack.c.b16 %v897, %v895
      %v1378 = vpack.c.b16 %v898, %v896
      %v1379 = vpack.c.b16 %v901, %v899
      %v1380 = vpack.c.b16 %v902, %v900
      %v1381 = vpack.c.b16 %v905, %v903
      %v1382 = vpack.c.b16 %v906, %v904
      %v1383 = vpack.c.b16 %v909, %v907
      %v1384 = vpack.c.b16 %v910, %v908
      %v1385 = vpack.c.b16 %v913, %v911
      %v1386 = vpack.c.b16 %v914, %v912
      %v1387 = vpack.c.b16 %v917, %v915
      %v1388 = vpack.c.b16 %v918, %v916
      %v1389 = vpack.c.b16 %v921, %v919
      %v1390 = vpack.c.b16 %v922, %v920
      %v1391 = vpack.c.b16 %v925, %v923
      %v1392 = vpack.c.b16 %v926, %v924
      %v1393 = vpack.c.b16 %v929, %v927
      %v1394 = vpack.c.b16 %v930, %v928
      %v1395 = vpack.c.b16 %v933, %v931
      %v1396 = vpack.c.b16 %v934, %v932
      %v1397 = vpack.c.b16 %v937, %v935
      %v1398 = vpack.c.b16 %v938, %v936
      %v1399 = vpack.c.b16 %v941, %v939
      %v1400 = vpack.c.b16 %v942, %v940
      %v1401 = vpack.c.b16 %v945, %v943
      %v1402 = vpack.c.b16 %v946, %v944
      %v1403 = vpack.c.b16 %v949, %v947
      %v1404 = vpack.c.b16 %v950, %v948
      %v1405 = vpack.c.b16 %v953, %v951
      %v1406 = vpack.c.b16 %v954, %v952
      %v1407 = vpack.c.b16 %v957, %v955
      %v1408 = vpack.c.b16 %v958, %v956
      %v1409 = vpack.c.b16 %v961, %v959
      %v1410 = vpack.c.b16 %v962, %v960
      %v1411 = vpack.c.b16 %v965, %v963
      %v1412 = vpack.c.b16 %v966, %v964
      %v1413 = vpack.c.b16 %v969, %v967
      %v1414 = vpack.c.b16 %v970, %v968
      %v1415 = vpack.c.b16 %v973, %v971
      %v1416 = vpack.c.b16 %v974, %v972
      %v1417 = vpack.c.b16 %v977, %v975
      %v1418 = vpack.c.b16 %v978, %v976
      %v1419 = vpack.c.b16 %v981, %v979
      %v1420 = vpack.c.b16 %v982, %v980
      %v1421 = vpack.c.b16 %v985, %v983
      %v1422 = vpack.c.b16 %v986, %v984
      %v1423 = vpack.c.b16 %v989, %v987
      %v1424 = vpack.c.b16 %v990, %v988
      %v1425 = vpack.c.b16 %v993, %v991
      %v1426 = vpack.c.b16 %v994, %v992
      %v1427 = vpack.c.b16 %v997, %v995
      %v1428 = vpack.c.b16 %v998, %v996
      %v1429 = vpack.c.b16 %v1001, %v999
      %v1430 = vpack.c.b16 %v1002, %v1000
      %v1431 = vpack.c.b16 %v1005, %v1003
      %v1432 = vpack.c.b16 %v1006, %v1004
      %v1433 = vpack.c.b16 %v1009, %v1007
      %v1434 = vpack.c.b16 %v1010, %v1008
      %v1435 = vpack.c.b16 %v1013, %v1011
      %v1436 = vpack.c.b16 %v1014, %v1012
      %v1437 = vpack.c.b16 %v1017, %v1015
      %v1438 = vpack.c.b16 %v1018, %v1016
      %v1439 = vpack.c.b16 %v1021, %v1019
      %v1440 = vpack.c.b16 %v1022, %v1020
      %v1441 = vpack.c.b16 %v1025, %v1023
      %v1442 = vpack.c.b16 %v1026, %v1024
      %v1443 = vpack.c.b16 %v1029, %v1027
      %v1444 = vpack.c.b16 %v1030, %v1028
      %v1445 = vpack.c.b16 %v1033, %v1031
      %v1446 = vpack.c.b16 %v1034, %v1032
      %v1447 = vpack.c.b16 %v1037, %v1035
      %v1448 = vpack.c.b16 %v1038, %v1036
      %v1449 = vpack.c.b16 %v1041, %v1039
      %v1450 = vpack.c.b16 %v1042, %v1040
      %v1451 = vpack.c.b16 %v1045, %v1043
      %v1452 = vpack.c.b16 %v1046, %v1044
      %v1453 = vpack.c.b16 %v1049, %v1047
      %v1454 = vpack.c.b16 %v1050, %v1048
      %v1455 = vpack.c.b16 %v1053, %v1051
      %v1456 = vpack.c.b16 %v1054, %v1052
      %v1457 = vpack.c.b16 %v1057, %v1055
      %v1458 = vpack.c.b16 %v1058, %v1056
      %v1459 = vpack.c.b16 %v1061, %v1059
      %v1460 = vpack.c.b16 %v1062, %v1060
      %v1461 = vpack.c.b16 %v1065, %v1063
      %v1462 = vpack.c.b16 %v1066, %v1064
      %v1463 = vpack.c.b16 %v1069, %v1067
      %v1464 = vpack.c.b16 %v1070, %v1068
      %v1465 = vpack.c.b16 %v1073, %v1071
      %v1466 = vpack.c.b16 %v1074, %v1072
      %v1467 = vpack.c.b16 %v1077, %v1075
      %v1468 = vpack.c.b16 %v1078, %v1076
      %v1469 = vpack.c.b16 %v1081, %v1079
      %v1470 = vpack.c.b16 %v1082, %v1080
      %v1471 = vpack.c.b16 %v1085, %v1083
      %v1472 = vpack.c.b16 %v1086, %v1084
      %v1473 = vpack.c.b16 %v1089, %v1087
      %v1474 = vpack.c.b16 %v1090, %v1088
      %v1475 = vpack.c.b16 %v1093, %v1091
      %v1476 = vpack.c.b16 %v1094, %v1092
      %v1477 = vpack.c.b16 %v1097, %v1095
      %v1478 = vpack.c.b16 %v1098, %v1096
      %v1479 = vpack.c.b16 %v1101, %v1099
      %v1480 = vpack.c.b16 %v1102, %v1100
      %v1481 = vpack.c.b16 %v1105, %v1103
      %v1482 = vpack.c.b16 %v1106, %v1104
      %v1483 = vpack.c.b16 %v1109, %v1107
      %v1484 = vpack.c.b16 %v1110, %v1108
      %v1485 = vpack.c.b16 %v1113, %v1111
      %v1486 = vpack.c.b16 %v1114, %v1112
      %v1487 = vpack.c.b16 %v1117, %v1115
      %v1488 = vpack.c.b16 %v1118, %v1116
      %v1489 = vpack.c.b16 %v1121, %v1119
      %v1490 = vpack.c.b16 %v1122, %v1120
      %v1491 = vpack.c.b16 %v1125, %v1123
      %v1492 = vpack.c.b16 %v1126, %v1124
      %v1493 = vpack.c.b16 %v1129, %v1127
      %v1494 = vpack.c.b16 %v1130, %v1128
      %v1495 = vpack.c.b16 %v1133, %v1131
      %v1496 = vpack.c.b16 %v1134, %v1132
      %v1497 = vpack.c.b16 %v1137, %v1135
      %v1498 = vpack.c.b16 %v1138, %v1136
      %v1499 = vpack.c.b16 %v1141, %v1139
      %v1500 = vpack.c.b16 %v1142, %v1140
      %v1501 = vpack.c.b16 %v1145, %v1143
      %v1502 = vpack.c.b16 %v1146, %v1144
      %v1503 = vpack.c.b16 %v1149, %v1147
      %v1504 = vpack.c.b16 %v1150, %v1148
      %v1505 = vpack.c.b16 %v1153, %v1151
      %v1506 = vpack.c.b16 %v1154, %v1152
      %v1507 = vpack.c.b16 %v1157, %v1155
      %v1508 = vpack.c.b16 %v1158, %v1156
      %v1509 = vpack.c.b16 %v1161, %v1159
      %v1510 = vpack.c.b16 %v1162, %v1160
      %v1511 = vpack.c.b16 %v1165, %v1163
      %v1512 = vpack.c.b16 %v1166, %v1164
      %v1513 = vpack.c.b16 %v1169, %v1167
      %v1514 = vpack.c.b16 %v1170, %v1168
      %v1515 = vpack.c.b16 %v1173, %v1171
      %v1516 = vpack.c.b16 %v1174, %v1172
      %v1517 = vpack.c.b16 %v1177, %v1175
      %v1518 = vpack.c.b16 %v1178, %v1176
      %v1519 = vpack.c.b16 %v1181, %v1179
      %v1520 = vpack.c.b16 %v1182, %v1180
      %v1521 = vpack.c.b16 %v1185, %v1183
      %v1522 = vpack.c.b16 %v1186, %v1184
      %v1523 = vpack.c.b16 %v1189, %v1187
      %v1524 = vpack.c.b16 %v1190, %v1188
      %v1525 = vpack.c.b16 %v1193, %v1191
      %v1526 = vpack.c.b16 %v1194, %v1192
      %v1527 = vpack.c.b16 %v1197, %v1195
      %v1528 = vpack.c.b16 %v1198, %v1196
      %v1529 = vpack.c.b16 %v1201, %v1199
      %v1530 = vpack.c.b16 %v1202, %v1200
      %v1531 = vpack.c.b16 %v1205, %v1203
      %v1532 = vpack.c.b16 %v1206, %v1204
      %v1533 = vpack.c.b16 %v1209, %v1207
      %v1534 = vpack.c.b16 %v1210, %v1208
      %v1535 = vpack.c.b16 %v1213, %v1211
      %v1536 = vpack.c.b16 %v1214, %v1212
      %v1537 = vpack.c.b16 %v1217, %v1215
      %v1538 = vpack.c.b16 %v1218, %v1216
      %v1539 = vpack.c.b16 %v1221, %v1219
      %v1540 = vpack.c.b16 %v1222, %v1220
      %v1541 = vpack.c.b16 %v1225, %v1223
      %v1542 = vpack.c.b16 %v1226, %v1224
      %v1543 = vpack.c.b16 %v1229, %v1227
      %v1544 = vpack.c.b16 %v1230, %v1228
      %v1545 = vpack.c.b16 %v1233, %v1231
      %v1546 = vpack.c.b16 %v1234, %v1232
      %v1547 = vpack.c.b16 %v1237, %v1235
      %v1548 = vpack.c.b16 %v1238, %v1236
      %v1549 = vpack.c.b16 %v1241, %v1239
      %v1550 = vpack.c.b16 %v1242, %v1240
      %v1551 = vpack.c.b16 %v1245, %v1243
      %v1552 = vpack.c.b16 %v1246, %v1244
      %v1553 = vpack.c.b16 %v1249, %v1247
      %v1554 = vpack.c.b16 %v1250, %v1248
      %v1555 = vpack.c.b16 %v1253, %v1251
      %v1556 = vpack.c.b16 %v1254, %v1252
      %v1557 = vpack.c.b16 %v1257, %v1255
      %v1558 = vpack.c.b16 %v1258, %v1256
      %v1559 = vpack.c.b16 %v1261, %v1259
      %v1560 = vpack.c.b16 %v1262, %v1260
      %v1561 = vpack.c.b16 %v1265, %v1263
      %v1562 = vpack.c.b16 %v1266, %v1264
      %v1563 = vpack.c.b16 %v1269, %v1267
      %v1564 = vpack.c.b16 %v1270, %v1268
      %v1565 = vpack.c.b16 %v1273, %v1271
      %v1566 = vpack.c.b16 %v1274, %v1272
      %v1567 = vpack.c.b16 %v1277, %v1275
      %v1568 = vpack.c.b16 %v1278, %v1276
      %v1569 = vpack.c.b16 %v1281, %v1279
      %v1570 = vpack.c.b16 %v1282, %v1280
      %v1571 = vpack.c.b16 %v1285, %v1283
      %v1572 = vpack.c.b16 %v1286, %v1284
      %v1573 = vpack.c.b16 %v1289, %v1287
      %v1574 = vpack.c.b16 %v1290, %v1288
      %v1575 = vpack.c.b16 %v1293, %v1291
      %v1576 = vpack.c.b16 %v1294, %v1292
      %v1577 = vpack.c.b16 %v1297, %v1295
      %v1578 = vpack.c.b16 %v1298, %v1296
      %v1579 = vpack.c.b16 %v1301, %v1299
      %v1580 = vpack.c.b16 %v1302, %v1300
      %v1581 = vpack.c.b16 %v1305, %v1303
      %v1582 = vpack.c.b16 %v1306, %v1304
      %v1583 = vpack.c.b16 %v1309, %v1307
      %v1584 = vpack.c.b16 %v1310, %v1308
      %v1585 = vpack.c.b16 %v1313, %v1311
      %v1586 = vpack.c.b16 %v1314, %v1312
      %v1587 = vpack.c.b16 %v1317, %v1315
      %v1588 = vpack.c.b16 %v1318, %v1316
      %v1589 = vpack.c.b16 %v1321, %v1319
      %v1590 = vpack.c.b16 %v1322, %v1320
      %v1591 = vpack.c.b16 %v1325, %v1323
      %v1592 = vpack.c.b16 %v1326, %v1324
      %v1593 = vpack.c.b16 %v1329, %v1327
      %v1594 = vpack.c.b16 %v1330, %v1328
      %v1595 = vpack.c.b16 %v1333, %v1331
      %v1596 = vpack.c.b16 %v1334, %v1332
      %v1597 = vpack.c.b16 %v1337, %v1335
      %v1598 = vpack.c.b16 %v1338, %v1336
      %v1599 = vpack.c.b16 %v1341, %v1339
      %v1600 = vpack.c.b16 %v1342, %v1340
      %v1601 = vpack.c.b16 %v1345, %v1343
      %v1602 = vpack.c.b16 %v1346, %v1344
      %1859 = vmatprep.subr.bf16.mxu0 %v1348
      %1860 = vmatpush1.bf16.msra.mxu0 %v1347
      %1861 = vmatprep.subr.bf16.mxu0 %v1350
      %1862 = vmatpush1.bf16.msra.mxu0 %v1349
      %1863 = vmatprep.subr.bf16.mxu0 %v1352
      %1864 = vmatpush1.bf16.msra.mxu0 %v1351
      %1865 = vmatprep.subr.bf16.mxu0 %v1354
      %1866 = vmatpush1.bf16.msra.mxu0 %v1353
      %1867 = vmatprep.subr.bf16.mxu0 %v1356
      %1868 = vmatpush1.bf16.msra.mxu0 %v1355
      %1869 = vmatprep.subr.bf16.mxu0 %v1358
      %1870 = vmatpush1.bf16.msra.mxu0 %v1357
      %1871 = vmatprep.subr.bf16.mxu0 %v1360
      %1872 = vmatpush1.bf16.msra.mxu0 %v1359
      %1873 = vmatprep.subr.bf16.mxu0 %v1362
      %1874 = vmatpush1.bf16.msra.mxu0 %v1361
      %1875 = vmatprep.subr.bf16.mxu0 %v1364
      %1876 = vmatpush1.bf16.msra.mxu0 %v1363
      %1877 = vmatprep.subr.bf16.mxu0 %v1366
      %1878 = vmatpush1.bf16.msra.mxu0 %v1365
      %1879 = vmatprep.subr.bf16.mxu0 %v1368
      %1880 = vmatpush1.bf16.msra.mxu0 %v1367
      %1881 = vmatprep.subr.bf16.mxu0 %v1370
      %1882 = vmatpush1.bf16.msra.mxu0 %v1369
      %1883 = vmatprep.subr.bf16.mxu0 %v1372
      %1884 = vmatpush1.bf16.msra.mxu0 %v1371
      %1885 = vmatprep.subr.bf16.mxu0 %v1374
      %1886 = vmatpush1.bf16.msra.mxu0 %v1373
      %1887 = vmatprep.subr.bf16.mxu0 %v1376
      %1888 = vmatpush1.bf16.msra.mxu0 %v1375
      %1889 = vmatprep.subr.bf16.mxu0 %v1378
      %1890 = vmatpush1.bf16.msra.mxu0 %v1377
      %1891 = vmatprep.mubr.bf16.mxu0 %v548
      %1892 = vmatmul.mubr.bf16.gmra.mrb[0].mxu0 %v547
      %v1893 = vpop.f32.mrb[0].mxu0
      %v1894 = vadd.f32 0.0, %v1893
      %v1895 = vpop.f32.mrb[0].mxu0
      %v1896 = vadd.f32 0.0, %v1895
      %v1897 = vpop.f32.mrb[0].mxu0
      %v1898 = vadd.f32 0.0, %v1897
      %v1899 = vpop.f32.mrb[0].mxu0
      %v1900 = vadd.f32 0.0, %v1899
      %1901 = vdwg.mxu0
      %1902 = vmatprep.subr.bf16.mxu0 %v1380
      %1903 = vmatpush1.bf16.msra.mxu0 %v1379
      %1904 = vmatprep.subr.bf16.mxu0 %v1382
      %1905 = vmatpush1.bf16.msra.mxu0 %v1381
      %1906 = vmatprep.subr.bf16.mxu0 %v1384
      %1907 = vmatpush1.bf16.msra.mxu0 %v1383
      %1908 = vmatprep.subr.bf16.mxu0 %v1386
      %1909 = vmatpush1.bf16.msra.mxu0 %v1385
      %1910 = vmatprep.subr.bf16.mxu0 %v1388
      %1911 = vmatpush1.bf16.msra.mxu0 %v1387
      %1912 = vmatprep.subr.bf16.mxu0 %v1390
      %1913 = vmatpush1.bf16.msra.mxu0 %v1389
      %1914 = vmatprep.subr.bf16.mxu0 %v1392
      %1915 = vmatpush1.bf16.msra.mxu0 %v1391
      %1916 = vmatprep.subr.bf16.mxu0 %v1394
      %1917 = vmatpush1.bf16.msra.mxu0 %v1393
      %1918 = vmatprep.subr.bf16.mxu0 %v1396
      %1919 = vmatpush1.bf16.msra.mxu0 %v1395
      %1920 = vmatprep.subr.bf16.mxu0 %v1398
      %1921 = vmatpush1.bf16.msra.mxu0 %v1397
      %1922 = vmatprep.subr.bf16.mxu0 %v1400
      %1923 = vmatpush1.bf16.msra.mxu0 %v1399
      %1924 = vmatprep.subr.bf16.mxu0 %v1402
      %1925 = vmatpush1.bf16.msra.mxu0 %v1401
      %1926 = vmatprep.subr.bf16.mxu0 %v1404
      %1927 = vmatpush1.bf16.msra.mxu0 %v1403
      %1928 = vmatprep.subr.bf16.mxu0 %v1406
      %1929 = vmatpush1.bf16.msra.mxu0 %v1405
      %1930 = vmatprep.subr.bf16.mxu0 %v1408
      %1931 = vmatpush1.bf16.msra.mxu0 %v1407
      %1932 = vmatprep.subr.bf16.mxu0 %v1410
      %1933 = vmatpush1.bf16.msra.mxu0 %v1409
      %1934 = vmatprep.mubr.bf16.mxu0 %v550
      %1935 = vmatmul.mubr.bf16.gmra.mrb[0].mxu0 %v549
      %v1936 = vpop.f32.mrb[0].mxu0
      %v1937 = vadd.f32 %v1894, %v1936
      %v1938 = vpop.f32.mrb[0].mxu0
      %v1939 = vadd.f32 %v1896, %v1938
      %v1940 = vpop.f32.mrb[0].mxu0
      %v1941 = vadd.f32 %v1898, %v1940
      %v1942 = vpop.f32.mrb[0].mxu0
      %v1943 = vadd.f32 %v1900, %v1942
      %1944 = vdwg.mxu0
      %1945 = vmatprep.subr.bf16.mxu0 %v1412
      %1946 = vmatpush1.bf16.msra.mxu0 %v1411
      %1947 = vmatprep.subr.bf16.mxu0 %v1414
      %1948 = vmatpush1.bf16.msra.mxu0 %v1413
      %1949 = vmatprep.subr.bf16.mxu0 %v1416
      %1950 = vmatpush1.bf16.msra.mxu0 %v1415
      %1951 = vmatprep.subr.bf16.mxu0 %v1418
      %1952 = vmatpush1.bf16.msra.mxu0 %v1417
      %1953 = vmatprep.subr.bf16.mxu0 %v1420
      %1954 = vmatpush1.bf16.msra.mxu0 %v1419
      %1955 = vmatprep.subr.bf16.mxu0 %v1422
      %1956 = vmatpush1.bf16.msra.mxu0 %v1421
      %1957 = vmatprep.subr.bf16.mxu0 %v1424
      %1958 = vmatpush1.bf16.msra.mxu0 %v1423
      %1959 = vmatprep.subr.bf16.mxu0 %v1426
      %1960 = vmatpush1.bf16.msra.mxu0 %v1425
      %1961 = vmatprep.subr.bf16.mxu0 %v1428
      %1962 = vmatpush1.bf16.msra.mxu0 %v1427
      %1963 = vmatprep.subr.bf16.mxu0 %v1430
      %1964 = vmatpush1.bf16.msra.mxu0 %v1429
      %1965 = vmatprep.subr.bf16.mxu0 %v1432
      %1966 = vmatpush1.bf16.msra.mxu0 %v1431
      %1967 = vmatprep.subr.bf16.mxu0 %v1434
      %1968 = vmatpush1.bf16.msra.mxu0 %v1433
      %1969 = vmatprep.subr.bf16.mxu0 %v1436
      %1970 = vmatpush1.bf16.msra.mxu0 %v1435
      %1971 = vmatprep.subr.bf16.mxu0 %v1438
      %1972 = vmatpush1.bf16.msra.mxu0 %v1437
      %1973 = vmatprep.subr.bf16.mxu0 %v1440
      %1974 = vmatpush1.bf16.msra.mxu0 %v1439
      %1975 = vmatprep.subr.bf16.mxu0 %v1442
      %1976 = vmatpush1.bf16.msra.mxu0 %v1441
      %1977 = vmatprep.mubr.bf16.mxu0 %v552
      %1978 = vmatmul.mubr.bf16.gmra.mrb[0].mxu0 %v551
      %v1979 = vpop.f32.mrb[0].mxu0
      %v1980 = vadd.f32 %v1937, %v1979
      %v1981 = vpop.f32.mrb[0].mxu0
      %v1982 = vadd.f32 %v1939, %v1981
      %v1983 = vpop.f32.mrb[0].mxu0
      %v1984 = vadd.f32 %v1941, %v1983
      %v1985 = vpop.f32.mrb[0].mxu0
      %v1986 = vadd.f32 %v1943, %v1985
      %1987 = vdwg.mxu0
      %1988 = vmatprep.subr.bf16.mxu0 %v1444
      %1989 = vmatpush1.bf16.msra.mxu0 %v1443
      %1990 = vmatprep.subr.bf16.mxu0 %v1446
      %1991 = vmatpush1.bf16.msra.mxu0 %v1445
      %1992 = vmatprep.subr.bf16.mxu0 %v1448
      %1993 = vmatpush1.bf16.msra.mxu0 %v1447
      %1994 = vmatprep.subr.bf16.mxu0 %v1450
      %1995 = vmatpush1.bf16.msra.mxu0 %v1449
      %1996 = vmatprep.subr.bf16.mxu0 %v1452
      %1997 = vmatpush1.bf16.msra.mxu0 %v1451
      %1998 = vmatprep.subr.bf16.mxu0 %v1454
      %1999 = vmatpush1.bf16.msra.mxu0 %v1453
      %2000 = vmatprep.subr.bf16.mxu0 %v1456
      %2001 = vmatpush1.bf16.msra.mxu0 %v1455
      %2002 = vmatprep.subr.bf16.mxu0 %v1458
      %2003 = vmatpush1.bf16.msra.mxu0 %v1457
      %2004 = vmatprep.subr.bf16.mxu0 %v1460
      %2005 = vmatpush1.bf16.msra.mxu0 %v1459
      %2006 = vmatprep.subr.bf16.mxu0 %v1462
      %2007 = vmatpush1.bf16.msra.mxu0 %v1461
      %2008 = vmatprep.subr.bf16.mxu0 %v1464
      %2009 = vmatpush1.bf16.msra.mxu0 %v1463
      %2010 = vmatprep.subr.bf16.mxu0 %v1466
      %2011 = vmatpush1.bf16.msra.mxu0 %v1465
      %2012 = vmatprep.subr.bf16.mxu0 %v1468
      %2013 = vmatpush1.bf16.msra.mxu0 %v1467
      %2014 = vmatprep.subr.bf16.mxu0 %v1470
      %2015 = vmatpush1.bf16.msra.mxu0 %v1469
      %2016 = vmatprep.subr.bf16.mxu0 %v1472
      %2017 = vmatpush1.bf16.msra.mxu0 %v1471
      %2018 = vmatprep.subr.bf16.mxu0 %v1474
      %2019 = vmatpush1.bf16.msra.mxu0 %v1473
      %2020 = vmatprep.mubr.bf16.mxu0 %v554
      %2021 = vmatmul.mubr.bf16.gmra.mrb[0].mxu0 %v553
      %v2022 = vpop.f32.mrb[0].mxu0
      %v2023 = vadd.f32 %v1980, %v2022
      %v2024 = vpop.f32.mrb[0].mxu0
      %v2025 = vadd.f32 %v1982, %v2024
      %v2026 = vpop.f32.mrb[0].mxu0
      %v2027 = vadd.f32 %v1984, %v2026
      %v2028 = vpop.f32.mrb[0].mxu0
      %v2029 = vadd.f32 %v1986, %v2028
      %2030 = vdwg.mxu0
      %2031 = vmatprep.subr.bf16.mxu0 %v1476
      %2032 = vmatpush1.bf16.msra.mxu0 %v1475
      %2033 = vmatprep.subr.bf16.mxu0 %v1478
      %2034 = vmatpush1.bf16.msra.mxu0 %v1477
      %2035 = vmatprep.subr.bf16.mxu0 %v1480
      %2036 = vmatpush1.bf16.msra.mxu0 %v1479
      %2037 = vmatprep.subr.bf16.mxu0 %v1482
      %2038 = vmatpush1.bf16.msra.mxu0 %v1481
      %2039 = vmatprep.subr.bf16.mxu0 %v1484
      %2040 = vmatpush1.bf16.msra.mxu0 %v1483
      %2041 = vmatprep.subr.bf16.mxu0 %v1486
      %2042 = vmatpush1.bf16.msra.mxu0 %v1485
      %2043 = vmatprep.subr.bf16.mxu0 %v1488
      %2044 = vmatpush1.bf16.msra.mxu0 %v1487
      %2045 = vmatprep.subr.bf16.mxu0 %v1490
      %2046 = vmatpush1.bf16.msra.mxu0 %v1489
      %2047 = vmatprep.subr.bf16.mxu0 %v1492
      %2048 = vmatpush1.bf16.msra.mxu0 %v1491
      %2049 = vmatprep.subr.bf16.mxu0 %v1494
      %2050 = vmatpush1.bf16.msra.mxu0 %v1493
      %2051 = vmatprep.subr.bf16.mxu0 %v1496
      %2052 = vmatpush1.bf16.msra.mxu0 %v1495
      %2053 = vmatprep.subr.bf16.mxu0 %v1498
      %2054 = vmatpush1.bf16.msra.mxu0 %v1497
      %2055 = vmatprep.subr.bf16.mxu0 %v1500
      %2056 = vmatpush1.bf16.msra.mxu0 %v1499
      %2057 = vmatprep.subr.bf16.mxu0 %v1502
      %2058 = vmatpush1.bf16.msra.mxu0 %v1501
      %2059 = vmatprep.subr.bf16.mxu0 %v1504
      %2060 = vmatpush1.bf16.msra.mxu0 %v1503
      %2061 = vmatprep.subr.bf16.mxu0 %v1506
      %2062 = vmatpush1.bf16.msra.mxu0 %v1505
      %2063 = vmatprep.mubr.bf16.mxu0 %v556
      %2064 = vmatmul.mubr.bf16.gmra.mrb[0].mxu0 %v555
      %v2065 = vpop.f32.mrb[0].mxu0
      %v2066 = vadd.f32 %v2023, %v2065
      %v2067 = vpop.f32.mrb[0].mxu0
      %v2068 = vadd.f32 %v2025, %v2067
      %v2069 = vpop.f32.mrb[0].mxu0
      %v2070 = vadd.f32 %v2027, %v2069
      %v2071 = vpop.f32.mrb[0].mxu0
      %v2072 = vadd.f32 %v2029, %v2071
      %2073 = vdwg.mxu0
      %2074 = vmatprep.subr.bf16.mxu0 %v1508
      %2075 = vmatpush1.bf16.msra.mxu0 %v1507
      %2076 = vmatprep.subr.bf16.mxu0 %v1510
      %2077 = vmatpush1.bf16.msra.mxu0 %v1509
      %2078 = vmatprep.subr.bf16.mxu0 %v1512
      %2079 = vmatpush1.bf16.msra.mxu0 %v1511
      %2080 = vmatprep.subr.bf16.mxu0 %v1514
      %2081 = vmatpush1.bf16.msra.mxu0 %v1513
      %2082 = vmatprep.subr.bf16.mxu0 %v1516
      %2083 = vmatpush1.bf16.msra.mxu0 %v1515
      %2084 = vmatprep.subr.bf16.mxu0 %v1518
      %2085 = vmatpush1.bf16.msra.mxu0 %v1517
      %2086 = vmatprep.subr.bf16.mxu0 %v1520
      %2087 = vmatpush1.bf16.msra.mxu0 %v1519
      %2088 = vmatprep.subr.bf16.mxu0 %v1522
      %2089 = vmatpush1.bf16.msra.mxu0 %v1521
      %2090 = vmatprep.subr.bf16.mxu0 %v1524
      %2091 = vmatpush1.bf16.msra.mxu0 %v1523
      %2092 = vmatprep.subr.bf16.mxu0 %v1526
      %2093 = vmatpush1.bf16.msra.mxu0 %v1525
      %2094 = vmatprep.subr.bf16.mxu0 %v1528
      %2095 = vmatpush1.bf16.msra.mxu0 %v1527
      %2096 = vmatprep.subr.bf16.mxu0 %v1530
      %2097 = vmatpush1.bf16.msra.mxu0 %v1529
      %2098 = vmatprep.subr.bf16.mxu0 %v1532
      %2099 = vmatpush1.bf16.msra.mxu0 %v1531
      %2100 = vmatprep.subr.bf16.mxu0 %v1534
      %2101 = vmatpush1.bf16.msra.mxu0 %v1533
      %2102 = vmatprep.subr.bf16.mxu0 %v1536
      %2103 = vmatpush1.bf16.msra.mxu0 %v1535
      %2104 = vmatprep.subr.bf16.mxu0 %v1538
      %2105 = vmatpush1.bf16.msra.mxu0 %v1537
      %2106 = vmatprep.mubr.bf16.mxu0 %v558
      %2107 = vmatmul.mubr.bf16.gmra.mrb[0].mxu0 %v557
      %v2108 = vpop.f32.mrb[0].mxu0
      %v2109 = vadd.f32 %v2066, %v2108
      %v2110 = vpop.f32.mrb[0].mxu0
      %v2111 = vadd.f32 %v2068, %v2110
      %v2112 = vpop.f32.mrb[0].mxu0
      %v2113 = vadd.f32 %v2070, %v2112
      %v2114 = vpop.f32.mrb[0].mxu0
      %v2115 = vadd.f32 %v2072, %v2114
      %2116 = vdwg.mxu0
      %2117 = vmatprep.subr.bf16.mxu0 %v1540
      %2118 = vmatpush1.bf16.msra.mxu0 %v1539
      %2119 = vmatprep.subr.bf16.mxu0 %v1542
      %2120 = vmatpush1.bf16.msra.mxu0 %v1541
      %2121 = vmatprep.subr.bf16.mxu0 %v1544
      %2122 = vmatpush1.bf16.msra.mxu0 %v1543
      %2123 = vmatprep.subr.bf16.mxu0 %v1546
      %2124 = vmatpush1.bf16.msra.mxu0 %v1545
      %2125 = vmatprep.subr.bf16.mxu0 %v1548
      %2126 = vmatpush1.bf16.msra.mxu0 %v1547
      %2127 = vmatprep.subr.bf16.mxu0 %v1550
      %2128 = vmatpush1.bf16.msra.mxu0 %v1549
      %2129 = vmatprep.subr.bf16.mxu0 %v1552
      %2130 = vmatpush1.bf16.msra.mxu0 %v1551
      %2131 = vmatprep.subr.bf16.mxu0 %v1554
      %2132 = vmatpush1.bf16.msra.mxu0 %v1553
      %2133 = vmatprep.subr.bf16.mxu0 %v1556
      %2134 = vmatpush1.bf16.msra.mxu0 %v1555
      %2135 = vmatprep.subr.bf16.mxu0 %v1558
      %2136 = vmatpush1.bf16.msra.mxu0 %v1557
      %2137 = vmatprep.subr.bf16.mxu0 %v1560
      %2138 = vmatpush1.bf16.msra.mxu0 %v1559
      %2139 = vmatprep.subr.bf16.mxu0 %v1562
      %2140 = vmatpush1.bf16.msra.mxu0 %v1561
      %2141 = vmatprep.subr.bf16.mxu0 %v1564
      %2142 = vmatpush1.bf16.msra.mxu0 %v1563
      %2143 = vmatprep.subr.bf16.mxu0 %v1566
      %2144 = vmatpush1.bf16.msra.mxu0 %v1565
      %2145 = vmatprep.subr.bf16.mxu0 %v1568
      %2146 = vmatpush1.bf16.msra.mxu0 %v1567
      %2147 = vmatprep.subr.bf16.mxu0 %v1570
      %2148 = vmatpush1.bf16.msra.mxu0 %v1569
      %2149 = vmatprep.mubr.bf16.mxu0 %v560
      %2150 = vmatmul.mubr.bf16.gmra.mrb[0].mxu0 %v559
      %v2151 = vpop.f32.mrb[0].mxu0
      %v2152 = vadd.f32 %v2109, %v2151
      %v2153 = vpop.f32.mrb[0].mxu0
      %v2154 = vadd.f32 %v2111, %v2153
      %v2155 = vpop.f32.mrb[0].mxu0
      %v2156 = vadd.f32 %v2113, %v2155
      %v2157 = vpop.f32.mrb[0].mxu0
      %v2158 = vadd.f32 %v2115, %v2157
      %2159 = vdwg.mxu0
      %2160 = vmatprep.subr.bf16.mxu0 %v1572
      %2161 = vmatpush1.bf16.msra.mxu0 %v1571
      %2162 = vmatprep.subr.bf16.mxu0 %v1574
      %2163 = vmatpush1.bf16.msra.mxu0 %v1573
      %2164 = vmatprep.subr.bf16.mxu0 %v1576
      %2165 = vmatpush1.bf16.msra.mxu0 %v1575
      %2166 = vmatprep.subr.bf16.mxu0 %v1578
      %2167 = vmatpush1.bf16.msra.mxu0 %v1577
      %2168 = vmatprep.subr.bf16.mxu0 %v1580
      %2169 = vmatpush1.bf16.msra.mxu0 %v1579
      %2170 = vmatprep.subr.bf16.mxu0 %v1582
      %2171 = vmatpush1.bf16.msra.mxu0 %v1581
      %2172 = vmatprep.subr.bf16.mxu0 %v1584
      %2173 = vmatpush1.bf16.msra.mxu0 %v1583
      %2174 = vmatprep.subr.bf16.mxu0 %v1586
      %2175 = vmatpush1.bf16.msra.mxu0 %v1585
      %2176 = vmatprep.subr.bf16.mxu0 %v1588
      %2177 = vmatpush1.bf16.msra.mxu0 %v1587
      %2178 = vmatprep.subr.bf16.mxu0 %v1590
      %2179 = vmatpush1.bf16.msra.mxu0 %v1589
      %2180 = vmatprep.subr.bf16.mxu0 %v1592
      %2181 = vmatpush1.bf16.msra.mxu0 %v1591
      %2182 = vmatprep.subr.bf16.mxu0 %v1594
      %2183 = vmatpush1.bf16.msra.mxu0 %v1593
      %2184 = vmatprep.subr.bf16.mxu0 %v1596
      %2185 = vmatpush1.bf16.msra.mxu0 %v1595
      %2186 = vmatprep.subr.bf16.mxu0 %v1598
      %2187 = vmatpush1.bf16.msra.mxu0 %v1597
      %2188 = vmatprep.subr.bf16.mxu0 %v1600
      %2189 = vmatpush1.bf16.msra.mxu0 %v1599
      %2190 = vmatprep.subr.bf16.mxu0 %v1602
      %2191 = vmatpush1.bf16.msra.mxu0 %v1601
      %2192 = vmatprep.mubr.bf16.mxu0 %v562
      %2193 = vmatmul.mubr.bf16.gmra.mrb[0].mxu0 %v561
      %v2194 = vpop.f32.mrb[0].mxu0
      %v2195 = vadd.f32 %v2152, %v2194
      %v2196 = vpop.f32.mrb[0].mxu0
      %v2197 = vadd.f32 %v2154, %v2196
      %v2198 = vpop.f32.mrb[0].mxu0
      %v2199 = vadd.f32 %v2156, %v2198
      %v2200 = vpop.f32.mrb[0].mxu0
      %v2201 = vadd.f32 %v2158, %v2200
      %2202 = vdwg.mxu0
      %2203 = vst [vmem:[%s217] sm:$0xff] %v2195
      %2204 = vst [vmem:[%s217 + $0x8] sm:$0xff] %v2197
      %2205 = vst [vmem:[%s217 + $0x10] sm:$0xff] %v2199
      %2206 = vst [vmem:[%s217 + $0x18] sm:$0xff] %v2201
      %v2207 = vadd.f32 %v2195, %v2199
      %v2208 = vrot.slane %v2207, 4
      %v2209 = vadd.f32 %v2207, %v2208
      %v2210 = vrot.slane %v2209, 2
      %v2211 = vadd.f32 %v2209, %v2210
      %v2212 = vrot.slane %v2211, 1
      %v2213 = vadd.f32 %v2211, %v2212
      %v2214 = vadd.f32 %v2197, %v2201
      %v2215 = vrot.slane %v2214, 4
      %v2216 = vadd.f32 %v2214, %v2215
      %v2217 = vrot.slane %v2216, 2
      %v2218 = vadd.f32 %v2216, %v2217
      %v2219 = vrot.slane %v2218, 1
      %v2220 = vadd.f32 %v2218, %v2219
      %v2223 = vcombine.low %v2213, %v2220
      %v2225 = vunpack.c.l.s4 1966171168
      %v2226 = vunpack.c.0.s8 %v2225
      %v2227 = vlaneseq
      %v2228 = vshrl.u32 %v2227, 7
      %v2229 = vsub.s32 %v2226, %v2228
      %v2230 = vrot.slane %v2223, %v2229
      %v2232 = vunpack.c.l.s4 1966171168
      %v2233 = vunpack.c.0.s8 %v2232
      %v2234 = vlaneseq
      %v2235 = vshrl.u32 %v2234, 7
      %v2236 = vsub.s32 %v2233, %v2235
      %v2237 = vrot.slane %v2230, %v2236
      %v2239 = vlaneseq
      %vm2240 = vcmp.ge.s32.totalorder %v2239, 0
      %vm2241 = vcmp.lt.s32.totalorder %v2239, 256
      %vm2242 = vmand %vm2240, %vm2241
      %2243 = vst.msk [vmem:[%s222] sm:$0x3] %vm2242, %v2237
      %v2244 = vmul.f32 %v2195, %v2195
      %v2245 = vmul.f32 %v2197, %v2197
      %v2246 = vmul.f32 %v2199, %v2199
      %v2247 = vmul.f32 %v2201, %v2201
      %v2248 = vadd.f32 %v2244, %v2246
      %v2249 = vrot.slane %v2248, 4
      %v2250 = vadd.f32 %v2248, %v2249
      %v2251 = vrot.slane %v2250, 2
      %v2252 = vadd.f32 %v2250, %v2251
      %v2253 = vrot.slane %v2252, 1
      %v2254 = vadd.f32 %v2252, %v2253
      %v2255 = vadd.f32 %v2245, %v2247
      %v2256 = vrot.slane %v2255, 4
      %v2257 = vadd.f32 %v2255, %v2256
      %v2258 = vrot.slane %v2257, 2
      %v2259 = vadd.f32 %v2257, %v2258
      %v2260 = vrot.slane %v2259, 1
      %v2261 = vadd.f32 %v2259, %v2260
      %v2264 = vcombine.low %v2254, %v2261
      %v2266 = vunpack.c.l.s4 1966171168
      %v2267 = vunpack.c.0.s8 %v2266
      %v2268 = vlaneseq
      %v2269 = vshrl.u32 %v2268, 7
      %v2270 = vsub.s32 %v2267, %v2269
      %v2271 = vrot.slane %v2264, %v2270
      %v2273 = vunpack.c.l.s4 1966171168
      %v2274 = vunpack.c.0.s8 %v2273
      %v2275 = vlaneseq
      %v2276 = vshrl.u32 %v2275, 7
      %v2277 = vsub.s32 %v2274, %v2276
      %v2278 = vrot.slane %v2271, %v2277
      %2280 = vst.msk [vmem:[%s226] sm:$0x3] %vm2242, %v2278
      %s2281 = smul.u32 2, %s16
      %p2282 = scmp.lt.s32.totalorder %s2281, 3
      %s2283 = scalar_select %p2282, %s2281, 3
      %s2284 = smul.addr %s2283, 2
      %s2285 = smul.addr %s2284, 8
      %s2286 = scalar_lea.vmem %s2, %s2285
      %p2287 = scmp.lt.s32.totalorder %s16, 1
      %s2288 = scalar_select %p2287, %s16, 1
      %s2289 = smul.addr %s2288, 2
      %s2290 = scalar_lea.vmem %s3, %s2289
      %p2291 = scmp.lt.s32.totalorder %s16, 1
      %s2292 = scalar_select %p2291, %s16, 1
      %s2293 = smul.addr %s2292, 2
      %s2294 = scalar_lea.vmem %s4, %s2293
      // Predicated region
      $region29: #{conditional_discriminator_forward.8} parent=27 // pred_check
        %p2295 = pneg %p81
      $region30: #{conditional_discriminator_forward.8} parent=27 // pred_check_branch
        %2297 = sbr.rel (%p2295) target = $region32
      $region31: #{conditional_discriminator_forward.8} parent=27 // pred_region
        %s2298 = smul.u32 2, %s16
      $region32: #{conditional_discriminator_forward.8} parent=27 // pred_fallthru
        _
      // Predicated region
      $region33: #{conditional_discriminator_forward.8} parent=27 // pred_check
        %p2299 = pneg %p107
      $region34: #{conditional_discriminator_forward.8} parent=27 // pred_check_branch
        %2301 = sbr.rel (%p2299) target = $region36
      $region35: #{conditional_discriminator_forward.8} parent=27 // pred_region
        _
      $region36: #{conditional_discriminator_forward.8} parent=27 // pred_fallthru
        _
      // Predicated region
      $region37: #{conditional_discriminator_forward.8} parent=27 // pred_check
        %p2302 = pneg %p133
      $region38: #{conditional_discriminator_forward.8} parent=27 // pred_check_branch
        %2304 = sbr.rel (%p2302) target = $region40
      $region39: #{conditional_discriminator_forward.8} parent=27 // pred_region
        _
      $region40: #{conditional_discriminator_forward.8} parent=27 // pred_fallthru
        _
    $region28: #{conditional_discriminator_forward.8} parent=5 // pred_fallthru
      _
    %p2305 = scmp.le.s32.totalorder 2, %s11
    // Predicated region
    $region41: #{conditional_discriminator_forward.8} parent=5 // pred_check
      %p2306 = pneg %p2305
    $region42: #{conditional_discriminator_forward.8} parent=5 // pred_check_branch
      %2308 = sbr.rel (%p2306) target = $region44
    $region43: #{conditional_discriminator_forward.8} parent=5 // pred_region
      %s2309 = ssub.s32 %s11, 2
      // Predicated region
      $region45: #{conditional_discriminator_forward.8} parent=43 // pred_check
        %p2310 = pneg %p87
      $region46: #{conditional_discriminator_forward.8} parent=43 // pred_check_branch
        %2312 = sbr.rel (%p2310) target = $region48
      $region47: #{conditional_discriminator_forward.8} parent=43 // pred_region
        %s2313 = smul.u32 2, %s17
        %p2314 = scmp.lt.s32.totalorder %s2313, 3
        %s2315 = scalar_select %p2314, %s2313, 3
        %s2316 = smul.addr %s2315, 2
        %s2317 = smul.addr %s2316, 8
        %s2318 = scalar_lea.vmem %s2, %s2317
      $region48: #{conditional_discriminator_forward.8} parent=43 // pred_fallthru
        _
      // Predicated region
      $region49: #{conditional_discriminator_forward.8} parent=43 // pred_check
        %p2319 = pneg %p113
      $region50: #{conditional_discriminator_forward.8} parent=43 // pred_check_branch
        %2321 = sbr.rel (%p2319) target = $region52
      $region51: #{conditional_discriminator_forward.8} parent=43 // pred_region
        %p2322 = scmp.lt.s32.totalorder %s17, 1
        %s2323 = scalar_select %p2322, %s17, 1
        %s2324 = smul.addr %s2323, 2
        %s2325 = scalar_lea.vmem %s3, %s2324
      $region52: #{conditional_discriminator_forward.8} parent=43 // pred_fallthru
        _
      // Predicated region
      $region53: #{conditional_discriminator_forward.8} parent=43 // pred_check
        %p2326 = pneg %p139
      $region54: #{conditional_discriminator_forward.8} parent=43 // pred_check_branch
        %2328 = sbr.rel (%p2326) target = $region56
      $region55: #{conditional_discriminator_forward.8} parent=43 // pred_region
        %p2329 = scmp.lt.s32.totalorder %s17, 1
        %s2330 = scalar_select %p2329, %s17, 1
        %s2331 = smul.addr %s2330, 2
        %s2332 = scalar_lea.vmem %s4, %s2331
      $region56: #{conditional_discriminator_forward.8} parent=43 // pred_fallthru
        _
    $region44: #{conditional_discriminator_forward.8} parent=5 // pred_fallthru
      _
  $region6: #{conditional_discriminator_forward.8} parent=0 // loop_footer
    %s15 = sadd.s32 1, %s11
  $region7: #{conditional_discriminator_forward.8} parent=0 // loop_footer_branch
    %10 = sbr.rel target = $region3
  $region8: #{conditional_discriminator_forward.8} parent=0 // loop_exit
    _

</llo_original>
